<compile_context>
chip_gen: v6e
topology: v6e:2x2x1
jax: 0.10.0
libtpu: 0.0.40
codegen_flags: <defaults>
</compile_context>

<pallas_src>
import functools
import numpy as np
import jax
import jax.numpy as jnp
from jax.experimental import pallas as pl
from jax.experimental.pallas import tpu as pltpu


# -----------------------------------------------------------------------------
# Pallas kernels
# -----------------------------------------------------------------------------
def _window_attention_kernel(x_ref, bias_ref, wqkv_ref, bqkv_ref, scale_ref,
                             wproj_ref, bproj_ref, o_ref, *, num_heads):
    """SwinV2 cosine window attention for WB = IB*nW windows per grid step.

    x_ref    : (WB, N, C)       bf16  window tokens
    bias_ref : (nh, nWb, N, N)  bf16  16*sigmoid(cpb) rel-bias (+ shift mask);
               nWb == nW when shifted, 1 otherwise; broadcast over images in-kernel
    wqkv_ref : (C, 3C) bf16,  bqkv_ref: (1, 3C) f32  ([q_bias, 0, v_bias])
    scale_ref: (nh, 1) f32    exp(clamped logit_scale) per head (folded into q)
    wproj_ref: (C, C)  bf16,  bproj_ref: (1, C)  f32
    o_ref    : (WB, N, C)       bf16
    """
    xw = x_ref[...]                                   # (WB, N, C) bf16
    WB, N, C = xw.shape
    nh = num_heads
    hd = C // nh
    M = WB * N

    # One MXU matmul for qkv over all WB*N tokens (bf16 in, f32 accumulate).
    qkv = jnp.dot(xw.reshape(M, C), wqkv_ref[...],
                  preferred_element_type=jnp.float32) + bqkv_ref[...]     # (M, 3C) f32

    # Head relayout done ONCE: gather q/k/v into a head-leading (nh, M, hd) batch so all
    # subsequent compute is head-batched (no per-head unrolled matmul/softmax path).
    def _heads(base):
        return jnp.concatenate(
            [qkv[:, base + h * hd: base + (h + 1) * hd].reshape(1, M, hd)
             for h in range(nh)], axis=0)
    q, k, v = _heads(0), _heads(C), _heads(2 * C)     # each (nh, M, hd) f32

    # Cosine attention: F.normalize(.., dim=-1, eps=1e-12) over head channels, with the
    # per-head logit scale folded into normalized q (saves a (*, N, N) multiply per head).
    scale = scale_ref[...].reshape(nh, 1, 1)
    qn = q * (jax.lax.rsqrt(jnp.maximum(jnp.sum(q * q, -1, keepdims=True), 1e-24)) * scale)
    kn = k * jax.lax.rsqrt(jnp.maximum(jnp.sum(k * k, -1, keepdims=True), 1e-24))

    attn = jnp.einsum('bqd,bkd->bqk',
                      qn.reshape(nh * WB, N, hd), kn.reshape(nh * WB, N, hd),
                      preferred_element_type=jnp.float32)                 # (nh*WB, N, N)

    # Relative-position bias (+ shift mask): stored once per window layout, broadcast over
    # the IB images of this step inside the kernel (bf16 -> f32 promotes in the add).
    nWb = bias_ref.shape[1]
    attn = attn.reshape(nh, WB // nWb, nWb * N, N)
    attn = attn + bias_ref[...].reshape(nh, 1, nWb * N, N)

    # softmax over keys (f32, EUP reciprocal)
    attn = attn - jnp.max(attn, axis=-1, keepdims=True)
    attn = jnp.exp(attn)
    attn = attn * pl.reciprocal(jnp.sum(attn, axis=-1, keepdims=True), approx=True)

    out = jnp.einsum('bqk,bkd->bqd',
                     attn.reshape(nh * WB, N, N).astype(jnp.bfloat16),
                     v.reshape(nh * WB, N, hd).astype(jnp.bfloat16),
                     preferred_element_type=jnp.float32)                  # (nh*WB, N, hd)

    # Back to token rows x head-major channels (matches torch (attn@v).transpose(1,2)),
    # then the output projection.
    out = jnp.concatenate(
        [out[h * WB:(h + 1) * WB].reshape(M, hd) for h in range(nh)], axis=-1)   # (M, C)
    out = jnp.dot(out.astype(jnp.bfloat16), wproj_ref[...],
                  preferred_element_type=jnp.float32) + bproj_ref[...]
    o_ref[...] = out.reshape(WB, N, C).astype(o_ref.dtype)


def _gelu_tanh(x):
    # tanh-approximate GELU; one EUP tanh instead of a ~10-op rational erf.
    # TODO(synk): PyTorch nn.GELU() default is exact erf; tanh form differs by <~1e-3.
    c = 0.7978845608028654  # sqrt(2/pi)
    return 0.5 * x * (1.0 + jnp.tanh(c * (x + 0.044715 * x * x * x)))


def _norm_mlp_kernel(short_ref, attn_ref, g1_ref, b1_ref, w1_ref, bb1_ref,
                     w2_ref, bb2_ref, g2_ref, b2_ref, o_ref):
    """SwinV2 residual-post-norm tail for one tile of token rows:
         h   = shortcut + LayerNorm(attn_out)        (norm1)
         y   = fc2(GELU(fc1(h)))                     (MLP, bf16 matmuls / f32 acc)
         out = h + LayerNorm(y)                      (norm2)
    attn_ref is bf16 (halves the intermediate-activation DMA); math is f32 on the VPU.
    """
    eps = 1e-5

    a = attn_ref[...].astype(jnp.float32)
    mu = jnp.mean(a, axis=-1, keepdims=True)
    var = jnp.mean((a - mu) * (a - mu), axis=-1, keepdims=True)
    an = (a - mu) * jax.lax.rsqrt(var + eps) * g1_ref[...] + b1_ref[...]
    h = short_ref[...] + an

    y = jnp.dot(h.astype(jnp.bfloat16), w1_ref[...],
                preferred_element_type=jnp.float32) + bb1_ref[...]
    y = _gelu_tanh(y)
    y = jnp.dot(y.astype(jnp.bfloat16), w2_ref[...],
                preferred_element_type=jnp.float32) + bb2_ref[...]

    mu2 = jnp.mean(y, axis=-1, keepdims=True)
    var2 = jnp.mean((y - mu2) * (y - mu2), axis=-1, keepdims=True)
    yn = (y - mu2) * jax.lax.rsqrt(var2 + eps) * g2_ref[...] + b2_ref[...]

    o_ref[...] = (h + yn).astype(o_ref.dtype)


# -----------------------------------------------------------------------------
# Spec / budget helpers
# -----------------------------------------------------------------------------
def _const_spec(shape):
    """Spec for a grid-invariant operand: constant index_map and, when the runtime
    supports pipeline_mode, a single-buffered pipeline (no point double-buffering
    weights / bias tables -> saves VMEM, esp. on v7x's 64 MiB)."""
    index_map = lambda s, _nd=len(shape): (0,) * _nd
    try:
        return pl.BlockSpec(shape, index_map, pipeline_mode=pl.Buffered(1))
    except (TypeError, AttributeError):  # runtime without BlockSpec.pipeline_mode
        return pl.BlockSpec(shape, index_map)


def _vmem_limit(step_io_bytes, resident_bytes, working_bytes):
    """Explicit VMEM budget: double-buffered per-step I/O + resident weights + in-kernel
    working set, with 2x headroom; floored at 8 MiB and capped well below v7x's 64 MiB."""
    need = 2 * step_io_bytes + resident_bytes + working_bytes
    return int(min(48 * 1024 * 1024, max(8 * 1024 * 1024, 2 * need)))


def _images_per_step(B, nW, N, max_rows=2048):
    """Largest divisor IB of B such that IB*nW*N token rows per step stay VMEM-friendly
    while keeping >= 2 grid steps (so the 'parallel' axis can shard over v7x's 2 TCs)."""
    min_steps = 2 if B >= 2 else 1
    best = 1
    for cand in range(1, B + 1):
        if B % cand == 0 and cand * nW * N <= max_rows and B // cand >= min_steps:
            best = cand
    return best


# -----------------------------------------------------------------------------
# JAX / numpy glue (window partition, shift, masks, relative bias, params)
# -----------------------------------------------------------------------------
def window_partition(x, ws):
    B, H, W, C = x.shape
    x = x.reshape(B, H // ws, ws, W // ws, ws, C)
    return jnp.transpose(x, (0, 1, 3, 2, 4, 5)).reshape(-1, ws, ws, C)


def window_reverse(windows, ws, H, W):
    B = windows.shape[0] // ((H // ws) * (W // ws))
    x = windows.reshape(B, H // ws, W // ws, ws, ws, -1)
    return jnp.transpose(x, (0, 1, 3, 2, 4, 5)).reshape(B, H, W, -1)


def compute_attn_mask_np(H, W, ws, shift):
    Hp = int(np.ceil(H / ws)) * ws
    Wp = int(np.ceil(W / ws)) * ws
    img_mask = np.zeros((1, Hp, Wp, 1), np.float32)
    h_slices = (slice(0, -ws), slice(-ws, -shift), slice(-shift, None))
    w_slices = (slice(0, -ws), slice(-ws, -shift), slice(-shift, None))
    cnt = 0
    for h in h_slices:
        for w in w_slices:
            img_mask[:, h, w, :] = cnt
            cnt += 1
    mw = img_mask.reshape(1, Hp // ws, ws, Wp // ws, ws, 1)
    mw = np.transpose(mw, (0, 1, 3, 2, 4, 5)).reshape(-1, ws * ws)
    attn_mask = mw[:, None, :] - mw[:, :, None]
    attn_mask = np.where(attn_mask != 0, -100.0, 0.0).astype(np.float32)
    return attn_mask  # (nW, N, N)


def relative_position_bias(params, ws, num_heads, pretrained_window_size=0):
    # continuous relative position bias (SwinV2 CPB-MLP), small -> plain JAX glue
    rh = np.arange(-(ws - 1), ws, dtype=np.float32)
    rw = np.arange(-(ws - 1), ws, dtype=np.float32)
    table = np.stack(np.meshgrid(rh, rw, indexing="ij"), axis=0)
    table = np.transpose(table, (1, 2, 0))[None]          # (1, 2ws-1, 2ws-1, 2)
    denom = (pretrained_window_size - 1) if pretrained_window_size > 0 else (ws - 1)
    table = table / float(denom)
    table = table * 8.0
    table = np.sign(table) * np.log2(np.abs(table) + 1.0) / np.log2(8.0)

    coords = np.stack(np.meshgrid(np.arange(ws), np.arange(ws), indexing="ij"))
    cf = coords.reshape(2, -1)
    rel = cf[:, :, None] - cf[:, None, :]
    rel = np.transpose(rel, (1, 2, 0)).astype(np.int64)
    rel[:, :, 0] += ws - 1
    rel[:, :, 1] += ws - 1
    rel[:, :, 0] *= 2 * ws - 1
    idx = rel.sum(-1)                                      # (N, N)

    table_j = jnp.asarray(table.reshape(-1, 2), jnp.float32)
    hdn = jax.nn.relu(table_j @ params["cpb_w1"] + params["cpb_b1"])
    bias_table = hdn @ params["cpb_w2"]                    # ((2ws-1)^2, nh)
    bias = bias_table[jnp.asarray(idx.reshape(-1))].reshape(ws * ws, ws * ws, num_heads)
    bias = jnp.transpose(bias, (2, 0, 1))
    return 16.0 * jax.nn.sigmoid(bias)                     # (nh, N, N)


def init_block_params(key, dim, num_heads, mlp_ratio):
    hidden = int(dim * mlp_ratio)
    ks = jax.random.split(key, 12)

    def rn(k, shape, scale=0.02):
        return scale * jax.random.normal(k, shape, dtype=jnp.float32)

    return dict(
        qkv_w=rn(ks[0], (dim, 3 * dim)),
        q_bias=rn(ks[1], (dim,)),
        v_bias=rn(ks[2], (dim,)),
        logit_scale=jnp.log(10.0 * jnp.ones((num_heads, 1, 1), jnp.float32)),
        cpb_w1=rn(ks[3], (2, 512)),
        cpb_b1=rn(ks[4], (512,)),
        cpb_w2=rn(ks[5], (512, num_heads)),
        proj_w=rn(ks[6], (dim, dim)),
        proj_b=rn(ks[7], (dim,)),
        norm1_g=jnp.ones((dim,), jnp.float32),
        norm1_b=jnp.zeros((dim,), jnp.float32),
        norm2_g=jnp.ones((dim,), jnp.float32),
        norm2_b=jnp.zeros((dim,), jnp.float32),
        fc1_w=rn(ks[8], (dim, hidden)),
        fc1_b=rn(ks[9], (hidden,)),
        fc2_w=rn(ks[10], (hidden, dim)),
        fc2_b=rn(ks[11], (dim,)),
    )


# -----------------------------------------------------------------------------
# One SwinV2 block (batched-window attention kernel + fused norm/MLP kernel)
# -----------------------------------------------------------------------------
def swin_block_forward(x, H, W, params, window_size, shift_size, num_heads, attn_mask):
    B, L, C = x.shape
    ws = window_size
    shortcut = x

    xs = x.reshape(B, H, W, C)
    pad_r = (ws - W % ws) % ws
    pad_b = (ws - H % ws) % ws
    if pad_r or pad_b:
        xs = jnp.pad(xs, ((0, 0), (0, pad_b), (0, pad_r), (0, 0)))
    Hp, Wp = H + pad_b, W + pad_r

    if shift_size > 0:
        shifted = jnp.roll(xs, shift=(-shift_size, -shift_size), axis=(1, 2))
    else:
        shifted = xs

    N = ws * ws
    # bf16 window activations: the convert fuses into the window-partition transpose, so
    # the attention kernel streams half the bytes for its largest operand.
    xw = window_partition(shifted, ws).reshape(-1, N, C).astype(jnp.bfloat16)
    B_ = xw.shape[0]
    nW = (Hp // ws) * (Wp // ws)

    # windows batched per grid step: IB whole images -> WB = IB*nW windows, M = WB*N rows
    IB = _images_per_step(B, nW, N)
    WB = IB * nW
    steps = B // IB

    # per-step constant bias (+ shift mask), stored once per window layout (NOT replicated
    # per image): (nh, nW, N, N) when shifted, (nh, 1, N, N) otherwise, bf16.
    rel_bias = relative_position_bias(params, ws, num_heads)        # (nh, N, N) f32
    if shift_size > 0:
        bias = rel_bias[:, None, :, :] + attn_mask[None, :, :, :]   # (nh, nW, N, N)
    else:
        bias = rel_bias[:, None, :, :]                               # (nh, 1, N, N)
    bias = bias.astype(jnp.bfloat16)
    nWb = bias.shape[1]

    qkv_b = jnp.concatenate(
        [params["q_bias"], jnp.zeros((C,), jnp.float32), params["v_bias"]]
    ).reshape(1, 3 * C)
    scale = jnp.exp(jnp.minimum(params["logit_scale"],
                                jnp.log(jnp.float32(100.0)))).reshape(num_heads, 1)
    proj_b = params["proj_b"].reshape(1, C)
    qkv_w = params["qkv_w"].astype(jnp.bfloat16)
    proj_w = params["proj_w"].astype(jnp.bfloat16)

    # VMEM budget / cost estimate for the attention call
    attn_step_io = WB * N * C * 2 * 2                                   # bf16 in + out tile
    attn_resident = ((3 * C * C + C * C) * 2 + num_heads * nWb * N * N * 2
                     + (4 * C) * 4 + num_heads * 4)
    attn_working = WB * N * 3 * C * 4 * 2 + num_heads * WB * N * N * 4 * 2
    vmem_attn = _vmem_limit(attn_step_io, attn_resident, attn_working)
    ce_attn = pl.CostEstimate(
        flops=int(2 * B_ * N * C * 3 * C          # qkv projection
                  + 4 * B_ * N * N * C            # q@k^T + attn@v over all heads
                  + 2 * B_ * N * C * C),          # output projection
        transcendentals=int(num_heads * B_ * N * N + 2 * num_heads * B_ * N),
        bytes_accessed=int(2 * (2 * B_ * N * C)            # bf16 activations in + out
                           + 2 * (3 * C * C + C * C)       # bf16 weights
                           + 2 * num_heads * nWb * N * N   # bf16 bias table
                           + 4 * (4 * C + num_heads)),
    )

    attn_out = pl.pallas_call(
        functools.partial(_window_attention_kernel, num_heads=num_heads),
        out_shape=jax.ShapeDtypeStruct((B_, N, C), jnp.bfloat16),
        grid_spec=pltpu.PrefetchScalarGridSpec(
            num_scalar_prefetch=0,
            grid=(steps,),
            in_specs=[
                pl.BlockSpec((WB, N, C), lambda s: (s, 0, 0)),
                _const_spec((num_heads, nWb, N, N)),
                _const_spec((C, 3 * C)),
                _const_spec((1, 3 * C)),
                _const_spec((num_heads, 1)),
                _const_spec((C, C)),
                _const_spec((1, C)),
            ],
            out_specs=pl.BlockSpec((WB, N, C), lambda s: (s, 0, 0)),
        ),
        compiler_params=pltpu.CompilerParams(
            dimension_semantics=("parallel",),
            vmem_limit_bytes=vmem_attn),
        cost_estimate=ce_attn,
    )(xw, bias, qkv_w, qkv_b, scale, proj_w, proj_b)

    # merge windows, reverse shift, remove padding -- stays bf16 end to end so this XLA
    # glue moves half the bytes it used to.
    # TODO(synk): fold window_reverse/roll/crop into the norm/MLP kernel's in_spec
    # index_map to remove this intermediate HBM round trip entirely.
    x_attn = window_reverse(attn_out.reshape(-1, ws, ws, C), ws, Hp, Wp)
    if shift_size > 0:
        x_attn = jnp.roll(x_attn, shift=(shift_size, shift_size), axis=(1, 2))
    if pad_r or pad_b:
        x_attn = x_attn[:, :H, :W, :]
    x_attn = x_attn.reshape(B, L, C)                                   # bf16

    # fused residual + norm1 + MLP + norm2 + residual, large lane-dense row tiles,
    # but always >= 2 grid steps when T allows (v7x dual-TC sharding).
    T = B * L
    TM = 1024
    if T <= TM:
        TM = max(8, ((T + 15) // 16) * 8)   # ~ceil(T/2) rounded to sublane multiple
    T_pad = ((T + TM - 1) // TM) * TM
    hidden = params["fc1_w"].shape[1]

    short2d = shortcut.reshape(T, C)
    attn2d = x_attn.reshape(T, C)
    if T_pad != T:
        pad_rows = ((0, T_pad - T), (0, 0))
        short2d = jnp.pad(short2d, pad_rows)
        attn2d = jnp.pad(attn2d, pad_rows)

    mlp_step_io = TM * C * (4 + 2 + 4)                                  # short f32 + attn bf16 + out f32
    mlp_resident = (C * hidden + hidden * C) * 2 + (6 * C + hidden) * 4
    mlp_working = TM * hidden * 4 * 2 + TM * C * 4 * 3
    vmem_mlp = _vmem_limit(mlp_step_io, mlp_resident, mlp_working)
    ce_mlp = pl.CostEstimate(
        flops=int(4 * T_pad * C * hidden + 16 * T_pad * C + 8 * T_pad * hidden),
        transcendentals=int(T_pad * hidden),
        bytes_accessed=int(T_pad * C * (4 + 2 + 4)
                           + 2 * (C * hidden + hidden * C)
                           + 4 * (6 * C + hidden)),
    )

    out2d = pl.pallas_call(
        _norm_mlp_kernel,
        out_shape=jax.ShapeDtypeStruct((T_pad, C), jnp.float32),
        grid_spec=pltpu.PrefetchScalarGridSpec(
            num_scalar_prefetch=0,
            grid=(T_pad // TM,),
            in_specs=[
                pl.BlockSpec((TM, C), lambda i: (i, 0)),
                pl.BlockSpec((TM, C), lambda i: (i, 0)),
                _const_spec((1, C)),
                _const_spec((1, C)),
                _const_spec((C, hidden)),
                _const_spec((1, hidden)),
                _const_spec((hidden, C)),
                _const_spec((1, C)),
                _const_spec((1, C)),
                _const_spec((1, C)),
            ],
            out_specs=pl.BlockSpec((TM, C), lambda i: (i, 0)),
        ),
        compiler_params=pltpu.CompilerParams(
            dimension_semantics=("parallel",),
            vmem_limit_bytes=vmem_mlp),
        cost_estimate=ce_mlp,
    )(
        short2d, attn2d,
        params["norm1_g"].reshape(1, C), params["norm1_b"].reshape(1, C),
        params["fc1_w"].astype(jnp.bfloat16), params["fc1_b"].reshape(1, hidden),
        params["fc2_w"].astype(jnp.bfloat16), params["fc2_b"].reshape(1, C),
        params["norm2_g"].reshape(1, C), params["norm2_b"].reshape(1, C),
    )
    if T_pad != T:
        out2d = out2d[:T]
    return out2d.reshape(B, L, C)


def basic_layer_forward(x, H, W, blocks_params, window_size, num_heads):
    """BasicLayer.forward with upsample=None, drop/attn_drop/drop_path = 0."""
    ws = window_size
    shift = ws // 2
    attn_mask = jnp.asarray(compute_attn_mask_np(H, W, ws, shift))
    for i, params in enumerate(blocks_params):
        blk_shift = 0 if i % 2 == 0 else shift
        x = swin_block_forward(x, H, W, params, ws, blk_shift, num_heads, attn_mask)
    # TODO(synk): upsample module (PatchExpand) not instantiated (upsample=None branch).
    return (x, H, W, x, H, W)


# -----------------------------------------------------------------------------
if __name__ == "__main__":
    # small but representative config (C=128 keeps every stored slab lane-dense)
    dim = 128
    depth = 2
    num_heads = 4
    window_size = 4
    mlp_ratio = 4.0
    B, H, W = 2, 8, 8

    key = jax.random.PRNGKey(0)
    kx, kp = jax.random.split(key)
    x = jax.random.normal(kx, (B, H * W, dim), dtype=jnp.float32)

    block_keys = jax.random.split(kp, depth)
    blocks_params = [init_block_params(block_keys[i], dim, num_heads, mlp_ratio)
                     for i in range(depth)]

    out, oh, ow, out_up, wh, ww = basic_layer_forward(
        x, H, W, blocks_params, window_size, num_heads)
    out = jax.block_until_ready(out)

    assert out.shape == (B, H * W, dim)
    assert bool(jnp.all(jnp.isfinite(out)))
    print("KERNEL_OK")
</pallas_src>

<mosaic_0001>
module attributes {stable_mosaic.version = 11 : i64} {
  func.func @_window_attention_kernel(%arg0: i32, %arg1: memref<4x16x128xbf16, #tpu.memory_space<vmem>>, %arg2: memref<4x1x16x16xbf16, #tpu.memory_space<vmem>>, %arg3: memref<128x384xbf16, #tpu.memory_space<vmem>>, %arg4: memref<1x384xf32, #tpu.memory_space<vmem>>, %arg5: memref<4x1xf32, #tpu.memory_space<vmem>>, %arg6: memref<128x128xbf16, #tpu.memory_space<vmem>>, %arg7: memref<1x128xf32, #tpu.memory_space<vmem>>, %arg8: memref<4x16x128xbf16, #tpu.memory_space<vmem>>) attributes {dimension_semantics = [#tpu.dimension_semantics<parallel>], iteration_bounds = array<i64: 2>, scalar_prefetch = 0 : i64, scratch_operands = 0 : i64, tpu.core_type = #tpu.core_type<tc>, window_params = [{transform_indices = @transform_0, window_bounds = array<i64: 4, 16, 128>}, {pipeline_mode = #tpu.pipeline_mode<synchronous>, transform_indices = @transform_1, window_bounds = array<i64: 4, 1, 16, 16>}, {pipeline_mode = #tpu.pipeline_mode<synchronous>, transform_indices = @transform_2, window_bounds = array<i64: 128, 384>}, {pipeline_mode = #tpu.pipeline_mode<synchronous>, transform_indices = @transform_3, window_bounds = array<i64: 1, 384>}, {pipeline_mode = #tpu.pipeline_mode<synchronous>, transform_indices = @transform_4, window_bounds = array<i64: 4, 1>}, {pipeline_mode = #tpu.pipeline_mode<synchronous>, transform_indices = @transform_5, window_bounds = array<i64: 128, 128>}, {pipeline_mode = #tpu.pipeline_mode<synchronous>, transform_indices = @transform_6, window_bounds = array<i64: 1, 128>}, {transform_indices = @transform_7, window_bounds = array<i64: 4, 16, 128>}]} {
    %c0 = arith.constant 0 : index
    %c0_0 = arith.constant 0 : index
    %c0_1 = arith.constant 0 : index
    %0 = vector.load %arg1[%c0, %c0_0, %c0_1] : memref<4x16x128xbf16, #tpu.memory_space<vmem>>, vector<4x16x128xbf16>
    %1 = vector.shape_cast %0 : vector<4x16x128xbf16> to vector<64x128xbf16>
    %c0_2 = arith.constant 0 : index
    %c0_3 = arith.constant 0 : index
    %2 = vector.load %arg3[%c0_2, %c0_3] : memref<128x384xbf16, #tpu.memory_space<vmem>>, vector<128x384xbf16>
    %cst = arith.constant dense<0.000000e+00> : vector<64x384xf32>
    %3 = tpu.matmul %1, %2, %cst {dimension_numbers = #tpu.dot_dimension_numbers<[1], [0], [0], [1], [0, 0, 1, 1], [], []>} : vector<64x128xbf16>, vector<128x384xbf16>, vector<64x384xf32> -> vector<64x384xf32>
    %c0_4 = arith.constant 0 : index
    %c0_5 = arith.constant 0 : index
    %4 = vector.load %arg4[%c0_4, %c0_5] : memref<1x384xf32, #tpu.memory_space<vmem>>, vector<1x384xf32>
    %5 = vector.broadcast %4 : vector<1x384xf32> to vector<64x384xf32>
    %6 = arith.addf %3, %5 : vector<64x384xf32>
    %7 = vector.extract_strided_slice %6 {offsets = [0, 0], sizes = [64, 32], strides = [1, 1]} : vector<64x384xf32> to vector<64x32xf32>
    %8 = vector.shape_cast %7 : vector<64x32xf32> to vector<1x64x32xf32>
    %9 = vector.extract_strided_slice %6 {offsets = [0, 32], sizes = [64, 32], strides = [1, 1]} : vector<64x384xf32> to vector<64x32xf32>
    %10 = vector.shape_cast %9 : vector<64x32xf32> to vector<1x64x32xf32>
    %11 = vector.extract_strided_slice %6 {offsets = [0, 64], sizes = [64, 32], strides = [1, 1]} : vector<64x384xf32> to vector<64x32xf32>
    %12 = vector.shape_cast %11 : vector<64x32xf32> to vector<1x64x32xf32>
    %13 = vector.extract_strided_slice %6 {offsets = [0, 96], sizes = [64, 32], strides = [1, 1]} : vector<64x384xf32> to vector<64x32xf32>
    %14 = vector.shape_cast %13 : vector<64x32xf32> to vector<1x64x32xf32>
    %15 = tpu.concatenate %8, %10, %12, %14 in 0 : vector<1x64x32xf32>, vector<1x64x32xf32>, vector<1x64x32xf32>, vector<1x64x32xf32> -> vector<4x64x32xf32>
    %16 = vector.extract_strided_slice %6 {offsets = [0, 128], sizes = [64, 32], strides = [1, 1]} : vector<64x384xf32> to vector<64x32xf32>
    %17 = vector.shape_cast %16 : vector<64x32xf32> to vector<1x64x32xf32>
    %18 = vector.extract_strided_slice %6 {offsets = [0, 160], sizes = [64, 32], strides = [1, 1]} : vector<64x384xf32> to vector<64x32xf32>
    %19 = vector.shape_cast %18 : vector<64x32xf32> to vector<1x64x32xf32>
    %20 = vector.extract_strided_slice %6 {offsets = [0, 192], sizes = [64, 32], strides = [1, 1]} : vector<64x384xf32> to vector<64x32xf32>
    %21 = vector.shape_cast %20 : vector<64x32xf32> to vector<1x64x32xf32>
    %22 = vector.extract_strided_slice %6 {offsets = [0, 224], sizes = [64, 32], strides = [1, 1]} : vector<64x384xf32> to vector<64x32xf32>
    %23 = vector.shape_cast %22 : vector<64x32xf32> to vector<1x64x32xf32>
    %24 = tpu.concatenate %17, %19, %21, %23 in 0 : vector<1x64x32xf32>, vector<1x64x32xf32>, vector<1x64x32xf32>, vector<1x64x32xf32> -> vector<4x64x32xf32>
    %25 = vector.extract_strided_slice %6 {offsets = [0, 256], sizes = [64, 32], strides = [1, 1]} : vector<64x384xf32> to vector<64x32xf32>
    %26 = vector.shape_cast %25 : vector<64x32xf32> to vector<1x64x32xf32>
    %27 = vector.extract_strided_slice %6 {offsets = [0, 288], sizes = [64, 32], strides = [1, 1]} : vector<64x384xf32> to vector<64x32xf32>
    %28 = vector.shape_cast %27 : vector<64x32xf32> to vector<1x64x32xf32>
    %29 = vector.extract_strided_slice %6 {offsets = [0, 320], sizes = [64, 32], strides = [1, 1]} : vector<64x384xf32> to vector<64x32xf32>
    %30 = vector.shape_cast %29 : vector<64x32xf32> to vector<1x64x32xf32>
    %31 = vector.extract_strided_slice %6 {offsets = [0, 352], sizes = [64, 32], strides = [1, 1]} : vector<64x384xf32> to vector<64x32xf32>
    %32 = vector.shape_cast %31 : vector<64x32xf32> to vector<1x64x32xf32>
    %33 = tpu.concatenate %26, %28, %30, %32 in 0 : vector<1x64x32xf32>, vector<1x64x32xf32>, vector<1x64x32xf32>, vector<1x64x32xf32> -> vector<4x64x32xf32>
    %c0_6 = arith.constant 0 : index
    %c0_7 = arith.constant 0 : index
    %34 = vector.load %arg5[%c0_6, %c0_7] : memref<4x1xf32, #tpu.memory_space<vmem>>, vector<4x1xf32>
    %35 = vector.shape_cast %34 : vector<4x1xf32> to vector<4x1x1xf32>
    %36 = arith.mulf %15, %15 : vector<4x64x32xf32>
    %cst_8 = arith.constant dense<0.000000e+00> : vector<4x64xf32>
    %37 = vector.multi_reduction <add>, %36, %cst_8 [2] : vector<4x64x32xf32> to vector<4x64xf32>
    %38 = vector.shape_cast %37 : vector<4x64xf32> to vector<4x64x1xf32>
    %cst_9 = arith.constant 1.000000e-24 : f32
    %39 = vector.broadcast %cst_9 : f32 to vector<4x64x1xf32>
    %40 = arith.maximumf %38, %39 : vector<4x64x1xf32>
    %41 = math.rsqrt %40 : vector<4x64x1xf32>
    %42 = vector.broadcast %35 : vector<4x1x1xf32> to vector<4x64x1xf32>
    %43 = arith.mulf %41, %42 : vector<4x64x1xf32>
    %44 = vector.broadcast %43 : vector<4x64x1xf32> to vector<4x64x32xf32>
    %45 = arith.mulf %15, %44 : vector<4x64x32xf32>
    %46 = arith.mulf %24, %24 : vector<4x64x32xf32>
    %cst_10 = arith.constant dense<0.000000e+00> : vector<4x64xf32>
    %47 = vector.multi_reduction <add>, %46, %cst_10 [2] : vector<4x64x32xf32> to vector<4x64xf32>
    %48 = vector.shape_cast %47 : vector<4x64xf32> to vector<4x64x1xf32>
    %cst_11 = arith.constant 1.000000e-24 : f32
    %49 = vector.broadcast %cst_11 : f32 to vector<4x64x1xf32>
    %50 = arith.maximumf %48, %49 : vector<4x64x1xf32>
    %51 = math.rsqrt %50 : vector<4x64x1xf32>
    %52 = vector.broadcast %51 : vector<4x64x1xf32> to vector<4x64x32xf32>
    %53 = arith.mulf %24, %52 : vector<4x64x32xf32>
    %54 = vector.shape_cast %45 : vector<4x64x32xf32> to vector<16x16x32xf32>
    %55 = vector.shape_cast %53 : vector<4x64x32xf32> to vector<16x16x32xf32>
    "tpu.trace_start"() <{level = 10 : i32, message = "bqd,bkd->bqk"}> : () -> ()
    %cst_12 = arith.constant dense<0.000000e+00> : vector<16x16x16xf32>
    %56 = tpu.matmul %54, %55, %cst_12 {dimension_numbers = #tpu.dot_dimension_numbers<[2], [2], [1], [1], [0, 0, 0, 1, 1, 1], [0], [0]>} : vector<16x16x32xf32>, vector<16x16x32xf32>, vector<16x16x16xf32> -> vector<16x16x16xf32>
    "tpu.trace_stop"() : () -> ()
    %57 = vector.shape_cast %56 : vector<16x16x16xf32> to vector<4x4x16x16xf32>
    %c0_13 = arith.constant 0 : index
    %c0_14 = arith.constant 0 : index
    %c0_15 = arith.constant 0 : index
    %c0_16 = arith.constant 0 : index
    %58 = vector.load %arg2[%c0_13, %c0_14, %c0_15, %c0_16] : memref<4x1x16x16xbf16, #tpu.memory_space<vmem>>, vector<4x1x16x16xbf16>
    %59 = arith.extf %58 : vector<4x1x16x16xbf16> to vector<4x1x16x16xf32>
    %60 = vector.broadcast %59 : vector<4x1x16x16xf32> to vector<4x4x16x16xf32>
    %61 = arith.addf %57, %60 : vector<4x4x16x16xf32>
    %cst_17 = arith.constant dense<0xFF800000> : vector<4x4x16xf32>
    %62 = vector.multi_reduction <maximumf>, %61, %cst_17 [3] : vector<4x4x16x16xf32> to vector<4x4x16xf32>
    %63 = vector.shape_cast %62 : vector<4x4x16xf32> to vector<4x4x16x1xf32>
    %64 = vector.broadcast %63 : vector<4x4x16x1xf32> to vector<4x4x16x16xf32>
    %65 = arith.subf %61, %64 : vector<4x4x16x16xf32>
    %66 = math.exp %65 : vector<4x4x16x16xf32>
    %cst_18 = arith.constant dense<0.000000e+00> : vector<4x4x16xf32>
    %67 = vector.multi_reduction <add>, %66, %cst_18 [3] : vector<4x4x16x16xf32> to vector<4x4x16xf32>
    %68 = vector.shape_cast %67 : vector<4x4x16xf32> to vector<4x4x16x1xf32>
    %69 = tpu.reciprocal %68 {approx = true} : vector<4x4x16x1xf32> -> vector<4x4x16x1xf32>
    %70 = vector.broadcast %69 : vector<4x4x16x1xf32> to vector<4x4x16x16xf32>
    %71 = arith.mulf %66, %70 : vector<4x4x16x16xf32>
    %72 = vector.shape_cast %71 : vector<4x4x16x16xf32> to vector<16x16x16xf32>
    %73 = arith.truncf %72 : vector<16x16x16xf32> to vector<16x16x16xbf16>
    %74 = vector.shape_cast %33 : vector<4x64x32xf32> to vector<16x16x32xf32>
    %75 = arith.truncf %74 : vector<16x16x32xf32> to vector<16x16x32xbf16>
    "tpu.trace_start"() <{level = 10 : i32, message = "bqk,bkd->bqd"}> : () -> ()
    %cst_19 = arith.constant dense<0.000000e+00> : vector<16x16x32xf32>
    %76 = tpu.matmul %73, %75, %cst_19 {dimension_numbers = #tpu.dot_dimension_numbers<[2], [1], [1], [2], [0, 0, 0, 1, 1, 2], [0], [0]>} : vector<16x16x16xbf16>, vector<16x16x32xbf16>, vector<16x16x32xf32> -> vector<16x16x32xf32>
    "tpu.trace_stop"() : () -> ()
    %77 = vector.extract_strided_slice %76 {offsets = [0, 0, 0], sizes = [4, 16, 32], strides = [1, 1, 1]} : vector<16x16x32xf32> to vector<4x16x32xf32>
    %78 = vector.shape_cast %77 : vector<4x16x32xf32> to vector<64x32xf32>
    %79 = vector.extract_strided_slice %76 {offsets = [4, 0, 0], sizes = [4, 16, 32], strides = [1, 1, 1]} : vector<16x16x32xf32> to vector<4x16x32xf32>
    %80 = vector.shape_cast %79 : vector<4x16x32xf32> to vector<64x32xf32>
    %81 = vector.extract_strided_slice %76 {offsets = [8, 0, 0], sizes = [4, 16, 32], strides = [1, 1, 1]} : vector<16x16x32xf32> to vector<4x16x32xf32>
    %82 = vector.shape_cast %81 : vector<4x16x32xf32> to vector<64x32xf32>
    %83 = vector.extract_strided_slice %76 {offsets = [12, 0, 0], sizes = [4, 16, 32], strides = [1, 1, 1]} : vector<16x16x32xf32> to vector<4x16x32xf32>
    %84 = vector.shape_cast %83 : vector<4x16x32xf32> to vector<64x32xf32>
    %85 = tpu.concatenate %78, %80, %82, %84 in 1 : vector<64x32xf32>, vector<64x32xf32>, vector<64x32xf32>, vector<64x32xf32> -> vector<64x128xf32>
    %86 = arith.truncf %85 : vector<64x128xf32> to vector<64x128xbf16>
    %c0_20 = arith.constant 0 : index
    %c0_21 = arith.constant 0 : index
    %87 = vector.load %arg6[%c0_20, %c0_21] : memref<128x128xbf16, #tpu.memory_space<vmem>>, vector<128x128xbf16>
    %cst_22 = arith.constant dense<0.000000e+00> : vector<64x128xf32>
    %88 = tpu.matmul %86, %87, %cst_22 {dimension_numbers = #tpu.dot_dimension_numbers<[1], [0], [0], [1], [0, 0, 1, 1], [], []>} : vector<64x128xbf16>, vector<128x128xbf16>, vector<64x128xf32> -> vector<64x128xf32>
    %c0_23 = arith.constant 0 : index
    %c0_24 = arith.constant 0 : index
    %89 = vector.load %arg7[%c0_23, %c0_24] : memref<1x128xf32, #tpu.memory_space<vmem>>, vector<1x128xf32>
    %90 = vector.broadcast %89 : vector<1x128xf32> to vector<64x128xf32>
    %91 = arith.addf %88, %90 : vector<64x128xf32>
    %92 = vector.shape_cast %91 : vector<64x128xf32> to vector<4x16x128xf32>
    %93 = arith.truncf %92 : vector<4x16x128xf32> to vector<4x16x128xbf16>
    %c0_25 = arith.constant 0 : index
    %c0_26 = arith.constant 0 : index
    %c0_27 = arith.constant 0 : index
    %94 = vector.load %arg8[%c0_25, %c0_26, %c0_27] : memref<4x16x128xbf16, #tpu.memory_space<vmem>>, vector<4x16x128xbf16>
    tpu.vector_store %arg8[%c0_25, %c0_26, %c0_27], %93 {strides = array<i32>} : memref<4x16x128xbf16, #tpu.memory_space<vmem>>, vector<4x16x128xbf16>,
    return
  }
  func.func @transform_0(%arg0: i32) -> (i32, i32, i32) {
    %c0_i32 = arith.constant 0 : i32
    %c0_i32_0 = arith.constant 0 : i32
    %c0_i32_1 = arith.constant 0 : i32
    return %arg0, %c0_i32, %c0_i32_0 : i32, i32, i32
  }
  func.func @transform_1(%arg0: i32) -> (i32, i32, i32, i32) {
    %c0_i32 = arith.constant 0 : i32
    %c0_i32_0 = arith.constant 0 : i32
    %c0_i32_1 = arith.constant 0 : i32
    %c0_i32_2 = arith.constant 0 : i32
    %c0_i32_3 = arith.constant 0 : i32
    return %c0_i32, %c0_i32_0, %c0_i32_1, %c0_i32_2 : i32, i32, i32, i32
  }
  func.func @transform_2(%arg0: i32) -> (i32, i32) {
    %c0_i32 = arith.constant 0 : i32
    %c0_i32_0 = arith.constant 0 : i32
    %c0_i32_1 = arith.constant 0 : i32
    return %c0_i32, %c0_i32_0 : i32, i32
  }
  func.func @transform_3(%arg0: i32) -> (i32, i32) {
    %c0_i32 = arith.constant 0 : i32
    %c0_i32_0 = arith.constant 0 : i32
    %c0_i32_1 = arith.constant 0 : i32
    return %c0_i32, %c0_i32_0 : i32, i32
  }
  func.func @transform_4(%arg0: i32) -> (i32, i32) {
    %c0_i32 = arith.constant 0 : i32
    %c0_i32_0 = arith.constant 0 : i32
    %c0_i32_1 = arith.constant 0 : i32
    return %c0_i32, %c0_i32_0 : i32, i32
  }
  func.func @transform_5(%arg0: i32) -> (i32, i32) {
    %c0_i32 = arith.constant 0 : i32
    %c0_i32_0 = arith.constant 0 : i32
    %c0_i32_1 = arith.constant 0 : i32
    return %c0_i32, %c0_i32_0 : i32, i32
  }
  func.func @transform_6(%arg0: i32) -> (i32, i32) {
    %c0_i32 = arith.constant 0 : i32
    %c0_i32_0 = arith.constant 0 : i32
    %c0_i32_1 = arith.constant 0 : i32
    return %c0_i32, %c0_i32_0 : i32, i32
  }
  func.func @transform_7(%arg0: i32) -> (i32, i32, i32) {
    %c0_i32 = arith.constant 0 : i32
    %c0_i32_0 = arith.constant 0 : i32
    %c0_i32_1 = arith.constant 0 : i32
    return %arg0, %c0_i32, %c0_i32_0 : i32, i32, i32
  }
}

</mosaic_0001>

<llo_original>
// kernel: tpu_custom_call.1
$region0: #{tpu_custom_call.1}
  #allocation0 [shape = 'u32[]', space=smem, size = 0x4, offset = 0x4, fixed_abs, tag = 'smem constant byte address 0x4 - core index']
  #allocation1 [shape = 'u32[144,128]{1,0:T(1,128)}', space=vmem, size = 0x12000, scoped, tag = 'internal scratch']
  %s0 = inlined_call_operand.hbm [shape: bf16[8,16,128], index: 0, kind: input, shape index: {}]
  %s1 = inlined_call_operand.hbm [shape: bf16[4,1,16,16], index: 1, kind: input, shape index: {}]
  %s2 = inlined_call_operand.hbm [shape: bf16[128,384], index: 2, kind: input, shape index: {}]
  %s3 = inlined_call_operand.vmem [shape: f32[1,384], index: 3, kind: input, shape index: {}]
  %s4 = inlined_call_operand.vmem [shape: f32[4,1], index: 4, kind: input, shape index: {}]
  %s5 = inlined_call_operand.hbm [shape: bf16[128,128], index: 5, kind: input, shape index: {}]
  %s6 = inlined_call_operand.vmem [shape: f32[1,128], index: 6, kind: input, shape index: {}]
  %s7 = inlined_call_operand.hbm [shape: bf16[8,16,128], index: 7, kind: output, shape index: {}]
  %s8 = sld [smem:[#allocation0]]
  $region77: #{tpu_custom_call.1} parent=0
    _
  %s10 = ssub.s32 1, %s8
  %s11 = scalar_select 0, %s10, %s8
  $region1: #{tpu_custom_call.1} parent=0
    #allocation2 [shape = 'u8[32768]{0}', space=vmem, size = 0x8000, scoped, tag = 'input window, operand 0']
    #allocation3 [shape = 's32[2]{0}', space=sflag, size = 0x8, scoped, tag = 'scoped memory for tpu_custom_call.1']
    #allocation4 [shape = 's32[2]{0}', space=sflag, size = 0x8, scoped, tag = 'scoped memory for tpu_custom_call.1']
    #allocation5 [shape = 'u8[16384]{0}', space=vmem, size = 0x4000, scoped, tag = 'input window, operand 1, single buffered']
    #allocation6 [shape = 's32[1]{0}', space=sflag, size = 0x4, scoped, tag = 'scoped memory for tpu_custom_call.1']
    #allocation7 [shape = 'u8[98304]{0}', space=vmem, size = 0x18000, scoped, tag = 'input window, operand 2, single buffered']
    #allocation8 [shape = 'u8[32768]{0}', space=vmem, size = 0x8000, scoped, tag = 'input window, operand 5, single buffered']
    #allocation9 [shape = 's32[1]{0}', space=sflag, size = 0x4, scoped, tag = 'scoped memory for tpu_custom_call.1']
    #allocation10 [shape = 'u8[32768]{0}', space=vmem, size = 0x8000, scoped, tag = 'output window, operand 0']
    %12 = vsyncpa [#allocation3], 0
    %s13 = scalar_lea.sflag [#allocation3], 1
    %14 = vsyncpa %s13, 0
    %15 = vsyncpa [#allocation6], 0
    %16 = vsyncpa [#allocation9], 0
    %17 = vsyncpa [#allocation4], 0
    %s18 = scalar_lea.sflag [#allocation4], 1
    %19 = vsyncpa %s18, 0
    loop: start=0, step=1, limit=4
    $region2: #{tpu_custom_call.1} parent=1 // loop_pre_header
      _
    $region3: #{tpu_custom_call.1} parent=1 // loop_header
      %s21 = sphi 0, %s25
      %p22 = scmp.ge.s32.totalorder %s21, 4
      %s31 = sphi 0, %s33
      %s34 = sphi 0, %s31
      %s35 = sphi 0, %s34
      %s51 = sphi 0, %s35
      %s55 = sphi 0, %s55
      %s57 = sphi 0, %s55
      %s58 = sphi 0, %s57
      %s72 = sphi 0, %s58
      %s76 = sphi 0, %s76
      %s78 = sphi 0, %s76
      %s79 = sphi 0, %s78
      %s93 = sphi 0, %s79
      %s97 = sphi 0, %s97
      %s99 = sphi 0, %s97
      %s100 = sphi 0, %s99
      %s114 = sphi 0, %s100
      %s118 = sphi 0, %s118
      %s120 = sphi 0, %s118
      %s121 = sphi 0, %s120
      %s135 = sphi 0, %s121
      %s139 = sphi 0, %s139
      %s141 = sphi 0, %s139
      %s142 = sphi 0, %s141
      %s156 = sphi 0, %s142
      %s160 = sphi 0, %s160
      %s162 = sphi 0, %s160
      %s163 = sphi 0, %s162
      %s177 = sphi 0, %s163
      %s183 = sphi 0, %s185
      %s186 = sphi 0, %s183
      %s187 = sphi 0, %s186
      %s203 = sphi 0, %s187
    $region4: #{tpu_custom_call.1} parent=1 // loop_header_branch
      %24 = sbr.rel (%p22) target = $region8
    $region5: #{tpu_custom_call.1} parent=1 // loop_body
      %s26 = ssub.s32 %s21, 1
      %s27 = ssub.s32 %s21, 2
      %s28 = sadd.s32 %s21, 1
      %s29 = ssub.s32 %s21, %s28
      %p30 = scmp.eq.s32.totalorder %s29, 0
      %s32 = sadd.s32 %s31, 1
      %s33 = scalar_select %p30, %s31, %s32
      %p36 = pneg %p30
      %p37 = scmp.eq.s32.totalorder %s21, 1
      %p38 = por %p36, %p37
      %p39 = scmp.ne.s32.totalorder %s31, %s34
      %p40 = scmp.eq.s32.totalorder %s21, 0
      %p41 = por %p39, %p40
      %p42 = scmp.ne.s32.totalorder %s31, %s34
      %p43 = scmp.eq.s32.totalorder %s26, 1
      %p44 = por %p42, %p43
      %p45 = scmp.ne.s32.totalorder %s34, %s35
      %p46 = scmp.eq.s32.totalorder %s26, 0
      %p47 = por %p45, %p46
      %p48 = scmp.ne.s32.totalorder %s34, %s35
      %p49 = scmp.eq.s32.totalorder %s27, 1
      %p50 = por %p48, %p49
      %p52 = scmp.ne.s32.totalorder %s35, %s51
      %p53 = scmp.eq.s32.totalorder %s27, 0
      %p54 = por %p52, %p53
      %s56 = sadd.s32 %s55, 1
      %p59 = scmp.eq.s32.totalorder %s21, 1
      %p60 = scmp.ne.s32.totalorder %s55, %s57
      %p61 = scmp.eq.s32.totalorder %s21, 0
      %p62 = por %p60, %p61
      %p63 = scmp.ne.s32.totalorder %s55, %s57
      %p64 = scmp.eq.s32.totalorder %s26, 1
      %p65 = por %p63, %p64
      %p66 = scmp.ne.s32.totalorder %s57, %s58
      %p67 = scmp.eq.s32.totalorder %s26, 0
      %p68 = por %p66, %p67
      %p69 = scmp.ne.s32.totalorder %s57, %s58
      %p70 = scmp.eq.s32.totalorder %s27, 1
      %p71 = por %p69, %p70
      %p73 = scmp.ne.s32.totalorder %s58, %s72
      %p74 = scmp.eq.s32.totalorder %s27, 0
      %p75 = por %p73, %p74
      %s77 = sadd.s32 %s76, 1
      %p80 = scmp.eq.s32.totalorder %s21, 1
      %p81 = scmp.ne.s32.totalorder %s76, %s78
      %p82 = scmp.eq.s32.totalorder %s21, 0
      %p83 = por %p81, %p82
      %p84 = scmp.ne.s32.totalorder %s76, %s78
      %p85 = scmp.eq.s32.totalorder %s26, 1
      %p86 = por %p84, %p85
      %p87 = scmp.ne.s32.totalorder %s78, %s79
      %p88 = scmp.eq.s32.totalorder %s26, 0
      %p89 = por %p87, %p88
      %p90 = scmp.ne.s32.totalorder %s78, %s79
      %p91 = scmp.eq.s32.totalorder %s27, 1
      %p92 = por %p90, %p91
      %p94 = scmp.ne.s32.totalorder %s79, %s93
      %p95 = scmp.eq.s32.totalorder %s27, 0
      %p96 = por %p94, %p95
      %s98 = sadd.s32 %s97, 1
      %p101 = scmp.eq.s32.totalorder %s21, 1
      %p102 = scmp.ne.s32.totalorder %s97, %s99
      %p103 = scmp.eq.s32.totalorder %s21, 0
      %p104 = por %p102, %p103
      %p105 = scmp.ne.s32.totalorder %s97, %s99
      %p106 = scmp.eq.s32.totalorder %s26, 1
      %p107 = por %p105, %p106
      %p108 = scmp.ne.s32.totalorder %s99, %s100
      %p109 = scmp.eq.s32.totalorder %s26, 0
      %p110 = por %p108, %p109
      %p111 = scmp.ne.s32.totalorder %s99, %s100
      %p112 = scmp.eq.s32.totalorder %s27, 1
      %p113 = por %p111, %p112
      %p115 = scmp.ne.s32.totalorder %s100, %s114
      %p116 = scmp.eq.s32.totalorder %s27, 0
      %p117 = por %p115, %p116
      %s119 = sadd.s32 %s118, 1
      %p122 = scmp.eq.s32.totalorder %s21, 1
      %p123 = scmp.ne.s32.totalorder %s118, %s120
      %p124 = scmp.eq.s32.totalorder %s21, 0
      %p125 = por %p123, %p124
      %p126 = scmp.ne.s32.totalorder %s118, %s120
      %p127 = scmp.eq.s32.totalorder %s26, 1
      %p128 = por %p126, %p127
      %p129 = scmp.ne.s32.totalorder %s120, %s121
      %p130 = scmp.eq.s32.totalorder %s26, 0
      %p131 = por %p129, %p130
      %p132 = scmp.ne.s32.totalorder %s120, %s121
      %p133 = scmp.eq.s32.totalorder %s27, 1
      %p134 = por %p132, %p133
      %p136 = scmp.ne.s32.totalorder %s121, %s135
      %p137 = scmp.eq.s32.totalorder %s27, 0
      %p138 = por %p136, %p137
      %s140 = sadd.s32 %s139, 1
      %p143 = scmp.eq.s32.totalorder %s21, 1
      %p144 = scmp.ne.s32.totalorder %s139, %s141
      %p145 = scmp.eq.s32.totalorder %s21, 0
      %p146 = por %p144, %p145
      %p147 = scmp.ne.s32.totalorder %s139, %s141
      %p148 = scmp.eq.s32.totalorder %s26, 1
      %p149 = por %p147, %p148
      %p150 = scmp.ne.s32.totalorder %s141, %s142
      %p151 = scmp.eq.s32.totalorder %s26, 0
      %p152 = por %p150, %p151
      %p153 = scmp.ne.s32.totalorder %s141, %s142
      %p154 = scmp.eq.s32.totalorder %s27, 1
      %p155 = por %p153, %p154
      %p157 = scmp.ne.s32.totalorder %s142, %s156
      %p158 = scmp.eq.s32.totalorder %s27, 0
      %p159 = por %p157, %p158
      %s161 = sadd.s32 %s160, 1
      %p164 = scmp.eq.s32.totalorder %s21, 1
      %p165 = scmp.ne.s32.totalorder %s160, %s162
      %p166 = scmp.eq.s32.totalorder %s21, 0
      %p167 = por %p165, %p166
      %p168 = scmp.ne.s32.totalorder %s160, %s162
      %p169 = scmp.eq.s32.totalorder %s26, 1
      %p170 = por %p168, %p169
      %p171 = scmp.ne.s32.totalorder %s162, %s163
      %p172 = scmp.eq.s32.totalorder %s26, 0
      %p173 = por %p171, %p172
      %p174 = scmp.ne.s32.totalorder %s162, %s163
      %p175 = scmp.eq.s32.totalorder %s27, 1
      %p176 = por %p174, %p175
      %p178 = scmp.ne.s32.totalorder %s163, %s177
      %p179 = scmp.eq.s32.totalorder %s27, 0
      %p180 = por %p178, %p179
      %s181 = ssub.s32 %s21, %s28
      %p182 = scmp.eq.s32.totalorder %s181, 0
      %s184 = sadd.s32 %s183, 1
      %s185 = scalar_select %p182, %s183, %s184
      %p188 = pneg %p182
      %p189 = scmp.eq.s32.totalorder %s21, 1
      %p190 = por %p188, %p189
      %p191 = scmp.ne.s32.totalorder %s183, %s186
      %p192 = scmp.eq.s32.totalorder %s21, 0
      %p193 = por %p191, %p192
      %p194 = scmp.ne.s32.totalorder %s183, %s186
      %p195 = scmp.eq.s32.totalorder %s26, 1
      %p196 = por %p194, %p195
      %p197 = scmp.ne.s32.totalorder %s186, %s187
      %p198 = scmp.eq.s32.totalorder %s26, 0
      %p199 = por %p197, %p198
      %p200 = scmp.ne.s32.totalorder %s186, %s187
      %p201 = scmp.eq.s32.totalorder %s27, 1
      %p202 = por %p200, %p201
      %p204 = scmp.ne.s32.totalorder %s187, %s203
      %p205 = scmp.eq.s32.totalorder %s27, 0
      %p206 = por %p204, %p205
      %p207 = scmp.le.s32.totalorder 1, %s21
      %p208 = scmp.lt.s32.totalorder %s21, 3
      %p209 = pnand %p207, %p208
      %p210 = pneg %p209
      // Predicated region
      $region9: #{tpu_custom_call.1} parent=5 // pred_check
        _
      $region10: #{tpu_custom_call.1} parent=5 // pred_check_branch
        %212 = sbr.rel (%p209) target = $region12
      $region11: #{tpu_custom_call.1} parent=5 // pred_region
        %s213 = ssub.s32 %s21, 1
        // Predicated region
        $region13: #{tpu_custom_call.1} parent=11 // pred_check
          %p214 = pneg %p68
        $region14: #{tpu_custom_call.1} parent=11 // pred_check_branch
          %216 = sbr.rel (%p214) target = $region16
        $region15: #{tpu_custom_call.1} parent=11 // pred_region
          %s218 = ssub.s32 512, 512
          %219 = vsyncadd [#allocation6], %s218
          %s220 = sshll.u32 [#allocation5], 4
          %s221 = int_to_ptr.vmem [resolvable:$true] %s220
          %226 = dma.hbm_to_vmem [thread:$0]  %s1, 512, %s221, [#allocation6], 64, 64, 4
        $region16: #{tpu_custom_call.1} parent=11 // pred_fallthru
          _
        // Predicated region
        $region17: #{tpu_custom_call.1} parent=11 // pred_check
          %p227 = pneg %p89
        $region18: #{tpu_custom_call.1} parent=11 // pred_check_branch
          %229 = sbr.rel (%p227) target = $region20
        $region19: #{tpu_custom_call.1} parent=11 // pred_region
          %s231 = ssub.s32 3072, 3072
          %232 = vsyncadd [#allocation6], %s231
          %s233 = sshll.u32 [#allocation7], 4
          %s234 = int_to_ptr.vmem [resolvable:$true] %s233
          %239 = dma.hbm_to_vmem [thread:$0]  %s2, 3072, %s234, [#allocation6], 192, 192, 12
        $region20: #{tpu_custom_call.1} parent=11 // pred_fallthru
          _
        // Predicated region
        $region21: #{tpu_custom_call.1} parent=11 // pred_check
          %p240 = pneg %p110
        $region22: #{tpu_custom_call.1} parent=11 // pred_check_branch
          %242 = sbr.rel (%p240) target = $region24
        $region23: #{tpu_custom_call.1} parent=11 // pred_region
          _
        $region24: #{tpu_custom_call.1} parent=11 // pred_fallthru
          _
        // Predicated region
        $region25: #{tpu_custom_call.1} parent=11 // pred_check
          %p243 = pneg %p131
        $region26: #{tpu_custom_call.1} parent=11 // pred_check_branch
          %245 = sbr.rel (%p243) target = $region28
        $region27: #{tpu_custom_call.1} parent=11 // pred_region
          _
        $region28: #{tpu_custom_call.1} parent=11 // pred_fallthru
          _
        // Predicated region
        $region29: #{tpu_custom_call.1} parent=11 // pred_check
          %p246 = pneg %p152
        $region30: #{tpu_custom_call.1} parent=11 // pred_check_branch
          %248 = sbr.rel (%p246) target = $region32
        $region31: #{tpu_custom_call.1} parent=11 // pred_region
          %s250 = ssub.s32 1024, 1024
          %251 = vsyncadd [#allocation9], %s250
          %s252 = sshll.u32 [#allocation8], 4
          %s253 = int_to_ptr.vmem [resolvable:$true] %s252
          %258 = dma.hbm_to_vmem [thread:$0]  %s5, 1024, %s253, [#allocation9], 64, 64, 4
        $region32: #{tpu_custom_call.1} parent=11 // pred_fallthru
          _
        // Predicated region
        $region33: #{tpu_custom_call.1} parent=11 // pred_check
          %p259 = pneg %p173
        $region34: #{tpu_custom_call.1} parent=11 // pred_check_branch
          %261 = sbr.rel (%p259) target = $region36
        $region35: #{tpu_custom_call.1} parent=11 // pred_region
          _
        $region36: #{tpu_custom_call.1} parent=11 // pred_fallthru
          _
      $region12: #{tpu_custom_call.1} parent=5 // pred_fallthru
        _
      %p262 = scmp.lt.s32.totalorder %s21, 2
      // Predicated region
      $region37: #{tpu_custom_call.1} parent=5 // pred_check
        %p263 = pneg %p262
      $region38: #{tpu_custom_call.1} parent=5 // pred_check_branch
        %265 = sbr.rel (%p263) target = $region40
      $region39: #{tpu_custom_call.1} parent=5 // pred_region
        // Predicated region
        $region41: #{tpu_custom_call.1} parent=39 // pred_check
          %p266 = pneg %p41
        $region42: #{tpu_custom_call.1} parent=39 // pred_check_branch
          %268 = sbr.rel (%p266) target = $region44
        $region43: #{tpu_custom_call.1} parent=39 // pred_region
          %s269 = sand.u32 %s31, 1
          %s270 = scalar_lea.sflag [#allocation3], %s269
          %s271 = sand.u32 %s31, 1
          %s272 = smul.addr %s271, 32
          %s273 = scalar_lea.vmem [#allocation2], %s272
          %s274 = smul.u32 4, %s21
          %s276 = ssub.s32 512, 512
          %277 = vsyncadd %s270, %s276
          %s278 = smul.addr %s274, 2
          %s279 = smul.addr %s278, 64
          %s280 = scalar_lea.hbm %s0, %s279
          %s281 = sshll.u32 %s273, 4
          %s282 = int_to_ptr.vmem [resolvable:$true] %s281
          %287 = dma.hbm_to_vmem [thread:$0]  %s280, 512, %s282, %s270, 64, 64, 4
        $region44: #{tpu_custom_call.1} parent=39 // pred_fallthru
          _
      $region40: #{tpu_custom_call.1} parent=5 // pred_fallthru
        _
      %p288 = scmp.le.s32.totalorder 1, %s21
      %p289 = scmp.lt.s32.totalorder %s21, 3
      %p290 = pnand %p288, %p289
      %p291 = pneg %p290
      // Predicated region
      $region45: #{tpu_custom_call.1} parent=5 // pred_check
        _
      $region46: #{tpu_custom_call.1} parent=5 // pred_check_branch
        %293 = sbr.rel (%p290) target = $region48
      $region47: #{tpu_custom_call.1} parent=5 // pred_region
        %s294 = ssub.s32 %s21, 1
        %s295 = sand.u32 %s34, 1
        %s296 = scalar_lea.sflag [#allocation3], %s295
        %s297 = sand.u32 %s34, 1
        %s298 = smul.addr %s297, 32
        %s299 = scalar_lea.vmem [#allocation2], %s298
        // Predicated region
        $region49: #{tpu_custom_call.1} parent=47 // pred_check
          %p300 = pneg %p47
        $region50: #{tpu_custom_call.1} parent=47 // pred_check_branch
          %302 = sbr.rel (%p300) target = $region52
        $region51: #{tpu_custom_call.1} parent=47 // pred_region
          %303 = dma.done %s296, 512
        $region52: #{tpu_custom_call.1} parent=47 // pred_fallthru
          _
        // Predicated region
        $region53: #{tpu_custom_call.1} parent=47 // pred_check
          %p304 = pneg %p68
        $region54: #{tpu_custom_call.1} parent=47 // pred_check_branch
          %306 = sbr.rel (%p304) target = $region56
        $region55: #{tpu_custom_call.1} parent=47 // pred_region
          %307 = dma.done [#allocation6], 512
        $region56: #{tpu_custom_call.1} parent=47 // pred_fallthru
          _
        // Predicated region
        $region57: #{tpu_custom_call.1} parent=47 // pred_check
          %p308 = pneg %p89
        $region58: #{tpu_custom_call.1} parent=47 // pred_check_branch
          %310 = sbr.rel (%p308) target = $region60
        $region59: #{tpu_custom_call.1} parent=47 // pred_region
          %311 = dma.done [#allocation6], 3072
        $region60: #{tpu_custom_call.1} parent=47 // pred_fallthru
          _
        // Predicated region
        $region61: #{tpu_custom_call.1} parent=47 // pred_check
          %p312 = pneg %p152
        $region62: #{tpu_custom_call.1} parent=47 // pred_check_branch
          %314 = sbr.rel (%p312) target = $region64
        $region63: #{tpu_custom_call.1} parent=47 // pred_region
          %315 = dma.done [#allocation9], 1024
        $region64: #{tpu_custom_call.1} parent=47 // pred_fallthru
          _
        %s316 = sand.u32 %s34, 1
        %s317 = scalar_lea.sflag [#allocation3], %s316
        %s318 = sand.u32 %s34, 1
        %s319 = smul.addr %s318, 32
        %s320 = scalar_lea.vmem [#allocation2], %s319
        %p321 = pneg %p47
        %p322 = pneg %p44
        %p323 = pneg %p68
        %p324 = pneg %p65
        %p325 = pneg %p89
        %p326 = pneg %p86
        %p327 = pneg %p110
        %p328 = pneg %p107
        %p329 = pneg %p131
        %p330 = pneg %p128
        %p331 = pneg %p152
        %p332 = pneg %p149
        %p333 = pneg %p173
        %p334 = pneg %p170
        %p335 = pneg %p199
        %p336 = pneg %p196
        %s337 = sand.u32 %s186, 1
        %s338 = scalar_lea.sflag [#allocation4], %s337
        %s339 = sand.u32 %s186, 1
        %s340 = smul.addr %s339, 32
        %s341 = scalar_lea.vmem [#allocation10], %s340
        %s342 = smul.u32 4, %s26
        %s343 = smul.u32 4, %s26
        %v345 = vld [vmem:[%s299] sm:$0xf]
        %v346 = vld [vmem:[%s299 + $0x4] sm:$0xf]
        %v347 = vld [vmem:[%s299 + $0x8] sm:$0xf]
        %v348 = vld [vmem:[%s299 + $0xc] sm:$0xf]
        %v349 = vld [vmem:[%s299 + $0x10] sm:$0xf]
        %v350 = vld [vmem:[%s299 + $0x14] sm:$0xf]
        %v351 = vld [vmem:[%s299 + $0x18] sm:$0xf]
        %v352 = vld [vmem:[%s299 + $0x1c] sm:$0xf]
        %v353 = vld [vmem:[#allocation7] sm:$0xff]
        %v354 = vld [vmem:[#allocation7 + $0x8] sm:$0xf]
        %v355 = vld [vmem:[#allocation7 + $0xc] sm:$0xff]
        %v356 = vld [vmem:[#allocation7 + $0x14] sm:$0xf]
        %v357 = vld [vmem:[#allocation7 + $0x18] sm:$0xff]
        %v358 = vld [vmem:[#allocation7 + $0x20] sm:$0xf]
        %v359 = vld [vmem:[#allocation7 + $0x24] sm:$0xff]
        %v360 = vld [vmem:[#allocation7 + $0x2c] sm:$0xf]
        %v361 = vld [vmem:[#allocation7 + $0x30] sm:$0xff]
        %v362 = vld [vmem:[#allocation7 + $0x38] sm:$0xf]
        %v363 = vld [vmem:[#allocation7 + $0x3c] sm:$0xff]
        %v364 = vld [vmem:[#allocation7 + $0x44] sm:$0xf]
        %v365 = vld [vmem:[#allocation7 + $0x48] sm:$0xff]
        %v366 = vld [vmem:[#allocation7 + $0x50] sm:$0xf]
        %v367 = vld [vmem:[#allocation7 + $0x54] sm:$0xff]
        %v368 = vld [vmem:[#allocation7 + $0x5c] sm:$0xf]
        %v369 = vld [vmem:[#allocation7 + $0x60] sm:$0xff]
        %v370 = vld [vmem:[#allocation7 + $0x68] sm:$0xf]
        %v371 = vld [vmem:[#allocation7 + $0x6c] sm:$0xff]
        %v372 = vld [vmem:[#allocation7 + $0x74] sm:$0xf]
        %v373 = vld [vmem:[#allocation7 + $0x78] sm:$0xff]
        %v374 = vld [vmem:[#allocation7 + $0x80] sm:$0xf]
        %v375 = vld [vmem:[#allocation7 + $0x84] sm:$0xff]
        %v376 = vld [vmem:[#allocation7 + $0x8c] sm:$0xf]
        %v377 = vld [vmem:[#allocation7 + $0x90] sm:$0xff]
        %v378 = vld [vmem:[#allocation7 + $0x98] sm:$0xf]
        %v379 = vld [vmem:[#allocation7 + $0x9c] sm:$0xff]
        %v380 = vld [vmem:[#allocation7 + $0xa4] sm:$0xf]
        %v381 = vld [vmem:[#allocation7 + $0xa8] sm:$0xff]
        %v382 = vld [vmem:[#allocation7 + $0xb0] sm:$0xf]
        %v383 = vld [vmem:[#allocation7 + $0xb4] sm:$0xff]
        %v384 = vld [vmem:[#allocation7 + $0xbc] sm:$0xf]
        %v385 = vld [vmem:[%s3] sm:$0x7]
        %v387 = vlaneseq
        %v388 = vshrl.u32 %v387, 7
        %v389 = vsub.s32 0, %v388
        %v390 = vrot.slane %v385, %v389
        %v391 = vlaneseq
        %v392 = vshrl.u32 %v391, 7
        %v393 = vsub.s32 1, %v392
        %v394 = vrot.slane %v385, %v393
        %v395 = vlaneseq
        %v396 = vshrl.u32 %v395, 7
        %v397 = vsub.s32 2, %v396
        %v398 = vrot.slane %v385, %v397
        %v410 = vunpack.c.l.b16 %v345
        %v411 = vunpack.c.l.b16 %v346
        %v412 = vunpack.c.l.b16 %v347
        %v413 = vunpack.c.l.b16 %v348
        %v414 = vunpack.c.l.b16 %v349
        %v415 = vunpack.c.l.b16 %v350
        %v416 = vunpack.c.l.b16 %v351
        %v417 = vunpack.c.l.b16 %v352
        %v418 = vpack.c.b16 %v411, %v410
        %v419 = vpack.c.b16 %v413, %v412
        %v420 = vpack.c.b16 %v415, %v414
        %v421 = vpack.c.b16 %v417, %v416
        %v458 = vunpack.c.l.b16 %v353
        %v459 = vunpack.c.h.b16 %v353
        %v460 = vunpack.c.l.b16 %v354
        %v461 = vunpack.c.l.b16 %v355
        %v462 = vunpack.c.h.b16 %v355
        %v463 = vunpack.c.l.b16 %v356
        %v464 = vunpack.c.l.b16 %v357
        %v465 = vunpack.c.h.b16 %v357
        %v466 = vunpack.c.l.b16 %v358
        %v467 = vunpack.c.l.b16 %v359
        %v468 = vunpack.c.h.b16 %v359
        %v469 = vunpack.c.l.b16 %v360
        %v470 = vunpack.c.l.b16 %v361
        %v471 = vunpack.c.h.b16 %v361
        %v472 = vunpack.c.l.b16 %v362
        %v473 = vunpack.c.l.b16 %v363
        %v474 = vunpack.c.h.b16 %v363
        %v475 = vunpack.c.l.b16 %v364
        %v476 = vunpack.c.l.b16 %v365
        %v477 = vunpack.c.h.b16 %v365
        %v478 = vunpack.c.l.b16 %v366
        %v479 = vunpack.c.l.b16 %v367
        %v480 = vunpack.c.h.b16 %v367
        %v481 = vunpack.c.l.b16 %v368
        %v482 = vunpack.c.l.b16 %v369
        %v483 = vunpack.c.h.b16 %v369
        %v484 = vunpack.c.l.b16 %v370
        %v485 = vunpack.c.l.b16 %v371
        %v486 = vunpack.c.h.b16 %v371
        %v487 = vunpack.c.l.b16 %v372
        %v488 = vunpack.c.l.b16 %v373
        %v489 = vunpack.c.h.b16 %v373
        %v490 = vunpack.c.l.b16 %v374
        %v491 = vunpack.c.l.b16 %v375
        %v492 = vunpack.c.h.b16 %v375
        %v493 = vunpack.c.l.b16 %v376
        %v494 = vunpack.c.l.b16 %v377
        %v495 = vunpack.c.h.b16 %v377
        %v496 = vunpack.c.l.b16 %v378
        %v497 = vunpack.c.l.b16 %v379
        %v498 = vunpack.c.h.b16 %v379
        %v499 = vunpack.c.l.b16 %v380
        %v500 = vunpack.c.l.b16 %v381
        %v501 = vunpack.c.h.b16 %v381
        %v502 = vunpack.c.l.b16 %v382
        %v503 = vunpack.c.l.b16 %v383
        %v504 = vunpack.c.h.b16 %v383
        %v505 = vunpack.c.l.b16 %v384
        %v506 = vpack.c.b16 %v461, %v458
        %v507 = vpack.c.b16 %v462, %v459
        %v508 = vpack.c.b16 %v463, %v460
        %v509 = vpack.c.b16 %v467, %v464
        %v510 = vpack.c.b16 %v468, %v465
        %v511 = vpack.c.b16 %v469, %v466
        %v512 = vpack.c.b16 %v473, %v470
        %v513 = vpack.c.b16 %v474, %v471
        %v514 = vpack.c.b16 %v475, %v472
        %v515 = vpack.c.b16 %v479, %v476
        %v516 = vpack.c.b16 %v480, %v477
        %v517 = vpack.c.b16 %v481, %v478
        %v518 = vpack.c.b16 %v485, %v482
        %v519 = vpack.c.b16 %v486, %v483
        %v520 = vpack.c.b16 %v487, %v484
        %v521 = vpack.c.b16 %v491, %v488
        %v522 = vpack.c.b16 %v492, %v489
        %v523 = vpack.c.b16 %v493, %v490
        %v524 = vpack.c.b16 %v497, %v494
        %v525 = vpack.c.b16 %v498, %v495
        %v526 = vpack.c.b16 %v499, %v496
        %v527 = vpack.c.b16 %v503, %v500
        %v528 = vpack.c.b16 %v504, %v501
        %v529 = vpack.c.b16 %v505, %v502
        %554 = vmatprep.subr.bf16.mxu0 %v528
        %555 = vmatpush1.bf16.msra.mxu0 %v527
        %556 = vmatprep.subr.bf16.mxu0 %v525
        %557 = vmatpush1.bf16.msra.mxu0 %v524
        %558 = vmatprep.subr.bf16.mxu0 %v522
        %559 = vmatpush1.bf16.msra.mxu0 %v521
        %560 = vmatprep.subr.bf16.mxu0 %v519
        %561 = vmatpush1.bf16.msra.mxu0 %v518
        %562 = vmatprep.subr.bf16.mxu0 %v516
        %563 = vmatpush1.bf16.msra.mxu0 %v515
        %564 = vmatprep.subr.bf16.mxu0 %v513
        %565 = vmatpush1.bf16.msra.mxu0 %v512
        %566 = vmatprep.subr.bf16.mxu0 %v510
        %567 = vmatpush1.bf16.msra.mxu0 %v509
        %568 = vmatprep.subr.bf16.mxu0 %v507
        %569 = vmatpush1.bf16.msra.mxu0 %v506
        %570 = vmatprep.subr.bf16.mxu0 0
        %571 = vmatpush2.bf16.msra.mxu0 0
        %572 = vmatprep.subr.bf16.mxu0 0
        %573 = vmatpush2.bf16.msra.mxu0 0
        %574 = vmatprep.subr.bf16.mxu0 0
        %575 = vmatpush2.bf16.msra.mxu0 0
        %576 = vmatprep.subr.bf16.mxu0 0
        %577 = vmatpush2.bf16.msra.mxu0 0
        %578 = vmatprep.subr.bf16.mxu0 0
        %579 = vmatpush2.bf16.msra.mxu0 0
        %580 = vmatprep.subr.bf16.mxu0 0
        %581 = vmatpush2.bf16.msra.mxu0 0
        %582 = vmatprep.subr.bf16.mxu0 0
        %583 = vmatpush2.bf16.msra.mxu0 0
        %584 = vmatprep.subr.bf16.mxu0 0
        %585 = vmatpush2.bf16.msra.mxu0 0
        %586 = vmatprep.mubr.bf16.mxu0 0
        %587 = vmatmul.mubr.bf16.gmra.mxu0 %v418
        %v588 = vpop.f32.mrf.mxu0
        %v589 = vadd.f32 %v390, %v588
        %v590 = vpop.f32.mrf.mxu0
        %v591 = vadd.f32 %v394, %v590
        %v592 = vpop.f32.mrf.mxu0
        %v593 = vadd.f32 %v390, %v592
        %v594 = vpop.f32.mrf.mxu0
        %v595 = vadd.f32 %v394, %v594
        %596 = vmatprep.mubr.bf16.mxu0 0
        %597 = vmatmul.mubr.bf16.gmra.mxu0 %v419
        %v598 = vpop.f32.mrf.mxu0
        %v599 = vadd.f32 %v390, %v598
        %v600 = vpop.f32.mrf.mxu0
        %v601 = vadd.f32 %v394, %v600
        %v602 = vpop.f32.mrf.mxu0
        %v603 = vadd.f32 %v390, %v602
        %v604 = vpop.f32.mrf.mxu0
        %v605 = vadd.f32 %v394, %v604
        %606 = vmatprep.mubr.bf16.mxu0 0
        %607 = vmatmul.mubr.bf16.gmra.mxu0 %v420
        %v608 = vpop.f32.mrf.mxu0
        %v609 = vadd.f32 %v390, %v608
        %v610 = vpop.f32.mrf.mxu0
        %v611 = vadd.f32 %v394, %v610
        %v612 = vpop.f32.mrf.mxu0
        %v613 = vadd.f32 %v390, %v612
        %v614 = vpop.f32.mrf.mxu0
        %v615 = vadd.f32 %v394, %v614
        %616 = vmatprep.mubr.bf16.mxu0 0
        %617 = vmatmul.mubr.bf16.gmra.mxu0 %v421
        %v618 = vpop.f32.mrf.mxu0
        %v619 = vadd.f32 %v390, %v618
        %v620 = vpop.f32.mrf.mxu0
        %v621 = vadd.f32 %v394, %v620
        %v622 = vpop.f32.mrf.mxu0
        %v623 = vadd.f32 %v390, %v622
        %v624 = vpop.f32.mrf.mxu0
        %v625 = vadd.f32 %v394, %v624
        %626 = vdwg.mxu0
        %627 = vmatprep.subr.bf16.mxu0 0
        %628 = vmatpush1.bf16.msra.mxu0 %v529
        %629 = vmatprep.subr.bf16.mxu0 0
        %630 = vmatpush1.bf16.msra.mxu0 %v526
        %631 = vmatprep.subr.bf16.mxu0 0
        %632 = vmatpush1.bf16.msra.mxu0 %v523
        %633 = vmatprep.subr.bf16.mxu0 0
        %634 = vmatpush1.bf16.msra.mxu0 %v520
        %635 = vmatprep.subr.bf16.mxu0 0
        %636 = vmatpush1.bf16.msra.mxu0 %v517
        %637 = vmatprep.subr.bf16.mxu0 0
        %638 = vmatpush1.bf16.msra.mxu0 %v514
        %639 = vmatprep.subr.bf16.mxu0 0
        %640 = vmatpush1.bf16.msra.mxu0 %v511
        %641 = vmatprep.subr.bf16.mxu0 0
        %642 = vmatpush1.bf16.msra.mxu0 %v508
        %643 = vmatprep.subr.bf16.mxu0 0
        %644 = vmatpush2.bf16.msra.mxu0 0
        %645 = vmatprep.subr.bf16.mxu0 0
        %646 = vmatpush2.bf16.msra.mxu0 0
        %647 = vmatprep.subr.bf16.mxu0 0
        %648 = vmatpush2.bf16.msra.mxu0 0
        %649 = vmatprep.subr.bf16.mxu0 0
        %650 = vmatpush2.bf16.msra.mxu0 0
        %651 = vmatprep.subr.bf16.mxu0 0
        %652 = vmatpush2.bf16.msra.mxu0 0
        %653 = vmatprep.subr.bf16.mxu0 0
        %654 = vmatpush2.bf16.msra.mxu0 0
        %655 = vmatprep.subr.bf16.mxu0 0
        %656 = vmatpush2.bf16.msra.mxu0 0
        %657 = vmatprep.subr.bf16.mxu0 0
        %658 = vmatpush2.bf16.msra.mxu0 0
        %659 = vmatprep.mubr.bf16.mxu0 0
        %660 = vmatmul.mubr.bf16.gmra.mxu0 %v418
        %v661 = vpop.f32.mrf.mxu0
        %v662 = vadd.f32 %v398, %v661
        %v663 = vpop.f32.mrf.mxu0
        %v664 = vpop.f32.mrf.mxu0
        %v665 = vadd.f32 %v398, %v664
        %v666 = vpop.f32.mrf.mxu0
        %667 = vmatprep.mubr.bf16.mxu0 0
        %668 = vmatmul.mubr.bf16.gmra.mxu0 %v419
        %v669 = vpop.f32.mrf.mxu0
        %v670 = vadd.f32 %v398, %v669
        %v671 = vpop.f32.mrf.mxu0
        %v672 = vpop.f32.mrf.mxu0
        %v673 = vadd.f32 %v398, %v672
        %v674 = vpop.f32.mrf.mxu0
        %675 = vmatprep.mubr.bf16.mxu0 0
        %676 = vmatmul.mubr.bf16.gmra.mxu0 %v420
        %v677 = vpop.f32.mrf.mxu0
        %v678 = vadd.f32 %v398, %v677
        %v679 = vpop.f32.mrf.mxu0
        %v680 = vpop.f32.mrf.mxu0
        %v681 = vadd.f32 %v398, %v680
        %v682 = vpop.f32.mrf.mxu0
        %683 = vmatprep.mubr.bf16.mxu0 0
        %684 = vmatmul.mubr.bf16.gmra.mxu0 %v421
        %v685 = vpop.f32.mrf.mxu0
        %v686 = vadd.f32 %v398, %v685
        %v687 = vpop.f32.mrf.mxu0
        %v688 = vpop.f32.mrf.mxu0
        %v689 = vadd.f32 %v398, %v688
        %v690 = vpop.f32.mrf.mxu0
        %691 = vdwg.mxu0
        %700 = vrot.lane.b32.xlu0 %v589, 96
        %v701 = vpop.permute.xlu0 %700
        %702 = vrot.lane.b32.xlu0 %v593, 96
        %v703 = vpop.permute.xlu0 %702
        %704 = vrot.lane.b32.xlu0 %v599, 96
        %v705 = vpop.permute.xlu0 %704
        %706 = vrot.lane.b32.xlu0 %v603, 96
        %v707 = vpop.permute.xlu0 %706
        %708 = vrot.lane.b32.xlu0 %v609, 96
        %v709 = vpop.permute.xlu0 %708
        %710 = vrot.lane.b32.xlu0 %v613, 96
        %v711 = vpop.permute.xlu0 %710
        %712 = vrot.lane.b32.xlu0 %v619, 96
        %v713 = vpop.permute.xlu0 %712
        %714 = vrot.lane.b32.xlu0 %v623, 96
        %v715 = vpop.permute.xlu0 %714
        %724 = vrot.lane.b32.xlu0 %v589, 64
        %v725 = vpop.permute.xlu0 %724
        %726 = vrot.lane.b32.xlu0 %v593, 64
        %v727 = vpop.permute.xlu0 %726
        %728 = vrot.lane.b32.xlu0 %v599, 64
        %v729 = vpop.permute.xlu0 %728
        %730 = vrot.lane.b32.xlu0 %v603, 64
        %v731 = vpop.permute.xlu0 %730
        %732 = vrot.lane.b32.xlu0 %v609, 64
        %v733 = vpop.permute.xlu0 %732
        %734 = vrot.lane.b32.xlu0 %v613, 64
        %v735 = vpop.permute.xlu0 %734
        %736 = vrot.lane.b32.xlu0 %v619, 64
        %v737 = vpop.permute.xlu0 %736
        %738 = vrot.lane.b32.xlu0 %v623, 64
        %v739 = vpop.permute.xlu0 %738
        %748 = vrot.lane.b32.xlu0 %v589, 32
        %v749 = vpop.permute.xlu0 %748
        %750 = vrot.lane.b32.xlu0 %v593, 32
        %v751 = vpop.permute.xlu0 %750
        %752 = vrot.lane.b32.xlu0 %v599, 32
        %v753 = vpop.permute.xlu0 %752
        %754 = vrot.lane.b32.xlu0 %v603, 32
        %v755 = vpop.permute.xlu0 %754
        %756 = vrot.lane.b32.xlu0 %v609, 32
        %v757 = vpop.permute.xlu0 %756
        %758 = vrot.lane.b32.xlu0 %v613, 32
        %v759 = vpop.permute.xlu0 %758
        %760 = vrot.lane.b32.xlu0 %v619, 32
        %v761 = vpop.permute.xlu0 %760
        %762 = vrot.lane.b32.xlu0 %v623, 32
        %v763 = vpop.permute.xlu0 %762
        %780 = vrot.lane.b32.xlu0 %v591, 96
        %v781 = vpop.permute.xlu0 %780
        %782 = vrot.lane.b32.xlu0 %v595, 96
        %v783 = vpop.permute.xlu0 %782
        %784 = vrot.lane.b32.xlu0 %v601, 96
        %v785 = vpop.permute.xlu0 %784
        %786 = vrot.lane.b32.xlu0 %v605, 96
        %v787 = vpop.permute.xlu0 %786
        %788 = vrot.lane.b32.xlu0 %v611, 96
        %v789 = vpop.permute.xlu0 %788
        %790 = vrot.lane.b32.xlu0 %v615, 96
        %v791 = vpop.permute.xlu0 %790
        %792 = vrot.lane.b32.xlu0 %v621, 96
        %v793 = vpop.permute.xlu0 %792
        %794 = vrot.lane.b32.xlu0 %v625, 96
        %v795 = vpop.permute.xlu0 %794
        %804 = vrot.lane.b32.xlu0 %v591, 64
        %v805 = vpop.permute.xlu0 %804
        %806 = vrot.lane.b32.xlu0 %v595, 64
        %v807 = vpop.permute.xlu0 %806
        %808 = vrot.lane.b32.xlu0 %v601, 64
        %v809 = vpop.permute.xlu0 %808
        %810 = vrot.lane.b32.xlu0 %v605, 64
        %v811 = vpop.permute.xlu0 %810
        %812 = vrot.lane.b32.xlu0 %v611, 64
        %v813 = vpop.permute.xlu0 %812
        %814 = vrot.lane.b32.xlu0 %v615, 64
        %v815 = vpop.permute.xlu0 %814
        %816 = vrot.lane.b32.xlu0 %v621, 64
        %v817 = vpop.permute.xlu0 %816
        %818 = vrot.lane.b32.xlu0 %v625, 64
        %v819 = vpop.permute.xlu0 %818
        %828 = vrot.lane.b32.xlu0 %v591, 32
        %v829 = vpop.permute.xlu0 %828
        %830 = vrot.lane.b32.xlu0 %v595, 32
        %v831 = vpop.permute.xlu0 %830
        %832 = vrot.lane.b32.xlu0 %v601, 32
        %v833 = vpop.permute.xlu0 %832
        %834 = vrot.lane.b32.xlu0 %v605, 32
        %v835 = vpop.permute.xlu0 %834
        %836 = vrot.lane.b32.xlu0 %v611, 32
        %v837 = vpop.permute.xlu0 %836
        %838 = vrot.lane.b32.xlu0 %v615, 32
        %v839 = vpop.permute.xlu0 %838
        %840 = vrot.lane.b32.xlu0 %v621, 32
        %v841 = vpop.permute.xlu0 %840
        %842 = vrot.lane.b32.xlu0 %v625, 32
        %v843 = vpop.permute.xlu0 %842
        %860 = vrot.lane.b32.xlu0 %v662, 96
        %v861 = vpop.permute.xlu0 %860
        %862 = vrot.lane.b32.xlu0 %v665, 96
        %v863 = vpop.permute.xlu0 %862
        %864 = vrot.lane.b32.xlu0 %v670, 96
        %v865 = vpop.permute.xlu0 %864
        %866 = vrot.lane.b32.xlu0 %v673, 96
        %v867 = vpop.permute.xlu0 %866
        %868 = vrot.lane.b32.xlu0 %v678, 96
        %v869 = vpop.permute.xlu0 %868
        %870 = vrot.lane.b32.xlu0 %v681, 96
        %v871 = vpop.permute.xlu0 %870
        %872 = vrot.lane.b32.xlu0 %v686, 96
        %v873 = vpop.permute.xlu0 %872
        %874 = vrot.lane.b32.xlu0 %v689, 96
        %v875 = vpop.permute.xlu0 %874
        %884 = vrot.lane.b32.xlu0 %v662, 64
        %v885 = vpop.permute.xlu0 %884
        %886 = vrot.lane.b32.xlu0 %v665, 64
        %v887 = vpop.permute.xlu0 %886
        %888 = vrot.lane.b32.xlu0 %v670, 64
        %v889 = vpop.permute.xlu0 %888
        %890 = vrot.lane.b32.xlu0 %v673, 64
        %v891 = vpop.permute.xlu0 %890
        %892 = vrot.lane.b32.xlu0 %v678, 64
        %v893 = vpop.permute.xlu0 %892
        %894 = vrot.lane.b32.xlu0 %v681, 64
        %v895 = vpop.permute.xlu0 %894
        %896 = vrot.lane.b32.xlu0 %v686, 64
        %v897 = vpop.permute.xlu0 %896
        %898 = vrot.lane.b32.xlu0 %v689, 64
        %v899 = vpop.permute.xlu0 %898
        %908 = vrot.lane.b32.xlu0 %v662, 32
        %v909 = vpop.permute.xlu0 %908
        %910 = vrot.lane.b32.xlu0 %v665, 32
        %v911 = vpop.permute.xlu0 %910
        %912 = vrot.lane.b32.xlu0 %v670, 32
        %v913 = vpop.permute.xlu0 %912
        %914 = vrot.lane.b32.xlu0 %v673, 32
        %v915 = vpop.permute.xlu0 %914
        %916 = vrot.lane.b32.xlu0 %v678, 32
        %v917 = vpop.permute.xlu0 %916
        %918 = vrot.lane.b32.xlu0 %v681, 32
        %v919 = vpop.permute.xlu0 %918
        %920 = vrot.lane.b32.xlu0 %v686, 32
        %v921 = vpop.permute.xlu0 %920
        %922 = vrot.lane.b32.xlu0 %v689, 32
        %v923 = vpop.permute.xlu0 %922
        %v932 = vld [vmem:[%s4] sm:$0xf]
        %v935 = vunpack.c.l.s4 1966171168
        %v936 = vunpack.c.0.s8 %v935
        %v937 = vlaneseq
        %v938 = vshrl.u32 %v937, 7
        %v939 = vsub.s32 %v936, %v938
        %v940 = vrot.slane %v932, %v939
        %v941 = vcombine.high %v940, %v940
        %v943 = vunpack.c.l.s4 1966171168
        %v944 = vunpack.c.0.s8 %v943
        %v945 = vlaneseq
        %v946 = vshrl.u32 %v945, 7
        %v947 = vsub.s32 %v944, %v946
        %v948 = vrot.slane %v940, %v947
        %v950 = vunpack.c.l.s4 1966171168
        %v951 = vunpack.c.0.s8 %v950
        %v952 = vlaneseq
        %v953 = vshrl.u32 %v952, 7
        %v954 = vsub.s32 %v951, %v953
        %v955 = vrot.slane %v941, %v954
        %v956 = vcombine.high %v948, %v948
        %v957 = vcombine.high %v955, %v955
        %v958 = vmul.f32 %v589, %v589
        %v959 = vmul.f32 %v593, %v593
        %v960 = vmul.f32 %v599, %v599
        %v961 = vmul.f32 %v603, %v603
        %v962 = vmul.f32 %v609, %v609
        %v963 = vmul.f32 %v613, %v613
        %v964 = vmul.f32 %v619, %v619
        %v965 = vmul.f32 %v623, %v623
        %v966 = vmul.f32 %v701, %v701
        %v967 = vmul.f32 %v703, %v703
        %v968 = vmul.f32 %v705, %v705
        %v969 = vmul.f32 %v707, %v707
        %v970 = vmul.f32 %v709, %v709
        %v971 = vmul.f32 %v711, %v711
        %v972 = vmul.f32 %v713, %v713
        %v973 = vmul.f32 %v715, %v715
        %v974 = vmul.f32 %v725, %v725
        %v975 = vmul.f32 %v727, %v727
        %v976 = vmul.f32 %v729, %v729
        %v977 = vmul.f32 %v731, %v731
        %v978 = vmul.f32 %v733, %v733
        %v979 = vmul.f32 %v735, %v735
        %v980 = vmul.f32 %v737, %v737
        %v981 = vmul.f32 %v739, %v739
        %v982 = vmul.f32 %v749, %v749
        %v983 = vmul.f32 %v751, %v751
        %v984 = vmul.f32 %v753, %v753
        %v985 = vmul.f32 %v755, %v755
        %v986 = vmul.f32 %v757, %v757
        %v987 = vmul.f32 %v759, %v759
        %v988 = vmul.f32 %v761, %v761
        %v989 = vmul.f32 %v763, %v763
        %vm990 = vcmask 261120
        %v991 = vsel %vm990, %v958, 0.0
        %992 = vadd.xlane.f32.xlu0 %v991
        %v993 = vpop.xlane.xlu0 %992
        %v994 = vsel %vm990, %v959, 0.0
        %995 = vadd.xlane.f32.xlu0 %v994
        %v996 = vpop.xlane.xlu0 %995
        %v997 = vsel %vm990, %v960, 0.0
        %998 = vadd.xlane.f32.xlu0 %v997
        %v999 = vpop.xlane.xlu0 %998
        %v1000 = vsel %vm990, %v961, 0.0
        %1001 = vadd.xlane.f32.xlu0 %v1000
        %v1002 = vpop.xlane.xlu0 %1001
        %v1003 = vsel %vm990, %v962, 0.0
        %1004 = vadd.xlane.f32.xlu0 %v1003
        %v1005 = vpop.xlane.xlu0 %1004
        %v1006 = vsel %vm990, %v963, 0.0
        %1007 = vadd.xlane.f32.xlu0 %v1006
        %v1008 = vpop.xlane.xlu0 %1007
        %v1009 = vsel %vm990, %v964, 0.0
        %1010 = vadd.xlane.f32.xlu0 %v1009
        %v1011 = vpop.xlane.xlu0 %1010
        %v1012 = vsel %vm990, %v965, 0.0
        %1013 = vadd.xlane.f32.xlu0 %v1012
        %v1014 = vpop.xlane.xlu0 %1013
        %v1015 = vsel %vm990, %v966, 0.0
        %1016 = vadd.xlane.f32.xlu0 %v1015
        %v1017 = vpop.xlane.xlu0 %1016
        %v1018 = vsel %vm990, %v967, 0.0
        %1019 = vadd.xlane.f32.xlu0 %v1018
        %v1020 = vpop.xlane.xlu0 %1019
        %v1021 = vsel %vm990, %v968, 0.0
        %1022 = vadd.xlane.f32.xlu0 %v1021
        %v1023 = vpop.xlane.xlu0 %1022
        %v1024 = vsel %vm990, %v969, 0.0
        %1025 = vadd.xlane.f32.xlu0 %v1024
        %v1026 = vpop.xlane.xlu0 %1025
        %v1027 = vsel %vm990, %v970, 0.0
        %1028 = vadd.xlane.f32.xlu0 %v1027
        %v1029 = vpop.xlane.xlu0 %1028
        %v1030 = vsel %vm990, %v971, 0.0
        %1031 = vadd.xlane.f32.xlu0 %v1030
        %v1032 = vpop.xlane.xlu0 %1031
        %v1033 = vsel %vm990, %v972, 0.0
        %1034 = vadd.xlane.f32.xlu0 %v1033
        %v1035 = vpop.xlane.xlu0 %1034
        %v1036 = vsel %vm990, %v973, 0.0
        %1037 = vadd.xlane.f32.xlu0 %v1036
        %v1038 = vpop.xlane.xlu0 %1037
        %v1039 = vsel %vm990, %v974, 0.0
        %1040 = vadd.xlane.f32.xlu0 %v1039
        %v1041 = vpop.xlane.xlu0 %1040
        %v1042 = vsel %vm990, %v975, 0.0
        %1043 = vadd.xlane.f32.xlu0 %v1042
        %v1044 = vpop.xlane.xlu0 %1043
        %v1045 = vsel %vm990, %v976, 0.0
        %1046 = vadd.xlane.f32.xlu0 %v1045
        %v1047 = vpop.xlane.xlu0 %1046
        %v1048 = vsel %vm990, %v977, 0.0
        %1049 = vadd.xlane.f32.xlu0 %v1048
        %v1050 = vpop.xlane.xlu0 %1049
        %v1051 = vsel %vm990, %v978, 0.0
        %1052 = vadd.xlane.f32.xlu0 %v1051
        %v1053 = vpop.xlane.xlu0 %1052
        %v1054 = vsel %vm990, %v979, 0.0
        %1055 = vadd.xlane.f32.xlu0 %v1054
        %v1056 = vpop.xlane.xlu0 %1055
        %v1057 = vsel %vm990, %v980, 0.0
        %1058 = vadd.xlane.f32.xlu0 %v1057
        %v1059 = vpop.xlane.xlu0 %1058
        %v1060 = vsel %vm990, %v981, 0.0
        %1061 = vadd.xlane.f32.xlu0 %v1060
        %v1062 = vpop.xlane.xlu0 %1061
        %v1063 = vsel %vm990, %v982, 0.0
        %1064 = vadd.xlane.f32.xlu0 %v1063
        %v1065 = vpop.xlane.xlu0 %1064
        %v1066 = vsel %vm990, %v983, 0.0
        %1067 = vadd.xlane.f32.xlu0 %v1066
        %v1068 = vpop.xlane.xlu0 %1067
        %v1069 = vsel %vm990, %v984, 0.0
        %1070 = vadd.xlane.f32.xlu0 %v1069
        %v1071 = vpop.xlane.xlu0 %1070
        %v1072 = vsel %vm990, %v985, 0.0
        %1073 = vadd.xlane.f32.xlu0 %v1072
        %v1074 = vpop.xlane.xlu0 %1073
        %v1075 = vsel %vm990, %v986, 0.0
        %1076 = vadd.xlane.f32.xlu0 %v1075
        %v1077 = vpop.xlane.xlu0 %1076
        %v1078 = vsel %vm990, %v987, 0.0
        %1079 = vadd.xlane.f32.xlu0 %v1078
        %v1080 = vpop.xlane.xlu0 %1079
        %v1081 = vsel %vm990, %v988, 0.0
        %1082 = vadd.xlane.f32.xlu0 %v1081
        %v1083 = vpop.xlane.xlu0 %1082
        %v1084 = vsel %vm990, %v989, 0.0
        %1085 = vadd.xlane.f32.xlu0 %v1084
        %v1086 = vpop.xlane.xlu0 %1085
        %v1087 = vmax.f32 %v993, 1e-24
        %v1088 = vmax.f32 %v996, 1e-24
        %v1089 = vmax.f32 %v999, 1e-24
        %v1090 = vmax.f32 %v1002, 1e-24
        %v1091 = vmax.f32 %v1005, 1e-24
        %v1092 = vmax.f32 %v1008, 1e-24
        %v1093 = vmax.f32 %v1011, 1e-24
        %v1094 = vmax.f32 %v1014, 1e-24
        %v1095 = vmax.f32 %v1017, 1e-24
        %v1096 = vmax.f32 %v1020, 1e-24
        %v1097 = vmax.f32 %v1023, 1e-24
        %v1098 = vmax.f32 %v1026, 1e-24
        %v1099 = vmax.f32 %v1029, 1e-24
        %v1100 = vmax.f32 %v1032, 1e-24
        %v1101 = vmax.f32 %v1035, 1e-24
        %v1102 = vmax.f32 %v1038, 1e-24
        %v1103 = vmax.f32 %v1041, 1e-24
        %v1104 = vmax.f32 %v1044, 1e-24
        %v1105 = vmax.f32 %v1047, 1e-24
        %v1106 = vmax.f32 %v1050, 1e-24
        %v1107 = vmax.f32 %v1053, 1e-24
        %v1108 = vmax.f32 %v1056, 1e-24
        %v1109 = vmax.f32 %v1059, 1e-24
        %v1110 = vmax.f32 %v1062, 1e-24
        %v1111 = vmax.f32 %v1065, 1e-24
        %v1112 = vmax.f32 %v1068, 1e-24
        %v1113 = vmax.f32 %v1071, 1e-24
        %v1114 = vmax.f32 %v1074, 1e-24
        %v1115 = vmax.f32 %v1077, 1e-24
        %v1116 = vmax.f32 %v1080, 1e-24
        %v1117 = vmax.f32 %v1083, 1e-24
        %v1118 = vmax.f32 %v1086, 1e-24
        %v1119 = vrsqrt.pop %v1087
        %v1120 = vrsqrt.pop %v1088
        %v1121 = vrsqrt.pop %v1089
        %v1122 = vrsqrt.pop %v1090
        %v1123 = vrsqrt.pop %v1091
        %v1124 = vrsqrt.pop %v1092
        %v1125 = vrsqrt.pop %v1093
        %v1126 = vrsqrt.pop %v1094
        %v1127 = vrsqrt.pop %v1095
        %v1128 = vrsqrt.pop %v1096
        %v1129 = vrsqrt.pop %v1097
        %v1130 = vrsqrt.pop %v1098
        %v1131 = vrsqrt.pop %v1099
        %v1132 = vrsqrt.pop %v1100
        %v1133 = vrsqrt.pop %v1101
        %v1134 = vrsqrt.pop %v1102
        %v1135 = vrsqrt.pop %v1103
        %v1136 = vrsqrt.pop %v1104
        %v1137 = vrsqrt.pop %v1105
        %v1138 = vrsqrt.pop %v1106
        %v1139 = vrsqrt.pop %v1107
        %v1140 = vrsqrt.pop %v1108
        %v1141 = vrsqrt.pop %v1109
        %v1142 = vrsqrt.pop %v1110
        %v1143 = vrsqrt.pop %v1111
        %v1144 = vrsqrt.pop %v1112
        %v1145 = vrsqrt.pop %v1113
        %v1146 = vrsqrt.pop %v1114
        %v1147 = vrsqrt.pop %v1115
        %v1148 = vrsqrt.pop %v1116
        %v1149 = vrsqrt.pop %v1117
        %v1150 = vrsqrt.pop %v1118
        %v1151 = vlaneseq
        %v1152 = vshrl.u32 %v1151, 7
        %v1153 = vsub.s32 0, %v1152
        %v1154 = vrot.slane %v948, %v1153
        %v1155 = vlaneseq
        %v1156 = vshrl.u32 %v1155, 7
        %v1157 = vsub.s32 0, %v1156
        %v1158 = vrot.slane %v955, %v1157
        %v1159 = vlaneseq
        %v1160 = vshrl.u32 %v1159, 7
        %v1161 = vsub.s32 0, %v1160
        %v1162 = vrot.slane %v956, %v1161
        %v1163 = vlaneseq
        %v1164 = vshrl.u32 %v1163, 7
        %v1165 = vsub.s32 0, %v1164
        %v1166 = vrot.slane %v957, %v1165
        %v1171 = vmul.f32 %v1119, %v1154
        %v1172 = vmul.f32 %v1120, %v1154
        %v1173 = vmul.f32 %v1121, %v1154
        %v1174 = vmul.f32 %v1122, %v1154
        %v1175 = vmul.f32 %v1123, %v1154
        %v1176 = vmul.f32 %v1124, %v1154
        %v1177 = vmul.f32 %v1125, %v1154
        %v1178 = vmul.f32 %v1126, %v1154
        %v1179 = vmul.f32 %v1127, %v1158
        %v1180 = vmul.f32 %v1128, %v1158
        %v1181 = vmul.f32 %v1129, %v1158
        %v1182 = vmul.f32 %v1130, %v1158
        %v1183 = vmul.f32 %v1131, %v1158
        %v1184 = vmul.f32 %v1132, %v1158
        %v1185 = vmul.f32 %v1133, %v1158
        %v1186 = vmul.f32 %v1134, %v1158
        %v1187 = vmul.f32 %v1135, %v1162
        %v1188 = vmul.f32 %v1136, %v1162
        %v1189 = vmul.f32 %v1137, %v1162
        %v1190 = vmul.f32 %v1138, %v1162
        %v1191 = vmul.f32 %v1139, %v1162
        %v1192 = vmul.f32 %v1140, %v1162
        %v1193 = vmul.f32 %v1141, %v1162
        %v1194 = vmul.f32 %v1142, %v1162
        %v1195 = vmul.f32 %v1143, %v1166
        %v1196 = vmul.f32 %v1144, %v1166
        %v1197 = vmul.f32 %v1145, %v1166
        %v1198 = vmul.f32 %v1146, %v1166
        %v1199 = vmul.f32 %v1147, %v1166
        %v1200 = vmul.f32 %v1148, %v1166
        %v1201 = vmul.f32 %v1149, %v1166
        %v1202 = vmul.f32 %v1150, %v1166
        %1204 = vset.pattern.permute.xlu0 0
        %1205 = vperm.xlu0 %1204, %v1171
        %v1206 = vpop.permute.xlu0 %1205
        %1209 = vset.pattern.permute.xlu0 0
        %1210 = vperm.xlu0 %1209, %v1172
        %v1211 = vpop.permute.xlu0 %1210
        %1214 = vset.pattern.permute.xlu0 0
        %1215 = vperm.xlu0 %1214, %v1173
        %v1216 = vpop.permute.xlu0 %1215
        %1219 = vset.pattern.permute.xlu0 0
        %1220 = vperm.xlu0 %1219, %v1174
        %v1221 = vpop.permute.xlu0 %1220
        %1224 = vset.pattern.permute.xlu0 0
        %1225 = vperm.xlu0 %1224, %v1175
        %v1226 = vpop.permute.xlu0 %1225
        %1229 = vset.pattern.permute.xlu0 0
        %1230 = vperm.xlu0 %1229, %v1176
        %v1231 = vpop.permute.xlu0 %1230
        %1234 = vset.pattern.permute.xlu0 0
        %1235 = vperm.xlu0 %1234, %v1177
        %v1236 = vpop.permute.xlu0 %1235
        %1239 = vset.pattern.permute.xlu0 0
        %1240 = vperm.xlu0 %1239, %v1178
        %v1241 = vpop.permute.xlu0 %1240
        %1244 = vset.pattern.permute.xlu0 0
        %1245 = vperm.xlu0 %1244, %v1179
        %v1246 = vpop.permute.xlu0 %1245
        %1249 = vset.pattern.permute.xlu0 0
        %1250 = vperm.xlu0 %1249, %v1180
        %v1251 = vpop.permute.xlu0 %1250
        %1254 = vset.pattern.permute.xlu0 0
        %1255 = vperm.xlu0 %1254, %v1181
        %v1256 = vpop.permute.xlu0 %1255
        %1259 = vset.pattern.permute.xlu0 0
        %1260 = vperm.xlu0 %1259, %v1182
        %v1261 = vpop.permute.xlu0 %1260
        %1264 = vset.pattern.permute.xlu0 0
        %1265 = vperm.xlu0 %1264, %v1183
        %v1266 = vpop.permute.xlu0 %1265
        %1269 = vset.pattern.permute.xlu0 0
        %1270 = vperm.xlu0 %1269, %v1184
        %v1271 = vpop.permute.xlu0 %1270
        %1274 = vset.pattern.permute.xlu0 0
        %1275 = vperm.xlu0 %1274, %v1185
        %v1276 = vpop.permute.xlu0 %1275
        %1279 = vset.pattern.permute.xlu0 0
        %1280 = vperm.xlu0 %1279, %v1186
        %v1281 = vpop.permute.xlu0 %1280
        %1284 = vset.pattern.permute.xlu0 0
        %1285 = vperm.xlu0 %1284, %v1187
        %v1286 = vpop.permute.xlu0 %1285
        %1289 = vset.pattern.permute.xlu0 0
        %1290 = vperm.xlu0 %1289, %v1188
        %v1291 = vpop.permute.xlu0 %1290
        %1294 = vset.pattern.permute.xlu0 0
        %1295 = vperm.xlu0 %1294, %v1189
        %v1296 = vpop.permute.xlu0 %1295
        %1299 = vset.pattern.permute.xlu0 0
        %1300 = vperm.xlu0 %1299, %v1190
        %v1301 = vpop.permute.xlu0 %1300
        %1304 = vset.pattern.permute.xlu0 0
        %1305 = vperm.xlu0 %1304, %v1191
        %v1306 = vpop.permute.xlu0 %1305
        %1309 = vset.pattern.permute.xlu0 0
        %1310 = vperm.xlu0 %1309, %v1192
        %v1311 = vpop.permute.xlu0 %1310
        %1314 = vset.pattern.permute.xlu0 0
        %1315 = vperm.xlu0 %1314, %v1193
        %v1316 = vpop.permute.xlu0 %1315
        %1319 = vset.pattern.permute.xlu0 0
        %1320 = vperm.xlu0 %1319, %v1194
        %v1321 = vpop.permute.xlu0 %1320
        %1324 = vset.pattern.permute.xlu0 0
        %1325 = vperm.xlu0 %1324, %v1195
        %v1326 = vpop.permute.xlu0 %1325
        %1329 = vset.pattern.permute.xlu0 0
        %1330 = vperm.xlu0 %1329, %v1196
        %v1331 = vpop.permute.xlu0 %1330
        %1334 = vset.pattern.permute.xlu0 0
        %1335 = vperm.xlu0 %1334, %v1197
        %v1336 = vpop.permute.xlu0 %1335
        %1339 = vset.pattern.permute.xlu0 0
        %1340 = vperm.xlu0 %1339, %v1198
        %v1341 = vpop.permute.xlu0 %1340
        %1344 = vset.pattern.permute.xlu0 0
        %1345 = vperm.xlu0 %1344, %v1199
        %v1346 = vpop.permute.xlu0 %1345
        %1349 = vset.pattern.permute.xlu0 0
        %1350 = vperm.xlu0 %1349, %v1200
        %v1351 = vpop.permute.xlu0 %1350
        %1354 = vset.pattern.permute.xlu0 0
        %1355 = vperm.xlu0 %1354, %v1201
        %v1356 = vpop.permute.xlu0 %1355
        %1359 = vset.pattern.permute.xlu0 0
        %1360 = vperm.xlu0 %1359, %v1202
        %v1361 = vpop.permute.xlu0 %1360
        %v1363 = vmul.f32 %v589, %v1206
        %v1364 = vmul.f32 %v593, %v1211
        %v1365 = vmul.f32 %v599, %v1216
        %v1366 = vmul.f32 %v603, %v1221
        %v1367 = vmul.f32 %v609, %v1226
        %v1368 = vmul.f32 %v613, %v1231
        %v1369 = vmul.f32 %v619, %v1236
        %v1370 = vmul.f32 %v623, %v1241
        %v1371 = vmul.f32 %v701, %v1246
        %v1372 = vmul.f32 %v703, %v1251
        %v1373 = vmul.f32 %v705, %v1256
        %v1374 = vmul.f32 %v707, %v1261
        %v1375 = vmul.f32 %v709, %v1266
        %v1376 = vmul.f32 %v711, %v1271
        %v1377 = vmul.f32 %v713, %v1276
        %v1378 = vmul.f32 %v715, %v1281
        %v1379 = vmul.f32 %v725, %v1286
        %v1380 = vmul.f32 %v727, %v1291
        %v1381 = vmul.f32 %v729, %v1296
        %v1382 = vmul.f32 %v731, %v1301
        %v1383 = vmul.f32 %v733, %v1306
        %v1384 = vmul.f32 %v735, %v1311
        %v1385 = vmul.f32 %v737, %v1316
        %v1386 = vmul.f32 %v739, %v1321
        %v1387 = vmul.f32 %v749, %v1326
        %v1388 = vmul.f32 %v751, %v1331
        %v1389 = vmul.f32 %v753, %v1336
        %v1390 = vmul.f32 %v755, %v1341
        %v1391 = vmul.f32 %v757, %v1346
        %v1392 = vmul.f32 %v759, %v1351
        %v1393 = vmul.f32 %v761, %v1356
        %v1394 = vmul.f32 %v763, %v1361
        %v1395 = vmul.f32 %v591, %v591
        %v1396 = vmul.f32 %v595, %v595
        %v1397 = vmul.f32 %v601, %v601
        %v1398 = vmul.f32 %v605, %v605
        %v1399 = vmul.f32 %v611, %v611
        %v1400 = vmul.f32 %v615, %v615
        %v1401 = vmul.f32 %v621, %v621
        %v1402 = vmul.f32 %v625, %v625
        %v1403 = vmul.f32 %v781, %v781
        %v1404 = vmul.f32 %v783, %v783
        %v1405 = vmul.f32 %v785, %v785
        %v1406 = vmul.f32 %v787, %v787
        %v1407 = vmul.f32 %v789, %v789
        %v1408 = vmul.f32 %v791, %v791
        %v1409 = vmul.f32 %v793, %v793
        %v1410 = vmul.f32 %v795, %v795
        %v1411 = vmul.f32 %v805, %v805
        %v1412 = vmul.f32 %v807, %v807
        %v1413 = vmul.f32 %v809, %v809
        %v1414 = vmul.f32 %v811, %v811
        %v1415 = vmul.f32 %v813, %v813
        %v1416 = vmul.f32 %v815, %v815
        %v1417 = vmul.f32 %v817, %v817
        %v1418 = vmul.f32 %v819, %v819
        %v1419 = vmul.f32 %v829, %v829
        %v1420 = vmul.f32 %v831, %v831
        %v1421 = vmul.f32 %v833, %v833
        %v1422 = vmul.f32 %v835, %v835
        %v1423 = vmul.f32 %v837, %v837
        %v1424 = vmul.f32 %v839, %v839
        %v1425 = vmul.f32 %v841, %v841
        %v1426 = vmul.f32 %v843, %v843
        %v1427 = vsel %vm990, %v1395, 0.0
        %1428 = vadd.xlane.f32.xlu0 %v1427
        %v1429 = vpop.xlane.xlu0 %1428
        %v1430 = vsel %vm990, %v1396, 0.0
        %1431 = vadd.xlane.f32.xlu0 %v1430
        %v1432 = vpop.xlane.xlu0 %1431
        %v1433 = vsel %vm990, %v1397, 0.0
        %1434 = vadd.xlane.f32.xlu0 %v1433
        %v1435 = vpop.xlane.xlu0 %1434
        %v1436 = vsel %vm990, %v1398, 0.0
        %1437 = vadd.xlane.f32.xlu0 %v1436
        %v1438 = vpop.xlane.xlu0 %1437
        %v1439 = vsel %vm990, %v1399, 0.0
        %1440 = vadd.xlane.f32.xlu0 %v1439
        %v1441 = vpop.xlane.xlu0 %1440
        %v1442 = vsel %vm990, %v1400, 0.0
        %1443 = vadd.xlane.f32.xlu0 %v1442
        %v1444 = vpop.xlane.xlu0 %1443
        %v1445 = vsel %vm990, %v1401, 0.0
        %1446 = vadd.xlane.f32.xlu0 %v1445
        %v1447 = vpop.xlane.xlu0 %1446
        %v1448 = vsel %vm990, %v1402, 0.0
        %1449 = vadd.xlane.f32.xlu0 %v1448
        %v1450 = vpop.xlane.xlu0 %1449
        %v1451 = vsel %vm990, %v1403, 0.0
        %1452 = vadd.xlane.f32.xlu0 %v1451
        %v1453 = vpop.xlane.xlu0 %1452
        %v1454 = vsel %vm990, %v1404, 0.0
        %1455 = vadd.xlane.f32.xlu0 %v1454
        %v1456 = vpop.xlane.xlu0 %1455
        %v1457 = vsel %vm990, %v1405, 0.0
        %1458 = vadd.xlane.f32.xlu0 %v1457
        %v1459 = vpop.xlane.xlu0 %1458
        %v1460 = vsel %vm990, %v1406, 0.0
        %1461 = vadd.xlane.f32.xlu0 %v1460
        %v1462 = vpop.xlane.xlu0 %1461
        %v1463 = vsel %vm990, %v1407, 0.0
        %1464 = vadd.xlane.f32.xlu0 %v1463
        %v1465 = vpop.xlane.xlu0 %1464
        %v1466 = vsel %vm990, %v1408, 0.0
        %1467 = vadd.xlane.f32.xlu0 %v1466
        %v1468 = vpop.xlane.xlu0 %1467
        %v1469 = vsel %vm990, %v1409, 0.0
        %1470 = vadd.xlane.f32.xlu0 %v1469
        %v1471 = vpop.xlane.xlu0 %1470
        %v1472 = vsel %vm990, %v1410, 0.0
        %1473 = vadd.xlane.f32.xlu0 %v1472
        %v1474 = vpop.xlane.xlu0 %1473
        %v1475 = vsel %vm990, %v1411, 0.0
        %1476 = vadd.xlane.f32.xlu0 %v1475
        %v1477 = vpop.xlane.xlu0 %1476
        %v1478 = vsel %vm990, %v1412, 0.0
        %1479 = vadd.xlane.f32.xlu0 %v1478
        %v1480 = vpop.xlane.xlu0 %1479
        %v1481 = vsel %vm990, %v1413, 0.0
        %1482 = vadd.xlane.f32.xlu0 %v1481
        %v1483 = vpop.xlane.xlu0 %1482
        %v1484 = vsel %vm990, %v1414, 0.0
        %1485 = vadd.xlane.f32.xlu0 %v1484
        %v1486 = vpop.xlane.xlu0 %1485
        %v1487 = vsel %vm990, %v1415, 0.0
        %1488 = vadd.xlane.f32.xlu0 %v1487
        %v1489 = vpop.xlane.xlu0 %1488
        %v1490 = vsel %vm990, %v1416, 0.0
        %1491 = vadd.xlane.f32.xlu0 %v1490
        %v1492 = vpop.xlane.xlu0 %1491
        %v1493 = vsel %vm990, %v1417, 0.0
        %1494 = vadd.xlane.f32.xlu0 %v1493
        %v1495 = vpop.xlane.xlu0 %1494
        %v1496 = vsel %vm990, %v1418, 0.0
        %1497 = vadd.xlane.f32.xlu0 %v1496
        %v1498 = vpop.xlane.xlu0 %1497
        %v1499 = vsel %vm990, %v1419, 0.0
        %1500 = vadd.xlane.f32.xlu0 %v1499
        %v1501 = vpop.xlane.xlu0 %1500
        %v1502 = vsel %vm990, %v1420, 0.0
        %1503 = vadd.xlane.f32.xlu0 %v1502
        %v1504 = vpop.xlane.xlu0 %1503
        %v1505 = vsel %vm990, %v1421, 0.0
        %1506 = vadd.xlane.f32.xlu0 %v1505
        %v1507 = vpop.xlane.xlu0 %1506
        %v1508 = vsel %vm990, %v1422, 0.0
        %1509 = vadd.xlane.f32.xlu0 %v1508
        %v1510 = vpop.xlane.xlu0 %1509
        %v1511 = vsel %vm990, %v1423, 0.0
        %1512 = vadd.xlane.f32.xlu0 %v1511
        %v1513 = vpop.xlane.xlu0 %1512
        %v1514 = vsel %vm990, %v1424, 0.0
        %1515 = vadd.xlane.f32.xlu0 %v1514
        %v1516 = vpop.xlane.xlu0 %1515
        %v1517 = vsel %vm990, %v1425, 0.0
        %1518 = vadd.xlane.f32.xlu0 %v1517
        %v1519 = vpop.xlane.xlu0 %1518
        %v1520 = vsel %vm990, %v1426, 0.0
        %1521 = vadd.xlane.f32.xlu0 %v1520
        %v1522 = vpop.xlane.xlu0 %1521
        %v1523 = vmax.f32 %v1429, 1e-24
        %v1524 = vmax.f32 %v1432, 1e-24
        %v1525 = vmax.f32 %v1435, 1e-24
        %v1526 = vmax.f32 %v1438, 1e-24
        %v1527 = vmax.f32 %v1441, 1e-24
        %v1528 = vmax.f32 %v1444, 1e-24
        %v1529 = vmax.f32 %v1447, 1e-24
        %v1530 = vmax.f32 %v1450, 1e-24
        %v1531 = vmax.f32 %v1453, 1e-24
        %v1532 = vmax.f32 %v1456, 1e-24
        %v1533 = vmax.f32 %v1459, 1e-24
        %v1534 = vmax.f32 %v1462, 1e-24
        %v1535 = vmax.f32 %v1465, 1e-24
        %v1536 = vmax.f32 %v1468, 1e-24
        %v1537 = vmax.f32 %v1471, 1e-24
        %v1538 = vmax.f32 %v1474, 1e-24
        %v1539 = vmax.f32 %v1477, 1e-24
        %v1540 = vmax.f32 %v1480, 1e-24
        %v1541 = vmax.f32 %v1483, 1e-24
        %v1542 = vmax.f32 %v1486, 1e-24
        %v1543 = vmax.f32 %v1489, 1e-24
        %v1544 = vmax.f32 %v1492, 1e-24
        %v1545 = vmax.f32 %v1495, 1e-24
        %v1546 = vmax.f32 %v1498, 1e-24
        %v1547 = vmax.f32 %v1501, 1e-24
        %v1548 = vmax.f32 %v1504, 1e-24
        %v1549 = vmax.f32 %v1507, 1e-24
        %v1550 = vmax.f32 %v1510, 1e-24
        %v1551 = vmax.f32 %v1513, 1e-24
        %v1552 = vmax.f32 %v1516, 1e-24
        %v1553 = vmax.f32 %v1519, 1e-24
        %v1554 = vmax.f32 %v1522, 1e-24
        %v1555 = vrsqrt.pop %v1523
        %v1556 = vrsqrt.pop %v1524
        %v1557 = vrsqrt.pop %v1525
        %v1558 = vrsqrt.pop %v1526
        %v1559 = vrsqrt.pop %v1527
        %v1560 = vrsqrt.pop %v1528
        %v1561 = vrsqrt.pop %v1529
        %v1562 = vrsqrt.pop %v1530
        %v1563 = vrsqrt.pop %v1531
        %v1564 = vrsqrt.pop %v1532
        %v1565 = vrsqrt.pop %v1533
        %v1566 = vrsqrt.pop %v1534
        %v1567 = vrsqrt.pop %v1535
        %v1568 = vrsqrt.pop %v1536
        %v1569 = vrsqrt.pop %v1537
        %v1570 = vrsqrt.pop %v1538
        %v1571 = vrsqrt.pop %v1539
        %v1572 = vrsqrt.pop %v1540
        %v1573 = vrsqrt.pop %v1541
        %v1574 = vrsqrt.pop %v1542
        %v1575 = vrsqrt.pop %v1543
        %v1576 = vrsqrt.pop %v1544
        %v1577 = vrsqrt.pop %v1545
        %v1578 = vrsqrt.pop %v1546
        %v1579 = vrsqrt.pop %v1547
        %v1580 = vrsqrt.pop %v1548
        %v1581 = vrsqrt.pop %v1549
        %v1582 = vrsqrt.pop %v1550
        %v1583 = vrsqrt.pop %v1551
        %v1584 = vrsqrt.pop %v1552
        %v1585 = vrsqrt.pop %v1553
        %v1586 = vrsqrt.pop %v1554
        %v1587 = vmul.f32 %v591, %v1555
        %v1588 = vmul.f32 %v595, %v1556
        %v1589 = vmul.f32 %v601, %v1557
        %v1590 = vmul.f32 %v605, %v1558
        %v1591 = vmul.f32 %v611, %v1559
        %v1592 = vmul.f32 %v615, %v1560
        %v1593 = vmul.f32 %v621, %v1561
        %v1594 = vmul.f32 %v625, %v1562
        %v1595 = vmul.f32 %v781, %v1563
        %v1596 = vmul.f32 %v783, %v1564
        %v1597 = vmul.f32 %v785, %v1565
        %v1598 = vmul.f32 %v787, %v1566
        %v1599 = vmul.f32 %v789, %v1567
        %v1600 = vmul.f32 %v791, %v1568
        %v1601 = vmul.f32 %v793, %v1569
        %v1602 = vmul.f32 %v795, %v1570
        %v1603 = vmul.f32 %v805, %v1571
        %v1604 = vmul.f32 %v807, %v1572
        %v1605 = vmul.f32 %v809, %v1573
        %v1606 = vmul.f32 %v811, %v1574
        %v1607 = vmul.f32 %v813, %v1575
        %v1608 = vmul.f32 %v815, %v1576
        %v1609 = vmul.f32 %v817, %v1577
        %v1610 = vmul.f32 %v819, %v1578
        %v1611 = vmul.f32 %v829, %v1579
        %v1612 = vmul.f32 %v831, %v1580
        %v1613 = vmul.f32 %v833, %v1581
        %v1614 = vmul.f32 %v835, %v1582
        %v1615 = vmul.f32 %v837, %v1583
        %v1616 = vmul.f32 %v839, %v1584
        %v1617 = vmul.f32 %v841, %v1585
        %v1618 = vmul.f32 %v843, %v1586
        %v1620 = vsel %vm990, %v1363, 0
        %v1623 = vsel %vm990, %v1364, 0
        %v1626 = vsel %vm990, %v1587, 0
        %v1629 = vsel %vm990, %v1588, 0
        %1631 = vmatprep.subr.mxu0 0.0
        %1632 = vmatpush1.xpose.msra.mxu0 0.0
        %1633 = vmatprep.subr.mxu0 0.0
        %1634 = vmatpush1.xpose.msra.mxu0 0.0
        %1635 = vmatprep.subr.mxu0 0.0
        %1636 = vmatpush1.xpose.msra.mxu0 0.0
        %1637 = vmatprep.subr.mxu0 0.0
        %1638 = vmatpush1.xpose.msra.mxu0 0.0
        %1639 = vmatprep.subr.mxu0 0.0
        %1640 = vmatpush1.xpose.msra.mxu0 0.0
        %1641 = vmatprep.subr.mxu0 0.0
        %1642 = vmatpush1.xpose.msra.mxu0 0.0
        %1643 = vmatprep.subr.mxu0 0.0
        %1644 = vmatpush1.xpose.msra.mxu0 0.0
        %1645 = vmatprep.subr.mxu0 0.0
        %1646 = vmatpush1.xpose.msra.mxu0 0.0
        %1647 = vmatprep.subr.mxu0 0.0
        %1648 = vmatpush1.xpose.msra.mxu0 0.0
        %1649 = vmatprep.subr.mxu0 0.0
        %1650 = vmatpush1.xpose.msra.mxu0 0.0
        %1651 = vmatprep.subr.mxu0 0.0
        %1652 = vmatpush1.xpose.msra.mxu0 0.0
        %1653 = vmatprep.subr.mxu0 0.0
        %1654 = vmatpush1.xpose.msra.mxu0 0.0
        %1655 = vmatprep.subr.mxu0 0.0
        %1656 = vmatpush1.xpose.msra.mxu0 0.0
        %1657 = vmatprep.subr.mxu0 0.0
        %1658 = vmatpush1.xpose.msra.mxu0 0.0
        %1659 = vmatprep.subr.mxu0 0.0
        %1660 = vmatpush1.xpose.msra.mxu0 %v1629
        %1661 = vmatprep.subr.mxu0 0.0
        %1662 = vmatpush1.xpose.msra.mxu0 %v1626
        %1663 = vmatprep.subr.mxu0 0.0
        %1664 = vmatpush2.xpose.msra.mxu0 0.0
        %1665 = vmatprep.subr.mxu0 0.0
        %1666 = vmatpush2.xpose.msra.mxu0 0.0
        %1667 = vmatprep.subr.mxu0 0.0
        %1668 = vmatpush2.xpose.msra.mxu0 0.0
        %1669 = vmatprep.subr.mxu0 0.0
        %1670 = vmatpush2.xpose.msra.mxu0 0.0
        %1671 = vmatprep.subr.mxu0 0.0
        %1672 = vmatpush2.xpose.msra.mxu0 0.0
        %1673 = vmatprep.subr.mxu0 0.0
        %1674 = vmatpush2.xpose.msra.mxu0 0.0
        %1675 = vmatprep.subr.mxu0 0.0
        %1676 = vmatpush2.xpose.msra.mxu0 0.0
        %1677 = vmatprep.subr.mxu0 0.0
        %1678 = vmatpush2.xpose.msra.mxu0 0.0
        %1679 = vmatprep.subr.mxu0 0.0
        %1680 = vmatpush2.xpose.msra.mxu0 0.0
        %1681 = vmatprep.subr.mxu0 0.0
        %1682 = vmatpush2.xpose.msra.mxu0 0.0
        %1683 = vmatprep.subr.mxu0 0.0
        %1684 = vmatpush2.xpose.msra.mxu0 0.0
        %1685 = vmatprep.subr.mxu0 0.0
        %1686 = vmatpush2.xpose.msra.mxu0 0.0
        %1687 = vmatprep.subr.mxu0 0.0
        %1688 = vmatpush2.xpose.msra.mxu0 0.0
        %1689 = vmatprep.subr.mxu0 0.0
        %1690 = vmatpush2.xpose.msra.mxu0 0.0
        %1691 = vmatprep.subr.mxu0 0.0
        %1692 = vmatpush2.xpose.msra.mxu0 0.0
        %1693 = vmatprep.subr.mxu0 0.0
        %1694 = vmatpush2.xpose.msra.mxu0 0.0
        %1695 = vmatprep.mubr.f32.mxu0 0.0
        %1696 = vmatmul.mubr.f32.gmra.mxu0 %v1620
        %v1697 = vpop.f32.mrf.mxu0
        %v1698 = vadd.f32 0.0, %v1697
        %v1699 = vpop.f32.mrf.mxu0
        %1700 = vmatprep.mubr.f32.mxu0 0.0
        %1701 = vmatmul.mubr.f32.gmra.mxu0 %v1623
        %v1702 = vpop.f32.mrf.mxu0
        %v1703 = vadd.f32 0.0, %v1702
        %v1704 = vpop.f32.mrf.mxu0
        %1705 = vdwg.mxu0
        %v1707 = vsel %vm990, %v1365, 0
        %v1710 = vsel %vm990, %v1366, 0
        %v1713 = vsel %vm990, %v1589, 0
        %v1716 = vsel %vm990, %v1590, 0
        %1718 = vmatprep.subr.mxu0 0.0
        %1719 = vmatpush1.xpose.msra.mxu0 0.0
        %1720 = vmatprep.subr.mxu0 0.0
        %1721 = vmatpush1.xpose.msra.mxu0 0.0
        %1722 = vmatprep.subr.mxu0 0.0
        %1723 = vmatpush1.xpose.msra.mxu0 0.0
        %1724 = vmatprep.subr.mxu0 0.0
        %1725 = vmatpush1.xpose.msra.mxu0 0.0
        %1726 = vmatprep.subr.mxu0 0.0
        %1727 = vmatpush1.xpose.msra.mxu0 0.0
        %1728 = vmatprep.subr.mxu0 0.0
        %1729 = vmatpush1.xpose.msra.mxu0 0.0
        %1730 = vmatprep.subr.mxu0 0.0
        %1731 = vmatpush1.xpose.msra.mxu0 0.0
        %1732 = vmatprep.subr.mxu0 0.0
        %1733 = vmatpush1.xpose.msra.mxu0 0.0
        %1734 = vmatprep.subr.mxu0 0.0
        %1735 = vmatpush1.xpose.msra.mxu0 0.0
        %1736 = vmatprep.subr.mxu0 0.0
        %1737 = vmatpush1.xpose.msra.mxu0 0.0
        %1738 = vmatprep.subr.mxu0 0.0
        %1739 = vmatpush1.xpose.msra.mxu0 0.0
        %1740 = vmatprep.subr.mxu0 0.0
        %1741 = vmatpush1.xpose.msra.mxu0 0.0
        %1742 = vmatprep.subr.mxu0 0.0
        %1743 = vmatpush1.xpose.msra.mxu0 0.0
        %1744 = vmatprep.subr.mxu0 0.0
        %1745 = vmatpush1.xpose.msra.mxu0 0.0
        %1746 = vmatprep.subr.mxu0 0.0
        %1747 = vmatpush1.xpose.msra.mxu0 %v1716
        %1748 = vmatprep.subr.mxu0 0.0
        %1749 = vmatpush1.xpose.msra.mxu0 %v1713
        %1750 = vmatprep.subr.mxu0 0.0
        %1751 = vmatpush2.xpose.msra.mxu0 0.0
        %1752 = vmatprep.subr.mxu0 0.0
        %1753 = vmatpush2.xpose.msra.mxu0 0.0
        %1754 = vmatprep.subr.mxu0 0.0
        %1755 = vmatpush2.xpose.msra.mxu0 0.0
        %1756 = vmatprep.subr.mxu0 0.0
        %1757 = vmatpush2.xpose.msra.mxu0 0.0
        %1758 = vmatprep.subr.mxu0 0.0
        %1759 = vmatpush2.xpose.msra.mxu0 0.0
        %1760 = vmatprep.subr.mxu0 0.0
        %1761 = vmatpush2.xpose.msra.mxu0 0.0
        %1762 = vmatprep.subr.mxu0 0.0
        %1763 = vmatpush2.xpose.msra.mxu0 0.0
        %1764 = vmatprep.subr.mxu0 0.0
        %1765 = vmatpush2.xpose.msra.mxu0 0.0
        %1766 = vmatprep.subr.mxu0 0.0
        %1767 = vmatpush2.xpose.msra.mxu0 0.0
        %1768 = vmatprep.subr.mxu0 0.0
        %1769 = vmatpush2.xpose.msra.mxu0 0.0
        %1770 = vmatprep.subr.mxu0 0.0
        %1771 = vmatpush2.xpose.msra.mxu0 0.0
        %1772 = vmatprep.subr.mxu0 0.0
        %1773 = vmatpush2.xpose.msra.mxu0 0.0
        %1774 = vmatprep.subr.mxu0 0.0
        %1775 = vmatpush2.xpose.msra.mxu0 0.0
        %1776 = vmatprep.subr.mxu0 0.0
        %1777 = vmatpush2.xpose.msra.mxu0 0.0
        %1778 = vmatprep.subr.mxu0 0.0
        %1779 = vmatpush2.xpose.msra.mxu0 0.0
        %1780 = vmatprep.subr.mxu0 0.0
        %1781 = vmatpush2.xpose.msra.mxu0 0.0
        %1782 = vmatprep.mubr.f32.mxu0 0.0
        %1783 = vmatmul.mubr.f32.gmra.mxu0 %v1707
        %v1784 = vpop.f32.mrf.mxu0
        %v1785 = vadd.f32 0.0, %v1784
        %v1786 = vpop.f32.mrf.mxu0
        %1787 = vmatprep.mubr.f32.mxu0 0.0
        %1788 = vmatmul.mubr.f32.gmra.mxu0 %v1710
        %v1789 = vpop.f32.mrf.mxu0
        %v1790 = vadd.f32 0.0, %v1789
        %v1791 = vpop.f32.mrf.mxu0
        %1792 = vdwg.mxu0
        %v1794 = vsel %vm990, %v1367, 0
        %v1797 = vsel %vm990, %v1368, 0
        %v1800 = vsel %vm990, %v1591, 0
        %v1803 = vsel %vm990, %v1592, 0
        %1805 = vmatprep.subr.mxu0 0.0
        %1806 = vmatpush1.xpose.msra.mxu0 0.0
        %1807 = vmatprep.subr.mxu0 0.0
        %1808 = vmatpush1.xpose.msra.mxu0 0.0
        %1809 = vmatprep.subr.mxu0 0.0
        %1810 = vmatpush1.xpose.msra.mxu0 0.0
        %1811 = vmatprep.subr.mxu0 0.0
        %1812 = vmatpush1.xpose.msra.mxu0 0.0
        %1813 = vmatprep.subr.mxu0 0.0
        %1814 = vmatpush1.xpose.msra.mxu0 0.0
        %1815 = vmatprep.subr.mxu0 0.0
        %1816 = vmatpush1.xpose.msra.mxu0 0.0
        %1817 = vmatprep.subr.mxu0 0.0
        %1818 = vmatpush1.xpose.msra.mxu0 0.0
        %1819 = vmatprep.subr.mxu0 0.0
        %1820 = vmatpush1.xpose.msra.mxu0 0.0
        %1821 = vmatprep.subr.mxu0 0.0
        %1822 = vmatpush1.xpose.msra.mxu0 0.0
        %1823 = vmatprep.subr.mxu0 0.0
        %1824 = vmatpush1.xpose.msra.mxu0 0.0
        %1825 = vmatprep.subr.mxu0 0.0
        %1826 = vmatpush1.xpose.msra.mxu0 0.0
        %1827 = vmatprep.subr.mxu0 0.0
        %1828 = vmatpush1.xpose.msra.mxu0 0.0
        %1829 = vmatprep.subr.mxu0 0.0
        %1830 = vmatpush1.xpose.msra.mxu0 0.0
        %1831 = vmatprep.subr.mxu0 0.0
        %1832 = vmatpush1.xpose.msra.mxu0 0.0
        %1833 = vmatprep.subr.mxu0 0.0
        %1834 = vmatpush1.xpose.msra.mxu0 %v1803
        %1835 = vmatprep.subr.mxu0 0.0
        %1836 = vmatpush1.xpose.msra.mxu0 %v1800
        %1837 = vmatprep.subr.mxu0 0.0
        %1838 = vmatpush2.xpose.msra.mxu0 0.0
        %1839 = vmatprep.subr.mxu0 0.0
        %1840 = vmatpush2.xpose.msra.mxu0 0.0
        %1841 = vmatprep.subr.mxu0 0.0
        %1842 = vmatpush2.xpose.msra.mxu0 0.0
        %1843 = vmatprep.subr.mxu0 0.0
        %1844 = vmatpush2.xpose.msra.mxu0 0.0
        %1845 = vmatprep.subr.mxu0 0.0
        %1846 = vmatpush2.xpose.msra.mxu0 0.0
        %1847 = vmatprep.subr.mxu0 0.0
        %1848 = vmatpush2.xpose.msra.mxu0 0.0
        %1849 = vmatprep.subr.mxu0 0.0
        %1850 = vmatpush2.xpose.msra.mxu0 0.0
        %1851 = vmatprep.subr.mxu0 0.0
        %1852 = vmatpush2.xpose.msra.mxu0 0.0
        %1853 = vmatprep.subr.mxu0 0.0
        %1854 = vmatpush2.xpose.msra.mxu0 0.0
        %1855 = vmatprep.subr.mxu0 0.0
        %1856 = vmatpush2.xpose.msra.mxu0 0.0
        %1857 = vmatprep.subr.mxu0 0.0
        %1858 = vmatpush2.xpose.msra.mxu0 0.0
        %1859 = vmatprep.subr.mxu0 0.0
        %1860 = vmatpush2.xpose.msra.mxu0 0.0
        %1861 = vmatprep.subr.mxu0 0.0
        %1862 = vmatpush2.xpose.msra.mxu0 0.0
        %1863 = vmatprep.subr.mxu0 0.0
        %1864 = vmatpush2.xpose.msra.mxu0 0.0
        %1865 = vmatprep.subr.mxu0 0.0
        %1866 = vmatpush2.xpose.msra.mxu0 0.0
        %1867 = vmatprep.subr.mxu0 0.0
        %1868 = vmatpush2.xpose.msra.mxu0 0.0
        %1869 = vmatprep.mubr.f32.mxu0 0.0
        %1870 = vmatmul.mubr.f32.gmra.mxu0 %v1794
        %v1871 = vpop.f32.mrf.mxu0
        %v1872 = vadd.f32 0.0, %v1871
        %v1873 = vpop.f32.mrf.mxu0
        %1874 = vmatprep.mubr.f32.mxu0 0.0
        %1875 = vmatmul.mubr.f32.gmra.mxu0 %v1797
        %v1876 = vpop.f32.mrf.mxu0
        %v1877 = vadd.f32 0.0, %v1876
        %v1878 = vpop.f32.mrf.mxu0
        %1879 = vdwg.mxu0
        %v1881 = vsel %vm990, %v1369, 0
        %v1884 = vsel %vm990, %v1370, 0
        %v1887 = vsel %vm990, %v1593, 0
        %v1890 = vsel %vm990, %v1594, 0
        %1892 = vmatprep.subr.mxu0 0.0
        %1893 = vmatpush1.xpose.msra.mxu0 0.0
        %1894 = vmatprep.subr.mxu0 0.0
        %1895 = vmatpush1.xpose.msra.mxu0 0.0
        %1896 = vmatprep.subr.mxu0 0.0
        %1897 = vmatpush1.xpose.msra.mxu0 0.0
        %1898 = vmatprep.subr.mxu0 0.0
        %1899 = vmatpush1.xpose.msra.mxu0 0.0
        %1900 = vmatprep.subr.mxu0 0.0
        %1901 = vmatpush1.xpose.msra.mxu0 0.0
        %1902 = vmatprep.subr.mxu0 0.0
        %1903 = vmatpush1.xpose.msra.mxu0 0.0
        %1904 = vmatprep.subr.mxu0 0.0
        %1905 = vmatpush1.xpose.msra.mxu0 0.0
        %1906 = vmatprep.subr.mxu0 0.0
        %1907 = vmatpush1.xpose.msra.mxu0 0.0
        %1908 = vmatprep.subr.mxu0 0.0
        %1909 = vmatpush1.xpose.msra.mxu0 0.0
        %1910 = vmatprep.subr.mxu0 0.0
        %1911 = vmatpush1.xpose.msra.mxu0 0.0
        %1912 = vmatprep.subr.mxu0 0.0
        %1913 = vmatpush1.xpose.msra.mxu0 0.0
        %1914 = vmatprep.subr.mxu0 0.0
        %1915 = vmatpush1.xpose.msra.mxu0 0.0
        %1916 = vmatprep.subr.mxu0 0.0
        %1917 = vmatpush1.xpose.msra.mxu0 0.0
        %1918 = vmatprep.subr.mxu0 0.0
        %1919 = vmatpush1.xpose.msra.mxu0 0.0
        %1920 = vmatprep.subr.mxu0 0.0
        %1921 = vmatpush1.xpose.msra.mxu0 %v1890
        %1922 = vmatprep.subr.mxu0 0.0
        %1923 = vmatpush1.xpose.msra.mxu0 %v1887
        %1924 = vmatprep.subr.mxu0 0.0
        %1925 = vmatpush2.xpose.msra.mxu0 0.0
        %1926 = vmatprep.subr.mxu0 0.0
        %1927 = vmatpush2.xpose.msra.mxu0 0.0
        %1928 = vmatprep.subr.mxu0 0.0
        %1929 = vmatpush2.xpose.msra.mxu0 0.0
        %1930 = vmatprep.subr.mxu0 0.0
        %1931 = vmatpush2.xpose.msra.mxu0 0.0
        %1932 = vmatprep.subr.mxu0 0.0
        %1933 = vmatpush2.xpose.msra.mxu0 0.0
        %1934 = vmatprep.subr.mxu0 0.0
        %1935 = vmatpush2.xpose.msra.mxu0 0.0
        %1936 = vmatprep.subr.mxu0 0.0
        %1937 = vmatpush2.xpose.msra.mxu0 0.0
        %1938 = vmatprep.subr.mxu0 0.0
        %1939 = vmatpush2.xpose.msra.mxu0 0.0
        %1940 = vmatprep.subr.mxu0 0.0
        %1941 = vmatpush2.xpose.msra.mxu0 0.0
        %1942 = vmatprep.subr.mxu0 0.0
        %1943 = vmatpush2.xpose.msra.mxu0 0.0
        %1944 = vmatprep.subr.mxu0 0.0
        %1945 = vmatpush2.xpose.msra.mxu0 0.0
        %1946 = vmatprep.subr.mxu0 0.0
        %1947 = vmatpush2.xpose.msra.mxu0 0.0
        %1948 = vmatprep.subr.mxu0 0.0
        %1949 = vmatpush2.xpose.msra.mxu0 0.0
        %1950 = vmatprep.subr.mxu0 0.0
        %1951 = vmatpush2.xpose.msra.mxu0 0.0
        %1952 = vmatprep.subr.mxu0 0.0
        %1953 = vmatpush2.xpose.msra.mxu0 0.0
        %1954 = vmatprep.subr.mxu0 0.0
        %1955 = vmatpush2.xpose.msra.mxu0 0.0
        %1956 = vmatprep.mubr.f32.mxu0 0.0
        %1957 = vmatmul.mubr.f32.gmra.mxu0 %v1881
        %v1958 = vpop.f32.mrf.mxu0
        %v1959 = vadd.f32 0.0, %v1958
        %v1960 = vpop.f32.mrf.mxu0
        %1961 = vmatprep.mubr.f32.mxu0 0.0
        %1962 = vmatmul.mubr.f32.gmra.mxu0 %v1884
        %v1963 = vpop.f32.mrf.mxu0
        %v1964 = vadd.f32 0.0, %v1963
        %v1965 = vpop.f32.mrf.mxu0
        %1966 = vdwg.mxu0
        %v1968 = vsel %vm990, %v1371, 0
        %v1971 = vsel %vm990, %v1372, 0
        %v1974 = vsel %vm990, %v1595, 0
        %v1977 = vsel %vm990, %v1596, 0
        %1979 = vmatprep.subr.mxu0 0.0
        %1980 = vmatpush1.xpose.msra.mxu0 0.0
        %1981 = vmatprep.subr.mxu0 0.0
        %1982 = vmatpush1.xpose.msra.mxu0 0.0
        %1983 = vmatprep.subr.mxu0 0.0
        %1984 = vmatpush1.xpose.msra.mxu0 0.0
        %1985 = vmatprep.subr.mxu0 0.0
        %1986 = vmatpush1.xpose.msra.mxu0 0.0
        %1987 = vmatprep.subr.mxu0 0.0
        %1988 = vmatpush1.xpose.msra.mxu0 0.0
        %1989 = vmatprep.subr.mxu0 0.0
        %1990 = vmatpush1.xpose.msra.mxu0 0.0
        %1991 = vmatprep.subr.mxu0 0.0
        %1992 = vmatpush1.xpose.msra.mxu0 0.0
        %1993 = vmatprep.subr.mxu0 0.0
        %1994 = vmatpush1.xpose.msra.mxu0 0.0
        %1995 = vmatprep.subr.mxu0 0.0
        %1996 = vmatpush1.xpose.msra.mxu0 0.0
        %1997 = vmatprep.subr.mxu0 0.0
        %1998 = vmatpush1.xpose.msra.mxu0 0.0
        %1999 = vmatprep.subr.mxu0 0.0
        %2000 = vmatpush1.xpose.msra.mxu0 0.0
        %2001 = vmatprep.subr.mxu0 0.0
        %2002 = vmatpush1.xpose.msra.mxu0 0.0
        %2003 = vmatprep.subr.mxu0 0.0
        %2004 = vmatpush1.xpose.msra.mxu0 0.0
        %2005 = vmatprep.subr.mxu0 0.0
        %2006 = vmatpush1.xpose.msra.mxu0 0.0
        %2007 = vmatprep.subr.mxu0 0.0
        %2008 = vmatpush1.xpose.msra.mxu0 %v1977
        %2009 = vmatprep.subr.mxu0 0.0
        %2010 = vmatpush1.xpose.msra.mxu0 %v1974
        %2011 = vmatprep.subr.mxu0 0.0
        %2012 = vmatpush2.xpose.msra.mxu0 0.0
        %2013 = vmatprep.subr.mxu0 0.0
        %2014 = vmatpush2.xpose.msra.mxu0 0.0
        %2015 = vmatprep.subr.mxu0 0.0
        %2016 = vmatpush2.xpose.msra.mxu0 0.0
        %2017 = vmatprep.subr.mxu0 0.0
        %2018 = vmatpush2.xpose.msra.mxu0 0.0
        %2019 = vmatprep.subr.mxu0 0.0
        %2020 = vmatpush2.xpose.msra.mxu0 0.0
        %2021 = vmatprep.subr.mxu0 0.0
        %2022 = vmatpush2.xpose.msra.mxu0 0.0
        %2023 = vmatprep.subr.mxu0 0.0
        %2024 = vmatpush2.xpose.msra.mxu0 0.0
        %2025 = vmatprep.subr.mxu0 0.0
        %2026 = vmatpush2.xpose.msra.mxu0 0.0
        %2027 = vmatprep.subr.mxu0 0.0
        %2028 = vmatpush2.xpose.msra.mxu0 0.0
        %2029 = vmatprep.subr.mxu0 0.0
        %2030 = vmatpush2.xpose.msra.mxu0 0.0
        %2031 = vmatprep.subr.mxu0 0.0
        %2032 = vmatpush2.xpose.msra.mxu0 0.0
        %2033 = vmatprep.subr.mxu0 0.0
        %2034 = vmatpush2.xpose.msra.mxu0 0.0
        %2035 = vmatprep.subr.mxu0 0.0
        %2036 = vmatpush2.xpose.msra.mxu0 0.0
        %2037 = vmatprep.subr.mxu0 0.0
        %2038 = vmatpush2.xpose.msra.mxu0 0.0
        %2039 = vmatprep.subr.mxu0 0.0
        %2040 = vmatpush2.xpose.msra.mxu0 0.0
        %2041 = vmatprep.subr.mxu0 0.0
        %2042 = vmatpush2.xpose.msra.mxu0 0.0
        %2043 = vmatprep.mubr.f32.mxu0 0.0
        %2044 = vmatmul.mubr.f32.gmra.mxu0 %v1968
        %v2045 = vpop.f32.mrf.mxu0
        %v2046 = vadd.f32 0.0, %v2045
        %v2047 = vpop.f32.mrf.mxu0
        %2048 = vmatprep.mubr.f32.mxu0 0.0
        %2049 = vmatmul.mubr.f32.gmra.mxu0 %v1971
        %v2050 = vpop.f32.mrf.mxu0
        %v2051 = vadd.f32 0.0, %v2050
        %v2052 = vpop.f32.mrf.mxu0
        %2053 = vdwg.mxu0
        %v2055 = vsel %vm990, %v1373, 0
        %v2058 = vsel %vm990, %v1374, 0
        %v2061 = vsel %vm990, %v1597, 0
        %v2064 = vsel %vm990, %v1598, 0
        %2066 = vmatprep.subr.mxu0 0.0
        %2067 = vmatpush1.xpose.msra.mxu0 0.0
        %2068 = vmatprep.subr.mxu0 0.0
        %2069 = vmatpush1.xpose.msra.mxu0 0.0
        %2070 = vmatprep.subr.mxu0 0.0
        %2071 = vmatpush1.xpose.msra.mxu0 0.0
        %2072 = vmatprep.subr.mxu0 0.0
        %2073 = vmatpush1.xpose.msra.mxu0 0.0
        %2074 = vmatprep.subr.mxu0 0.0
        %2075 = vmatpush1.xpose.msra.mxu0 0.0
        %2076 = vmatprep.subr.mxu0 0.0
        %2077 = vmatpush1.xpose.msra.mxu0 0.0
        %2078 = vmatprep.subr.mxu0 0.0
        %2079 = vmatpush1.xpose.msra.mxu0 0.0
        %2080 = vmatprep.subr.mxu0 0.0
        %2081 = vmatpush1.xpose.msra.mxu0 0.0
        %2082 = vmatprep.subr.mxu0 0.0
        %2083 = vmatpush1.xpose.msra.mxu0 0.0
        %2084 = vmatprep.subr.mxu0 0.0
        %2085 = vmatpush1.xpose.msra.mxu0 0.0
        %2086 = vmatprep.subr.mxu0 0.0
        %2087 = vmatpush1.xpose.msra.mxu0 0.0
        %2088 = vmatprep.subr.mxu0 0.0
        %2089 = vmatpush1.xpose.msra.mxu0 0.0
        %2090 = vmatprep.subr.mxu0 0.0
        %2091 = vmatpush1.xpose.msra.mxu0 0.0
        %2092 = vmatprep.subr.mxu0 0.0
        %2093 = vmatpush1.xpose.msra.mxu0 0.0
        %2094 = vmatprep.subr.mxu0 0.0
        %2095 = vmatpush1.xpose.msra.mxu0 %v2064
        %2096 = vmatprep.subr.mxu0 0.0
        %2097 = vmatpush1.xpose.msra.mxu0 %v2061
        %2098 = vmatprep.subr.mxu0 0.0
        %2099 = vmatpush2.xpose.msra.mxu0 0.0
        %2100 = vmatprep.subr.mxu0 0.0
        %2101 = vmatpush2.xpose.msra.mxu0 0.0
        %2102 = vmatprep.subr.mxu0 0.0
        %2103 = vmatpush2.xpose.msra.mxu0 0.0
        %2104 = vmatprep.subr.mxu0 0.0
        %2105 = vmatpush2.xpose.msra.mxu0 0.0
        %2106 = vmatprep.subr.mxu0 0.0
        %2107 = vmatpush2.xpose.msra.mxu0 0.0
        %2108 = vmatprep.subr.mxu0 0.0
        %2109 = vmatpush2.xpose.msra.mxu0 0.0
        %2110 = vmatprep.subr.mxu0 0.0
        %2111 = vmatpush2.xpose.msra.mxu0 0.0
        %2112 = vmatprep.subr.mxu0 0.0
        %2113 = vmatpush2.xpose.msra.mxu0 0.0
        %2114 = vmatprep.subr.mxu0 0.0
        %2115 = vmatpush2.xpose.msra.mxu0 0.0
        %2116 = vmatprep.subr.mxu0 0.0
        %2117 = vmatpush2.xpose.msra.mxu0 0.0
        %2118 = vmatprep.subr.mxu0 0.0
        %2119 = vmatpush2.xpose.msra.mxu0 0.0
        %2120 = vmatprep.subr.mxu0 0.0
        %2121 = vmatpush2.xpose.msra.mxu0 0.0
        %2122 = vmatprep.subr.mxu0 0.0
        %2123 = vmatpush2.xpose.msra.mxu0 0.0
        %2124 = vmatprep.subr.mxu0 0.0
        %2125 = vmatpush2.xpose.msra.mxu0 0.0
        %2126 = vmatprep.subr.mxu0 0.0
        %2127 = vmatpush2.xpose.msra.mxu0 0.0
        %2128 = vmatprep.subr.mxu0 0.0
        %2129 = vmatpush2.xpose.msra.mxu0 0.0
        %2130 = vmatprep.mubr.f32.mxu0 0.0
        %2131 = vmatmul.mubr.f32.gmra.mxu0 %v2055
        %v2132 = vpop.f32.mrf.mxu0
        %v2133 = vadd.f32 0.0, %v2132
        %v2134 = vpop.f32.mrf.mxu0
        %2135 = vmatprep.mubr.f32.mxu0 0.0
        %2136 = vmatmul.mubr.f32.gmra.mxu0 %v2058
        %v2137 = vpop.f32.mrf.mxu0
        %v2138 = vadd.f32 0.0, %v2137
        %v2139 = vpop.f32.mrf.mxu0
        %2140 = vdwg.mxu0
        %v2142 = vsel %vm990, %v1375, 0
        %v2145 = vsel %vm990, %v1376, 0
        %v2148 = vsel %vm990, %v1599, 0
        %v2151 = vsel %vm990, %v1600, 0
        %2153 = vmatprep.subr.mxu0 0.0
        %2154 = vmatpush1.xpose.msra.mxu0 0.0
        %2155 = vmatprep.subr.mxu0 0.0
        %2156 = vmatpush1.xpose.msra.mxu0 0.0
        %2157 = vmatprep.subr.mxu0 0.0
        %2158 = vmatpush1.xpose.msra.mxu0 0.0
        %2159 = vmatprep.subr.mxu0 0.0
        %2160 = vmatpush1.xpose.msra.mxu0 0.0
        %2161 = vmatprep.subr.mxu0 0.0
        %2162 = vmatpush1.xpose.msra.mxu0 0.0
        %2163 = vmatprep.subr.mxu0 0.0
        %2164 = vmatpush1.xpose.msra.mxu0 0.0
        %2165 = vmatprep.subr.mxu0 0.0
        %2166 = vmatpush1.xpose.msra.mxu0 0.0
        %2167 = vmatprep.subr.mxu0 0.0
        %2168 = vmatpush1.xpose.msra.mxu0 0.0
        %2169 = vmatprep.subr.mxu0 0.0
        %2170 = vmatpush1.xpose.msra.mxu0 0.0
        %2171 = vmatprep.subr.mxu0 0.0
        %2172 = vmatpush1.xpose.msra.mxu0 0.0
        %2173 = vmatprep.subr.mxu0 0.0
        %2174 = vmatpush1.xpose.msra.mxu0 0.0
        %2175 = vmatprep.subr.mxu0 0.0
        %2176 = vmatpush1.xpose.msra.mxu0 0.0
        %2177 = vmatprep.subr.mxu0 0.0
        %2178 = vmatpush1.xpose.msra.mxu0 0.0
        %2179 = vmatprep.subr.mxu0 0.0
        %2180 = vmatpush1.xpose.msra.mxu0 0.0
        %2181 = vmatprep.subr.mxu0 0.0
        %2182 = vmatpush1.xpose.msra.mxu0 %v2151
        %2183 = vmatprep.subr.mxu0 0.0
        %2184 = vmatpush1.xpose.msra.mxu0 %v2148
        %2185 = vmatprep.subr.mxu0 0.0
        %2186 = vmatpush2.xpose.msra.mxu0 0.0
        %2187 = vmatprep.subr.mxu0 0.0
        %2188 = vmatpush2.xpose.msra.mxu0 0.0
        %2189 = vmatprep.subr.mxu0 0.0
        %2190 = vmatpush2.xpose.msra.mxu0 0.0
        %2191 = vmatprep.subr.mxu0 0.0
        %2192 = vmatpush2.xpose.msra.mxu0 0.0
        %2193 = vmatprep.subr.mxu0 0.0
        %2194 = vmatpush2.xpose.msra.mxu0 0.0
        %2195 = vmatprep.subr.mxu0 0.0
        %2196 = vmatpush2.xpose.msra.mxu0 0.0
        %2197 = vmatprep.subr.mxu0 0.0
        %2198 = vmatpush2.xpose.msra.mxu0 0.0
        %2199 = vmatprep.subr.mxu0 0.0
        %2200 = vmatpush2.xpose.msra.mxu0 0.0
        %2201 = vmatprep.subr.mxu0 0.0
        %2202 = vmatpush2.xpose.msra.mxu0 0.0
        %2203 = vmatprep.subr.mxu0 0.0
        %2204 = vmatpush2.xpose.msra.mxu0 0.0
        %2205 = vmatprep.subr.mxu0 0.0
        %2206 = vmatpush2.xpose.msra.mxu0 0.0
        %2207 = vmatprep.subr.mxu0 0.0
        %2208 = vmatpush2.xpose.msra.mxu0 0.0
        %2209 = vmatprep.subr.mxu0 0.0
        %2210 = vmatpush2.xpose.msra.mxu0 0.0
        %2211 = vmatprep.subr.mxu0 0.0
        %2212 = vmatpush2.xpose.msra.mxu0 0.0
        %2213 = vmatprep.subr.mxu0 0.0
        %2214 = vmatpush2.xpose.msra.mxu0 0.0
        %2215 = vmatprep.subr.mxu0 0.0
        %2216 = vmatpush2.xpose.msra.mxu0 0.0
        %2217 = vmatprep.mubr.f32.mxu0 0.0
        %2218 = vmatmul.mubr.f32.gmra.mxu0 %v2142
        %v2219 = vpop.f32.mrf.mxu0
        %v2220 = vadd.f32 0.0, %v2219
        %v2221 = vpop.f32.mrf.mxu0
        %2222 = vmatprep.mubr.f32.mxu0 0.0
        %2223 = vmatmul.mubr.f32.gmra.mxu0 %v2145
        %v2224 = vpop.f32.mrf.mxu0
        %v2225 = vadd.f32 0.0, %v2224
        %v2226 = vpop.f32.mrf.mxu0
        %2227 = vdwg.mxu0
        %v2229 = vsel %vm990, %v1377, 0
        %v2232 = vsel %vm990, %v1378, 0
        %v2235 = vsel %vm990, %v1601, 0
        %v2238 = vsel %vm990, %v1602, 0
        %2240 = vmatprep.subr.mxu0 0.0
        %2241 = vmatpush1.xpose.msra.mxu0 0.0
        %2242 = vmatprep.subr.mxu0 0.0
        %2243 = vmatpush1.xpose.msra.mxu0 0.0
        %2244 = vmatprep.subr.mxu0 0.0
        %2245 = vmatpush1.xpose.msra.mxu0 0.0
        %2246 = vmatprep.subr.mxu0 0.0
        %2247 = vmatpush1.xpose.msra.mxu0 0.0
        %2248 = vmatprep.subr.mxu0 0.0
        %2249 = vmatpush1.xpose.msra.mxu0 0.0
        %2250 = vmatprep.subr.mxu0 0.0
        %2251 = vmatpush1.xpose.msra.mxu0 0.0
        %2252 = vmatprep.subr.mxu0 0.0
        %2253 = vmatpush1.xpose.msra.mxu0 0.0
        %2254 = vmatprep.subr.mxu0 0.0
        %2255 = vmatpush1.xpose.msra.mxu0 0.0
        %2256 = vmatprep.subr.mxu0 0.0
        %2257 = vmatpush1.xpose.msra.mxu0 0.0
        %2258 = vmatprep.subr.mxu0 0.0
        %2259 = vmatpush1.xpose.msra.mxu0 0.0
        %2260 = vmatprep.subr.mxu0 0.0
        %2261 = vmatpush1.xpose.msra.mxu0 0.0
        %2262 = vmatprep.subr.mxu0 0.0
        %2263 = vmatpush1.xpose.msra.mxu0 0.0
        %2264 = vmatprep.subr.mxu0 0.0
        %2265 = vmatpush1.xpose.msra.mxu0 0.0
        %2266 = vmatprep.subr.mxu0 0.0
        %2267 = vmatpush1.xpose.msra.mxu0 0.0
        %2268 = vmatprep.subr.mxu0 0.0
        %2269 = vmatpush1.xpose.msra.mxu0 %v2238
        %2270 = vmatprep.subr.mxu0 0.0
        %2271 = vmatpush1.xpose.msra.mxu0 %v2235
        %2272 = vmatprep.subr.mxu0 0.0
        %2273 = vmatpush2.xpose.msra.mxu0 0.0
        %2274 = vmatprep.subr.mxu0 0.0
        %2275 = vmatpush2.xpose.msra.mxu0 0.0
        %2276 = vmatprep.subr.mxu0 0.0
        %2277 = vmatpush2.xpose.msra.mxu0 0.0
        %2278 = vmatprep.subr.mxu0 0.0
        %2279 = vmatpush2.xpose.msra.mxu0 0.0
        %2280 = vmatprep.subr.mxu0 0.0
        %2281 = vmatpush2.xpose.msra.mxu0 0.0
        %2282 = vmatprep.subr.mxu0 0.0
        %2283 = vmatpush2.xpose.msra.mxu0 0.0
        %2284 = vmatprep.subr.mxu0 0.0
        %2285 = vmatpush2.xpose.msra.mxu0 0.0
        %2286 = vmatprep.subr.mxu0 0.0
        %2287 = vmatpush2.xpose.msra.mxu0 0.0
        %2288 = vmatprep.subr.mxu0 0.0
        %2289 = vmatpush2.xpose.msra.mxu0 0.0
        %2290 = vmatprep.subr.mxu0 0.0
        %2291 = vmatpush2.xpose.msra.mxu0 0.0
        %2292 = vmatprep.subr.mxu0 0.0
        %2293 = vmatpush2.xpose.msra.mxu0 0.0
        %2294 = vmatprep.subr.mxu0 0.0
        %2295 = vmatpush2.xpose.msra.mxu0 0.0
        %2296 = vmatprep.subr.mxu0 0.0
        %2297 = vmatpush2.xpose.msra.mxu0 0.0
        %2298 = vmatprep.subr.mxu0 0.0
        %2299 = vmatpush2.xpose.msra.mxu0 0.0
        %2300 = vmatprep.subr.mxu0 0.0
        %2301 = vmatpush2.xpose.msra.mxu0 0.0
        %2302 = vmatprep.subr.mxu0 0.0
        %2303 = vmatpush2.xpose.msra.mxu0 0.0
        %2304 = vmatprep.mubr.f32.mxu0 0.0
        %2305 = vmatmul.mubr.f32.gmra.mxu0 %v2229
        %v2306 = vpop.f32.mrf.mxu0
        %v2307 = vadd.f32 0.0, %v2306
        %v2308 = vpop.f32.mrf.mxu0
        %2309 = vmatprep.mubr.f32.mxu0 0.0
        %2310 = vmatmul.mubr.f32.gmra.mxu0 %v2232
        %v2311 = vpop.f32.mrf.mxu0
        %v2312 = vadd.f32 0.0, %v2311
        %v2313 = vpop.f32.mrf.mxu0
        %2314 = vdwg.mxu0
        %v2316 = vsel %vm990, %v1379, 0
        %v2319 = vsel %vm990, %v1380, 0
        %v2322 = vsel %vm990, %v1603, 0
        %v2325 = vsel %vm990, %v1604, 0
        %2327 = vmatprep.subr.mxu0 0.0
        %2328 = vmatpush1.xpose.msra.mxu0 0.0
        %2329 = vmatprep.subr.mxu0 0.0
        %2330 = vmatpush1.xpose.msra.mxu0 0.0
        %2331 = vmatprep.subr.mxu0 0.0
        %2332 = vmatpush1.xpose.msra.mxu0 0.0
        %2333 = vmatprep.subr.mxu0 0.0
        %2334 = vmatpush1.xpose.msra.mxu0 0.0
        %2335 = vmatprep.subr.mxu0 0.0
        %2336 = vmatpush1.xpose.msra.mxu0 0.0
        %2337 = vmatprep.subr.mxu0 0.0
        %2338 = vmatpush1.xpose.msra.mxu0 0.0
        %2339 = vmatprep.subr.mxu0 0.0
        %2340 = vmatpush1.xpose.msra.mxu0 0.0
        %2341 = vmatprep.subr.mxu0 0.0
        %2342 = vmatpush1.xpose.msra.mxu0 0.0
        %2343 = vmatprep.subr.mxu0 0.0
        %2344 = vmatpush1.xpose.msra.mxu0 0.0
        %2345 = vmatprep.subr.mxu0 0.0
        %2346 = vmatpush1.xpose.msra.mxu0 0.0
        %2347 = vmatprep.subr.mxu0 0.0
        %2348 = vmatpush1.xpose.msra.mxu0 0.0
        %2349 = vmatprep.subr.mxu0 0.0
        %2350 = vmatpush1.xpose.msra.mxu0 0.0
        %2351 = vmatprep.subr.mxu0 0.0
        %2352 = vmatpush1.xpose.msra.mxu0 0.0
        %2353 = vmatprep.subr.mxu0 0.0
        %2354 = vmatpush1.xpose.msra.mxu0 0.0
        %2355 = vmatprep.subr.mxu0 0.0
        %2356 = vmatpush1.xpose.msra.mxu0 %v2325
        %2357 = vmatprep.subr.mxu0 0.0
        %2358 = vmatpush1.xpose.msra.mxu0 %v2322
        %2359 = vmatprep.subr.mxu0 0.0
        %2360 = vmatpush2.xpose.msra.mxu0 0.0
        %2361 = vmatprep.subr.mxu0 0.0
        %2362 = vmatpush2.xpose.msra.mxu0 0.0
        %2363 = vmatprep.subr.mxu0 0.0
        %2364 = vmatpush2.xpose.msra.mxu0 0.0
        %2365 = vmatprep.subr.mxu0 0.0
        %2366 = vmatpush2.xpose.msra.mxu0 0.0
        %2367 = vmatprep.subr.mxu0 0.0
        %2368 = vmatpush2.xpose.msra.mxu0 0.0
        %2369 = vmatprep.subr.mxu0 0.0
        %2370 = vmatpush2.xpose.msra.mxu0 0.0
        %2371 = vmatprep.subr.mxu0 0.0
        %2372 = vmatpush2.xpose.msra.mxu0 0.0
        %2373 = vmatprep.subr.mxu0 0.0
        %2374 = vmatpush2.xpose.msra.mxu0 0.0
        %2375 = vmatprep.subr.mxu0 0.0
        %2376 = vmatpush2.xpose.msra.mxu0 0.0
        %2377 = vmatprep.subr.mxu0 0.0
        %2378 = vmatpush2.xpose.msra.mxu0 0.0
        %2379 = vmatprep.subr.mxu0 0.0
        %2380 = vmatpush2.xpose.msra.mxu0 0.0
        %2381 = vmatprep.subr.mxu0 0.0
        %2382 = vmatpush2.xpose.msra.mxu0 0.0
        %2383 = vmatprep.subr.mxu0 0.0
        %2384 = vmatpush2.xpose.msra.mxu0 0.0
        %2385 = vmatprep.subr.mxu0 0.0
        %2386 = vmatpush2.xpose.msra.mxu0 0.0
        %2387 = vmatprep.subr.mxu0 0.0
        %2388 = vmatpush2.xpose.msra.mxu0 0.0
        %2389 = vmatprep.subr.mxu0 0.0
        %2390 = vmatpush2.xpose.msra.mxu0 0.0
        %2391 = vmatprep.mubr.f32.mxu0 0.0
        %2392 = vmatmul.mubr.f32.gmra.mxu0 %v2316
        %v2393 = vpop.f32.mrf.mxu0
        %v2394 = vadd.f32 0.0, %v2393
        %v2395 = vpop.f32.mrf.mxu0
        %2396 = vmatprep.mubr.f32.mxu0 0.0
        %2397 = vmatmul.mubr.f32.gmra.mxu0 %v2319
        %v2398 = vpop.f32.mrf.mxu0
        %v2399 = vadd.f32 0.0, %v2398
        %v2400 = vpop.f32.mrf.mxu0
        %2401 = vdwg.mxu0
        %v2403 = vsel %vm990, %v1381, 0
        %v2406 = vsel %vm990, %v1382, 0
        %v2409 = vsel %vm990, %v1605, 0
        %v2412 = vsel %vm990, %v1606, 0
        %2414 = vmatprep.subr.mxu0 0.0
        %2415 = vmatpush1.xpose.msra.mxu0 0.0
        %2416 = vmatprep.subr.mxu0 0.0
        %2417 = vmatpush1.xpose.msra.mxu0 0.0
        %2418 = vmatprep.subr.mxu0 0.0
        %2419 = vmatpush1.xpose.msra.mxu0 0.0
        %2420 = vmatprep.subr.mxu0 0.0
        %2421 = vmatpush1.xpose.msra.mxu0 0.0
        %2422 = vmatprep.subr.mxu0 0.0
        %2423 = vmatpush1.xpose.msra.mxu0 0.0
        %2424 = vmatprep.subr.mxu0 0.0
        %2425 = vmatpush1.xpose.msra.mxu0 0.0
        %2426 = vmatprep.subr.mxu0 0.0
        %2427 = vmatpush1.xpose.msra.mxu0 0.0
        %2428 = vmatprep.subr.mxu0 0.0
        %2429 = vmatpush1.xpose.msra.mxu0 0.0
        %2430 = vmatprep.subr.mxu0 0.0
        %2431 = vmatpush1.xpose.msra.mxu0 0.0
        %2432 = vmatprep.subr.mxu0 0.0
        %2433 = vmatpush1.xpose.msra.mxu0 0.0
        %2434 = vmatprep.subr.mxu0 0.0
        %2435 = vmatpush1.xpose.msra.mxu0 0.0
        %2436 = vmatprep.subr.mxu0 0.0
        %2437 = vmatpush1.xpose.msra.mxu0 0.0
        %2438 = vmatprep.subr.mxu0 0.0
        %2439 = vmatpush1.xpose.msra.mxu0 0.0
        %2440 = vmatprep.subr.mxu0 0.0
        %2441 = vmatpush1.xpose.msra.mxu0 0.0
        %2442 = vmatprep.subr.mxu0 0.0
        %2443 = vmatpush1.xpose.msra.mxu0 %v2412
        %2444 = vmatprep.subr.mxu0 0.0
        %2445 = vmatpush1.xpose.msra.mxu0 %v2409
        %2446 = vmatprep.subr.mxu0 0.0
        %2447 = vmatpush2.xpose.msra.mxu0 0.0
        %2448 = vmatprep.subr.mxu0 0.0
        %2449 = vmatpush2.xpose.msra.mxu0 0.0
        %2450 = vmatprep.subr.mxu0 0.0
        %2451 = vmatpush2.xpose.msra.mxu0 0.0
        %2452 = vmatprep.subr.mxu0 0.0
        %2453 = vmatpush2.xpose.msra.mxu0 0.0
        %2454 = vmatprep.subr.mxu0 0.0
        %2455 = vmatpush2.xpose.msra.mxu0 0.0
        %2456 = vmatprep.subr.mxu0 0.0
        %2457 = vmatpush2.xpose.msra.mxu0 0.0
        %2458 = vmatprep.subr.mxu0 0.0
        %2459 = vmatpush2.xpose.msra.mxu0 0.0
        %2460 = vmatprep.subr.mxu0 0.0
        %2461 = vmatpush2.xpose.msra.mxu0 0.0
        %2462 = vmatprep.subr.mxu0 0.0
        %2463 = vmatpush2.xpose.msra.mxu0 0.0
        %2464 = vmatprep.subr.mxu0 0.0
        %2465 = vmatpush2.xpose.msra.mxu0 0.0
        %2466 = vmatprep.subr.mxu0 0.0
        %2467 = vmatpush2.xpose.msra.mxu0 0.0
        %2468 = vmatprep.subr.mxu0 0.0
        %2469 = vmatpush2.xpose.msra.mxu0 0.0
        %2470 = vmatprep.subr.mxu0 0.0
        %2471 = vmatpush2.xpose.msra.mxu0 0.0
        %2472 = vmatprep.subr.mxu0 0.0
        %2473 = vmatpush2.xpose.msra.mxu0 0.0
        %2474 = vmatprep.subr.mxu0 0.0
        %2475 = vmatpush2.xpose.msra.mxu0 0.0
        %2476 = vmatprep.subr.mxu0 0.0
        %2477 = vmatpush2.xpose.msra.mxu0 0.0
        %2478 = vmatprep.mubr.f32.mxu0 0.0
        %2479 = vmatmul.mubr.f32.gmra.mxu0 %v2403
        %v2480 = vpop.f32.mrf.mxu0
        %v2481 = vadd.f32 0.0, %v2480
        %v2482 = vpop.f32.mrf.mxu0
        %2483 = vmatprep.mubr.f32.mxu0 0.0
        %2484 = vmatmul.mubr.f32.gmra.mxu0 %v2406
        %v2485 = vpop.f32.mrf.mxu0
        %v2486 = vadd.f32 0.0, %v2485
        %v2487 = vpop.f32.mrf.mxu0
        %2488 = vdwg.mxu0
        %v2490 = vsel %vm990, %v1383, 0
        %v2493 = vsel %vm990, %v1384, 0
        %v2496 = vsel %vm990, %v1607, 0
        %v2499 = vsel %vm990, %v1608, 0
        %2501 = vmatprep.subr.mxu0 0.0
        %2502 = vmatpush1.xpose.msra.mxu0 0.0
        %2503 = vmatprep.subr.mxu0 0.0
        %2504 = vmatpush1.xpose.msra.mxu0 0.0
        %2505 = vmatprep.subr.mxu0 0.0
        %2506 = vmatpush1.xpose.msra.mxu0 0.0
        %2507 = vmatprep.subr.mxu0 0.0
        %2508 = vmatpush1.xpose.msra.mxu0 0.0
        %2509 = vmatprep.subr.mxu0 0.0
        %2510 = vmatpush1.xpose.msra.mxu0 0.0
        %2511 = vmatprep.subr.mxu0 0.0
        %2512 = vmatpush1.xpose.msra.mxu0 0.0
        %2513 = vmatprep.subr.mxu0 0.0
        %2514 = vmatpush1.xpose.msra.mxu0 0.0
        %2515 = vmatprep.subr.mxu0 0.0
        %2516 = vmatpush1.xpose.msra.mxu0 0.0
        %2517 = vmatprep.subr.mxu0 0.0
        %2518 = vmatpush1.xpose.msra.mxu0 0.0
        %2519 = vmatprep.subr.mxu0 0.0
        %2520 = vmatpush1.xpose.msra.mxu0 0.0
        %2521 = vmatprep.subr.mxu0 0.0
        %2522 = vmatpush1.xpose.msra.mxu0 0.0
        %2523 = vmatprep.subr.mxu0 0.0
        %2524 = vmatpush1.xpose.msra.mxu0 0.0
        %2525 = vmatprep.subr.mxu0 0.0
        %2526 = vmatpush1.xpose.msra.mxu0 0.0
        %2527 = vmatprep.subr.mxu0 0.0
        %2528 = vmatpush1.xpose.msra.mxu0 0.0
        %2529 = vmatprep.subr.mxu0 0.0
        %2530 = vmatpush1.xpose.msra.mxu0 %v2499
        %2531 = vmatprep.subr.mxu0 0.0
        %2532 = vmatpush1.xpose.msra.mxu0 %v2496
        %2533 = vmatprep.subr.mxu0 0.0
        %2534 = vmatpush2.xpose.msra.mxu0 0.0
        %2535 = vmatprep.subr.mxu0 0.0
        %2536 = vmatpush2.xpose.msra.mxu0 0.0
        %2537 = vmatprep.subr.mxu0 0.0
        %2538 = vmatpush2.xpose.msra.mxu0 0.0
        %2539 = vmatprep.subr.mxu0 0.0
        %2540 = vmatpush2.xpose.msra.mxu0 0.0
        %2541 = vmatprep.subr.mxu0 0.0
        %2542 = vmatpush2.xpose.msra.mxu0 0.0
        %2543 = vmatprep.subr.mxu0 0.0
        %2544 = vmatpush2.xpose.msra.mxu0 0.0
        %2545 = vmatprep.subr.mxu0 0.0
        %2546 = vmatpush2.xpose.msra.mxu0 0.0
        %2547 = vmatprep.subr.mxu0 0.0
        %2548 = vmatpush2.xpose.msra.mxu0 0.0
        %2549 = vmatprep.subr.mxu0 0.0
        %2550 = vmatpush2.xpose.msra.mxu0 0.0
        %2551 = vmatprep.subr.mxu0 0.0
        %2552 = vmatpush2.xpose.msra.mxu0 0.0
        %2553 = vmatprep.subr.mxu0 0.0
        %2554 = vmatpush2.xpose.msra.mxu0 0.0
        %2555 = vmatprep.subr.mxu0 0.0
        %2556 = vmatpush2.xpose.msra.mxu0 0.0
        %2557 = vmatprep.subr.mxu0 0.0
        %2558 = vmatpush2.xpose.msra.mxu0 0.0
        %2559 = vmatprep.subr.mxu0 0.0
        %2560 = vmatpush2.xpose.msra.mxu0 0.0
        %2561 = vmatprep.subr.mxu0 0.0
        %2562 = vmatpush2.xpose.msra.mxu0 0.0
        %2563 = vmatprep.subr.mxu0 0.0
        %2564 = vmatpush2.xpose.msra.mxu0 0.0
        %2565 = vmatprep.mubr.f32.mxu0 0.0
        %2566 = vmatmul.mubr.f32.gmra.mxu0 %v2490
        %v2567 = vpop.f32.mrf.mxu0
        %v2568 = vadd.f32 0.0, %v2567
        %v2569 = vpop.f32.mrf.mxu0
        %2570 = vmatprep.mubr.f32.mxu0 0.0
        %2571 = vmatmul.mubr.f32.gmra.mxu0 %v2493
        %v2572 = vpop.f32.mrf.mxu0
        %v2573 = vadd.f32 0.0, %v2572
        %v2574 = vpop.f32.mrf.mxu0
        %2575 = vdwg.mxu0
        %v2577 = vsel %vm990, %v1385, 0
        %v2580 = vsel %vm990, %v1386, 0
        %v2583 = vsel %vm990, %v1609, 0
        %v2586 = vsel %vm990, %v1610, 0
        %2588 = vmatprep.subr.mxu0 0.0
        %2589 = vmatpush1.xpose.msra.mxu0 0.0
        %2590 = vmatprep.subr.mxu0 0.0
        %2591 = vmatpush1.xpose.msra.mxu0 0.0
        %2592 = vmatprep.subr.mxu0 0.0
        %2593 = vmatpush1.xpose.msra.mxu0 0.0
        %2594 = vmatprep.subr.mxu0 0.0
        %2595 = vmatpush1.xpose.msra.mxu0 0.0
        %2596 = vmatprep.subr.mxu0 0.0
        %2597 = vmatpush1.xpose.msra.mxu0 0.0
        %2598 = vmatprep.subr.mxu0 0.0
        %2599 = vmatpush1.xpose.msra.mxu0 0.0
        %2600 = vmatprep.subr.mxu0 0.0
        %2601 = vmatpush1.xpose.msra.mxu0 0.0
        %2602 = vmatprep.subr.mxu0 0.0
        %2603 = vmatpush1.xpose.msra.mxu0 0.0
        %2604 = vmatprep.subr.mxu0 0.0
        %2605 = vmatpush1.xpose.msra.mxu0 0.0
        %2606 = vmatprep.subr.mxu0 0.0
        %2607 = vmatpush1.xpose.msra.mxu0 0.0
        %2608 = vmatprep.subr.mxu0 0.0
        %2609 = vmatpush1.xpose.msra.mxu0 0.0
        %2610 = vmatprep.subr.mxu0 0.0
        %2611 = vmatpush1.xpose.msra.mxu0 0.0
        %2612 = vmatprep.subr.mxu0 0.0
        %2613 = vmatpush1.xpose.msra.mxu0 0.0
        %2614 = vmatprep.subr.mxu0 0.0
        %2615 = vmatpush1.xpose.msra.mxu0 0.0
        %2616 = vmatprep.subr.mxu0 0.0
        %2617 = vmatpush1.xpose.msra.mxu0 %v2586
        %2618 = vmatprep.subr.mxu0 0.0
        %2619 = vmatpush1.xpose.msra.mxu0 %v2583
        %2620 = vmatprep.subr.mxu0 0.0
        %2621 = vmatpush2.xpose.msra.mxu0 0.0
        %2622 = vmatprep.subr.mxu0 0.0
        %2623 = vmatpush2.xpose.msra.mxu0 0.0
        %2624 = vmatprep.subr.mxu0 0.0
        %2625 = vmatpush2.xpose.msra.mxu0 0.0
        %2626 = vmatprep.subr.mxu0 0.0
        %2627 = vmatpush2.xpose.msra.mxu0 0.0
        %2628 = vmatprep.subr.mxu0 0.0
        %2629 = vmatpush2.xpose.msra.mxu0 0.0
        %2630 = vmatprep.subr.mxu0 0.0
        %2631 = vmatpush2.xpose.msra.mxu0 0.0
        %2632 = vmatprep.subr.mxu0 0.0
        %2633 = vmatpush2.xpose.msra.mxu0 0.0
        %2634 = vmatprep.subr.mxu0 0.0
        %2635 = vmatpush2.xpose.msra.mxu0 0.0
        %2636 = vmatprep.subr.mxu0 0.0
        %2637 = vmatpush2.xpose.msra.mxu0 0.0
        %2638 = vmatprep.subr.mxu0 0.0
        %2639 = vmatpush2.xpose.msra.mxu0 0.0
        %2640 = vmatprep.subr.mxu0 0.0
        %2641 = vmatpush2.xpose.msra.mxu0 0.0
        %2642 = vmatprep.subr.mxu0 0.0
        %2643 = vmatpush2.xpose.msra.mxu0 0.0
        %2644 = vmatprep.subr.mxu0 0.0
        %2645 = vmatpush2.xpose.msra.mxu0 0.0
        %2646 = vmatprep.subr.mxu0 0.0
        %2647 = vmatpush2.xpose.msra.mxu0 0.0
        %2648 = vmatprep.subr.mxu0 0.0
        %2649 = vmatpush2.xpose.msra.mxu0 0.0
        %2650 = vmatprep.subr.mxu0 0.0
        %2651 = vmatpush2.xpose.msra.mxu0 0.0
        %2652 = vmatprep.mubr.f32.mxu0 0.0
        %2653 = vmatmul.mubr.f32.gmra.mxu0 %v2577
        %v2654 = vpop.f32.mrf.mxu0
        %v2655 = vadd.f32 0.0, %v2654
        %v2656 = vpop.f32.mrf.mxu0
        %2657 = vmatprep.mubr.f32.mxu0 0.0
        %2658 = vmatmul.mubr.f32.gmra.mxu0 %v2580
        %v2659 = vpop.f32.mrf.mxu0
        %v2660 = vadd.f32 0.0, %v2659
        %v2661 = vpop.f32.mrf.mxu0
        %2662 = vdwg.mxu0
        %v2664 = vsel %vm990, %v1387, 0
        %v2667 = vsel %vm990, %v1388, 0
        %v2670 = vsel %vm990, %v1611, 0
        %v2673 = vsel %vm990, %v1612, 0
        %2675 = vmatprep.subr.mxu0 0.0
        %2676 = vmatpush1.xpose.msra.mxu0 0.0
        %2677 = vmatprep.subr.mxu0 0.0
        %2678 = vmatpush1.xpose.msra.mxu0 0.0
        %2679 = vmatprep.subr.mxu0 0.0
        %2680 = vmatpush1.xpose.msra.mxu0 0.0
        %2681 = vmatprep.subr.mxu0 0.0
        %2682 = vmatpush1.xpose.msra.mxu0 0.0
        %2683 = vmatprep.subr.mxu0 0.0
        %2684 = vmatpush1.xpose.msra.mxu0 0.0
        %2685 = vmatprep.subr.mxu0 0.0
        %2686 = vmatpush1.xpose.msra.mxu0 0.0
        %2687 = vmatprep.subr.mxu0 0.0
        %2688 = vmatpush1.xpose.msra.mxu0 0.0
        %2689 = vmatprep.subr.mxu0 0.0
        %2690 = vmatpush1.xpose.msra.mxu0 0.0
        %2691 = vmatprep.subr.mxu0 0.0
        %2692 = vmatpush1.xpose.msra.mxu0 0.0
        %2693 = vmatprep.subr.mxu0 0.0
        %2694 = vmatpush1.xpose.msra.mxu0 0.0
        %2695 = vmatprep.subr.mxu0 0.0
        %2696 = vmatpush1.xpose.msra.mxu0 0.0
        %2697 = vmatprep.subr.mxu0 0.0
        %2698 = vmatpush1.xpose.msra.mxu0 0.0
        %2699 = vmatprep.subr.mxu0 0.0
        %2700 = vmatpush1.xpose.msra.mxu0 0.0
        %2701 = vmatprep.subr.mxu0 0.0
        %2702 = vmatpush1.xpose.msra.mxu0 0.0
        %2703 = vmatprep.subr.mxu0 0.0
        %2704 = vmatpush1.xpose.msra.mxu0 %v2673
        %2705 = vmatprep.subr.mxu0 0.0
        %2706 = vmatpush1.xpose.msra.mxu0 %v2670
        %2707 = vmatprep.subr.mxu0 0.0
        %2708 = vmatpush2.xpose.msra.mxu0 0.0
        %2709 = vmatprep.subr.mxu0 0.0
        %2710 = vmatpush2.xpose.msra.mxu0 0.0
        %2711 = vmatprep.subr.mxu0 0.0
        %2712 = vmatpush2.xpose.msra.mxu0 0.0
        %2713 = vmatprep.subr.mxu0 0.0
        %2714 = vmatpush2.xpose.msra.mxu0 0.0
        %2715 = vmatprep.subr.mxu0 0.0
        %2716 = vmatpush2.xpose.msra.mxu0 0.0
        %2717 = vmatprep.subr.mxu0 0.0
        %2718 = vmatpush2.xpose.msra.mxu0 0.0
        %2719 = vmatprep.subr.mxu0 0.0
        %2720 = vmatpush2.xpose.msra.mxu0 0.0
        %2721 = vmatprep.subr.mxu0 0.0
        %2722 = vmatpush2.xpose.msra.mxu0 0.0
        %2723 = vmatprep.subr.mxu0 0.0
        %2724 = vmatpush2.xpose.msra.mxu0 0.0
        %2725 = vmatprep.subr.mxu0 0.0
        %2726 = vmatpush2.xpose.msra.mxu0 0.0
        %2727 = vmatprep.subr.mxu0 0.0
        %2728 = vmatpush2.xpose.msra.mxu0 0.0
        %2729 = vmatprep.subr.mxu0 0.0
        %2730 = vmatpush2.xpose.msra.mxu0 0.0
        %2731 = vmatprep.subr.mxu0 0.0
        %2732 = vmatpush2.xpose.msra.mxu0 0.0
        %2733 = vmatprep.subr.mxu0 0.0
        %2734 = vmatpush2.xpose.msra.mxu0 0.0
        %2735 = vmatprep.subr.mxu0 0.0
        %2736 = vmatpush2.xpose.msra.mxu0 0.0
        %2737 = vmatprep.subr.mxu0 0.0
        %2738 = vmatpush2.xpose.msra.mxu0 0.0
        %2739 = vmatprep.mubr.f32.mxu0 0.0
        %2740 = vmatmul.mubr.f32.gmra.mxu0 %v2664
        %v2741 = vpop.f32.mrf.mxu0
        %v2742 = vadd.f32 0.0, %v2741
        %v2743 = vpop.f32.mrf.mxu0
        %2744 = vmatprep.mubr.f32.mxu0 0.0
        %2745 = vmatmul.mubr.f32.gmra.mxu0 %v2667
        %v2746 = vpop.f32.mrf.mxu0
        %v2747 = vadd.f32 0.0, %v2746
        %v2748 = vpop.f32.mrf.mxu0
        %2749 = vdwg.mxu0
        %v2751 = vsel %vm990, %v1389, 0
        %v2754 = vsel %vm990, %v1390, 0
        %v2757 = vsel %vm990, %v1613, 0
        %v2760 = vsel %vm990, %v1614, 0
        %2762 = vmatprep.subr.mxu0 0.0
        %2763 = vmatpush1.xpose.msra.mxu0 0.0
        %2764 = vmatprep.subr.mxu0 0.0
        %2765 = vmatpush1.xpose.msra.mxu0 0.0
        %2766 = vmatprep.subr.mxu0 0.0
        %2767 = vmatpush1.xpose.msra.mxu0 0.0
        %2768 = vmatprep.subr.mxu0 0.0
        %2769 = vmatpush1.xpose.msra.mxu0 0.0
        %2770 = vmatprep.subr.mxu0 0.0
        %2771 = vmatpush1.xpose.msra.mxu0 0.0
        %2772 = vmatprep.subr.mxu0 0.0
        %2773 = vmatpush1.xpose.msra.mxu0 0.0
        %2774 = vmatprep.subr.mxu0 0.0
        %2775 = vmatpush1.xpose.msra.mxu0 0.0
        %2776 = vmatprep.subr.mxu0 0.0
        %2777 = vmatpush1.xpose.msra.mxu0 0.0
        %2778 = vmatprep.subr.mxu0 0.0
        %2779 = vmatpush1.xpose.msra.mxu0 0.0
        %2780 = vmatprep.subr.mxu0 0.0
        %2781 = vmatpush1.xpose.msra.mxu0 0.0
        %2782 = vmatprep.subr.mxu0 0.0
        %2783 = vmatpush1.xpose.msra.mxu0 0.0
        %2784 = vmatprep.subr.mxu0 0.0
        %2785 = vmatpush1.xpose.msra.mxu0 0.0
        %2786 = vmatprep.subr.mxu0 0.0
        %2787 = vmatpush1.xpose.msra.mxu0 0.0
        %2788 = vmatprep.subr.mxu0 0.0
        %2789 = vmatpush1.xpose.msra.mxu0 0.0
        %2790 = vmatprep.subr.mxu0 0.0
        %2791 = vmatpush1.xpose.msra.mxu0 %v2760
        %2792 = vmatprep.subr.mxu0 0.0
        %2793 = vmatpush1.xpose.msra.mxu0 %v2757
        %2794 = vmatprep.subr.mxu0 0.0
        %2795 = vmatpush2.xpose.msra.mxu0 0.0
        %2796 = vmatprep.subr.mxu0 0.0
        %2797 = vmatpush2.xpose.msra.mxu0 0.0
        %2798 = vmatprep.subr.mxu0 0.0
        %2799 = vmatpush2.xpose.msra.mxu0 0.0
        %2800 = vmatprep.subr.mxu0 0.0
        %2801 = vmatpush2.xpose.msra.mxu0 0.0
        %2802 = vmatprep.subr.mxu0 0.0
        %2803 = vmatpush2.xpose.msra.mxu0 0.0
        %2804 = vmatprep.subr.mxu0 0.0
        %2805 = vmatpush2.xpose.msra.mxu0 0.0
        %2806 = vmatprep.subr.mxu0 0.0
        %2807 = vmatpush2.xpose.msra.mxu0 0.0
        %2808 = vmatprep.subr.mxu0 0.0
        %2809 = vmatpush2.xpose.msra.mxu0 0.0
        %2810 = vmatprep.subr.mxu0 0.0
        %2811 = vmatpush2.xpose.msra.mxu0 0.0
        %2812 = vmatprep.subr.mxu0 0.0
        %2813 = vmatpush2.xpose.msra.mxu0 0.0
        %2814 = vmatprep.subr.mxu0 0.0
        %2815 = vmatpush2.xpose.msra.mxu0 0.0
        %2816 = vmatprep.subr.mxu0 0.0
        %2817 = vmatpush2.xpose.msra.mxu0 0.0
        %2818 = vmatprep.subr.mxu0 0.0
        %2819 = vmatpush2.xpose.msra.mxu0 0.0
        %2820 = vmatprep.subr.mxu0 0.0
        %2821 = vmatpush2.xpose.msra.mxu0 0.0
        %2822 = vmatprep.subr.mxu0 0.0
        %2823 = vmatpush2.xpose.msra.mxu0 0.0
        %2824 = vmatprep.subr.mxu0 0.0
        %2825 = vmatpush2.xpose.msra.mxu0 0.0
        %2826 = vmatprep.mubr.f32.mxu0 0.0
        %2827 = vmatmul.mubr.f32.gmra.mxu0 %v2751
        %v2828 = vpop.f32.mrf.mxu0
        %v2829 = vadd.f32 0.0, %v2828
        %v2830 = vpop.f32.mrf.mxu0
        %2831 = vmatprep.mubr.f32.mxu0 0.0
        %2832 = vmatmul.mubr.f32.gmra.mxu0 %v2754
        %v2833 = vpop.f32.mrf.mxu0
        %v2834 = vadd.f32 0.0, %v2833
        %v2835 = vpop.f32.mrf.mxu0
        %2836 = vdwg.mxu0
        %v2838 = vsel %vm990, %v1391, 0
        %v2841 = vsel %vm990, %v1392, 0
        %v2844 = vsel %vm990, %v1615, 0
        %v2847 = vsel %vm990, %v1616, 0
        %2849 = vmatprep.subr.mxu0 0.0
        %2850 = vmatpush1.xpose.msra.mxu0 0.0
        %2851 = vmatprep.subr.mxu0 0.0
        %2852 = vmatpush1.xpose.msra.mxu0 0.0
        %2853 = vmatprep.subr.mxu0 0.0
        %2854 = vmatpush1.xpose.msra.mxu0 0.0
        %2855 = vmatprep.subr.mxu0 0.0
        %2856 = vmatpush1.xpose.msra.mxu0 0.0
        %2857 = vmatprep.subr.mxu0 0.0
        %2858 = vmatpush1.xpose.msra.mxu0 0.0
        %2859 = vmatprep.subr.mxu0 0.0
        %2860 = vmatpush1.xpose.msra.mxu0 0.0
        %2861 = vmatprep.subr.mxu0 0.0
        %2862 = vmatpush1.xpose.msra.mxu0 0.0
        %2863 = vmatprep.subr.mxu0 0.0
        %2864 = vmatpush1.xpose.msra.mxu0 0.0
        %2865 = vmatprep.subr.mxu0 0.0
        %2866 = vmatpush1.xpose.msra.mxu0 0.0
        %2867 = vmatprep.subr.mxu0 0.0
        %2868 = vmatpush1.xpose.msra.mxu0 0.0
        %2869 = vmatprep.subr.mxu0 0.0
        %2870 = vmatpush1.xpose.msra.mxu0 0.0
        %2871 = vmatprep.subr.mxu0 0.0
        %2872 = vmatpush1.xpose.msra.mxu0 0.0
        %2873 = vmatprep.subr.mxu0 0.0
        %2874 = vmatpush1.xpose.msra.mxu0 0.0
        %2875 = vmatprep.subr.mxu0 0.0
        %2876 = vmatpush1.xpose.msra.mxu0 0.0
        %2877 = vmatprep.subr.mxu0 0.0
        %2878 = vmatpush1.xpose.msra.mxu0 %v2847
        %2879 = vmatprep.subr.mxu0 0.0
        %2880 = vmatpush1.xpose.msra.mxu0 %v2844
        %2881 = vmatprep.subr.mxu0 0.0
        %2882 = vmatpush2.xpose.msra.mxu0 0.0
        %2883 = vmatprep.subr.mxu0 0.0
        %2884 = vmatpush2.xpose.msra.mxu0 0.0
        %2885 = vmatprep.subr.mxu0 0.0
        %2886 = vmatpush2.xpose.msra.mxu0 0.0
        %2887 = vmatprep.subr.mxu0 0.0
        %2888 = vmatpush2.xpose.msra.mxu0 0.0
        %2889 = vmatprep.subr.mxu0 0.0
        %2890 = vmatpush2.xpose.msra.mxu0 0.0
        %2891 = vmatprep.subr.mxu0 0.0
        %2892 = vmatpush2.xpose.msra.mxu0 0.0
        %2893 = vmatprep.subr.mxu0 0.0
        %2894 = vmatpush2.xpose.msra.mxu0 0.0
        %2895 = vmatprep.subr.mxu0 0.0
        %2896 = vmatpush2.xpose.msra.mxu0 0.0
        %2897 = vmatprep.subr.mxu0 0.0
        %2898 = vmatpush2.xpose.msra.mxu0 0.0
        %2899 = vmatprep.subr.mxu0 0.0
        %2900 = vmatpush2.xpose.msra.mxu0 0.0
        %2901 = vmatprep.subr.mxu0 0.0
        %2902 = vmatpush2.xpose.msra.mxu0 0.0
        %2903 = vmatprep.subr.mxu0 0.0
        %2904 = vmatpush2.xpose.msra.mxu0 0.0
        %2905 = vmatprep.subr.mxu0 0.0
        %2906 = vmatpush2.xpose.msra.mxu0 0.0
        %2907 = vmatprep.subr.mxu0 0.0
        %2908 = vmatpush2.xpose.msra.mxu0 0.0
        %2909 = vmatprep.subr.mxu0 0.0
        %2910 = vmatpush2.xpose.msra.mxu0 0.0
        %2911 = vmatprep.subr.mxu0 0.0
        %2912 = vmatpush2.xpose.msra.mxu0 0.0
        %2913 = vmatprep.mubr.f32.mxu0 0.0
        %2914 = vmatmul.mubr.f32.gmra.mxu0 %v2838
        %v2915 = vpop.f32.mrf.mxu0
        %v2916 = vadd.f32 0.0, %v2915
        %v2917 = vpop.f32.mrf.mxu0
        %2918 = vmatprep.mubr.f32.mxu0 0.0
        %2919 = vmatmul.mubr.f32.gmra.mxu0 %v2841
        %v2920 = vpop.f32.mrf.mxu0
        %v2921 = vadd.f32 0.0, %v2920
        %v2922 = vpop.f32.mrf.mxu0
        %2923 = vdwg.mxu0
        %v2925 = vsel %vm990, %v1393, 0
        %v2928 = vsel %vm990, %v1394, 0
        %v2931 = vsel %vm990, %v1617, 0
        %v2934 = vsel %vm990, %v1618, 0
        %2936 = vmatprep.subr.mxu0 0.0
        %2937 = vmatpush1.xpose.msra.mxu0 0.0
        %2938 = vmatprep.subr.mxu0 0.0
        %2939 = vmatpush1.xpose.msra.mxu0 0.0
        %2940 = vmatprep.subr.mxu0 0.0
        %2941 = vmatpush1.xpose.msra.mxu0 0.0
        %2942 = vmatprep.subr.mxu0 0.0
        %2943 = vmatpush1.xpose.msra.mxu0 0.0
        %2944 = vmatprep.subr.mxu0 0.0
        %2945 = vmatpush1.xpose.msra.mxu0 0.0
        %2946 = vmatprep.subr.mxu0 0.0
        %2947 = vmatpush1.xpose.msra.mxu0 0.0
        %2948 = vmatprep.subr.mxu0 0.0
        %2949 = vmatpush1.xpose.msra.mxu0 0.0
        %2950 = vmatprep.subr.mxu0 0.0
        %2951 = vmatpush1.xpose.msra.mxu0 0.0
        %2952 = vmatprep.subr.mxu0 0.0
        %2953 = vmatpush1.xpose.msra.mxu0 0.0
        %2954 = vmatprep.subr.mxu0 0.0
        %2955 = vmatpush1.xpose.msra.mxu0 0.0
        %2956 = vmatprep.subr.mxu0 0.0
        %2957 = vmatpush1.xpose.msra.mxu0 0.0
        %2958 = vmatprep.subr.mxu0 0.0
        %2959 = vmatpush1.xpose.msra.mxu0 0.0
        %2960 = vmatprep.subr.mxu0 0.0
        %2961 = vmatpush1.xpose.msra.mxu0 0.0
        %2962 = vmatprep.subr.mxu0 0.0
        %2963 = vmatpush1.xpose.msra.mxu0 0.0
        %2964 = vmatprep.subr.mxu0 0.0
        %2965 = vmatpush1.xpose.msra.mxu0 %v2934
        %2966 = vmatprep.subr.mxu0 0.0
        %2967 = vmatpush1.xpose.msra.mxu0 %v2931
        %2968 = vmatprep.subr.mxu0 0.0
        %2969 = vmatpush2.xpose.msra.mxu0 0.0
        %2970 = vmatprep.subr.mxu0 0.0
        %2971 = vmatpush2.xpose.msra.mxu0 0.0
        %2972 = vmatprep.subr.mxu0 0.0
        %2973 = vmatpush2.xpose.msra.mxu0 0.0
        %2974 = vmatprep.subr.mxu0 0.0
        %2975 = vmatpush2.xpose.msra.mxu0 0.0
        %2976 = vmatprep.subr.mxu0 0.0
        %2977 = vmatpush2.xpose.msra.mxu0 0.0
        %2978 = vmatprep.subr.mxu0 0.0
        %2979 = vmatpush2.xpose.msra.mxu0 0.0
        %2980 = vmatprep.subr.mxu0 0.0
        %2981 = vmatpush2.xpose.msra.mxu0 0.0
        %2982 = vmatprep.subr.mxu0 0.0
        %2983 = vmatpush2.xpose.msra.mxu0 0.0
        %2984 = vmatprep.subr.mxu0 0.0
        %2985 = vmatpush2.xpose.msra.mxu0 0.0
        %2986 = vmatprep.subr.mxu0 0.0
        %2987 = vmatpush2.xpose.msra.mxu0 0.0
        %2988 = vmatprep.subr.mxu0 0.0
        %2989 = vmatpush2.xpose.msra.mxu0 0.0
        %2990 = vmatprep.subr.mxu0 0.0
        %2991 = vmatpush2.xpose.msra.mxu0 0.0
        %2992 = vmatprep.subr.mxu0 0.0
        %2993 = vmatpush2.xpose.msra.mxu0 0.0
        %2994 = vmatprep.subr.mxu0 0.0
        %2995 = vmatpush2.xpose.msra.mxu0 0.0
        %2996 = vmatprep.subr.mxu0 0.0
        %2997 = vmatpush2.xpose.msra.mxu0 0.0
        %2998 = vmatprep.subr.mxu0 0.0
        %2999 = vmatpush2.xpose.msra.mxu0 0.0
        %3000 = vmatprep.mubr.f32.mxu0 0.0
        %3001 = vmatmul.mubr.f32.gmra.mxu0 %v2925
        %v3002 = vpop.f32.mrf.mxu0
        %v3003 = vadd.f32 0.0, %v3002
        %v3004 = vpop.f32.mrf.mxu0
        %3005 = vmatprep.mubr.f32.mxu0 0.0
        %3006 = vmatmul.mubr.f32.gmra.mxu0 %v2928
        %v3007 = vpop.f32.mrf.mxu0
        %v3008 = vadd.f32 0.0, %v3007
        %v3009 = vpop.f32.mrf.mxu0
        %3010 = vdwg.mxu0
        %v3011 = vld [vmem:[#allocation5] sm:$0xf]
        %v3012 = vld [vmem:[#allocation5 + $0x4] sm:$0xf]
        %v3013 = vld [vmem:[#allocation5 + $0x8] sm:$0xf]
        %v3014 = vld [vmem:[#allocation5 + $0xc] sm:$0xf]
        %v3015 = vld [vmem:[#allocation5 + $0x10] sm:$0xf]
        %v3016 = vld [vmem:[#allocation5 + $0x14] sm:$0xf]
        %v3017 = vld [vmem:[#allocation5 + $0x18] sm:$0xf]
        %v3018 = vld [vmem:[#allocation5 + $0x1c] sm:$0xf]
        %v3019 = vunpack.c.l.bf16 %v3011
        %v3020 = vunpack.c.l.bf16 %v3012
        %v3021 = vunpack.c.l.bf16 %v3013
        %v3022 = vunpack.c.l.bf16 %v3014
        %v3023 = vunpack.c.l.bf16 %v3015
        %v3024 = vunpack.c.l.bf16 %v3016
        %v3025 = vunpack.c.l.bf16 %v3017
        %v3026 = vunpack.c.l.bf16 %v3018
        %v3027 = vadd.f32 %v1698, %v3019
        %v3028 = vadd.f32 %v1703, %v3020
        %v3029 = vadd.f32 %v1785, %v3019
        %v3030 = vadd.f32 %v1790, %v3020
        %v3031 = vadd.f32 %v1872, %v3019
        %v3032 = vadd.f32 %v1877, %v3020
        %v3033 = vadd.f32 %v1959, %v3019
        %v3034 = vadd.f32 %v1964, %v3020
        %v3035 = vadd.f32 %v2046, %v3021
        %v3036 = vadd.f32 %v2051, %v3022
        %v3037 = vadd.f32 %v2133, %v3021
        %v3038 = vadd.f32 %v2138, %v3022
        %v3039 = vadd.f32 %v2220, %v3021
        %v3040 = vadd.f32 %v2225, %v3022
        %v3041 = vadd.f32 %v2307, %v3021
        %v3042 = vadd.f32 %v2312, %v3022
        %v3043 = vadd.f32 %v2394, %v3023
        %v3044 = vadd.f32 %v2399, %v3024
        %v3045 = vadd.f32 %v2481, %v3023
        %v3046 = vadd.f32 %v2486, %v3024
        %v3047 = vadd.f32 %v2568, %v3023
        %v3048 = vadd.f32 %v2573, %v3024
        %v3049 = vadd.f32 %v2655, %v3023
        %v3050 = vadd.f32 %v2660, %v3024
        %v3051 = vadd.f32 %v2742, %v3025
        %v3052 = vadd.f32 %v2747, %v3026
        %v3053 = vadd.f32 %v2829, %v3025
        %v3054 = vadd.f32 %v2834, %v3026
        %v3055 = vadd.f32 %v2916, %v3025
        %v3056 = vadd.f32 %v2921, %v3026
        %v3057 = vadd.f32 %v3003, %v3025
        %v3058 = vadd.f32 %v3008, %v3026
        %vm3059 = vcmask 130048
        %v3060 = vsel %vm3059, %v3027, -inf
        %3061 = vmax.xlane.f32.xlu0 %v3060
        %v3062 = vpop.xlane.xlu0 %3061
        %v3063 = vsel %vm3059, %v3028, -inf
        %3064 = vmax.xlane.f32.xlu0 %v3063
        %v3065 = vpop.xlane.xlu0 %3064
        %v3066 = vsel %vm3059, %v3029, -inf
        %3067 = vmax.xlane.f32.xlu0 %v3066
        %v3068 = vpop.xlane.xlu0 %3067
        %v3069 = vsel %vm3059, %v3030, -inf
        %3070 = vmax.xlane.f32.xlu0 %v3069
        %v3071 = vpop.xlane.xlu0 %3070
        %v3072 = vsel %vm3059, %v3031, -inf
        %3073 = vmax.xlane.f32.xlu0 %v3072
        %v3074 = vpop.xlane.xlu0 %3073
        %v3075 = vsel %vm3059, %v3032, -inf
        %3076 = vmax.xlane.f32.xlu0 %v3075
        %v3077 = vpop.xlane.xlu0 %3076
        %v3078 = vsel %vm3059, %v3033, -inf
        %3079 = vmax.xlane.f32.xlu0 %v3078
        %v3080 = vpop.xlane.xlu0 %3079
        %v3081 = vsel %vm3059, %v3034, -inf
        %3082 = vmax.xlane.f32.xlu0 %v3081
        %v3083 = vpop.xlane.xlu0 %3082
        %v3084 = vsel %vm3059, %v3035, -inf
        %3085 = vmax.xlane.f32.xlu0 %v3084
        %v3086 = vpop.xlane.xlu0 %3085
        %v3087 = vsel %vm3059, %v3036, -inf
        %3088 = vmax.xlane.f32.xlu0 %v3087
        %v3089 = vpop.xlane.xlu0 %3088
        %v3090 = vsel %vm3059, %v3037, -inf
        %3091 = vmax.xlane.f32.xlu0 %v3090
        %v3092 = vpop.xlane.xlu0 %3091
        %v3093 = vsel %vm3059, %v3038, -inf
        %3094 = vmax.xlane.f32.xlu0 %v3093
        %v3095 = vpop.xlane.xlu0 %3094
        %v3096 = vsel %vm3059, %v3039, -inf
        %3097 = vmax.xlane.f32.xlu0 %v3096
        %v3098 = vpop.xlane.xlu0 %3097
        %v3099 = vsel %vm3059, %v3040, -inf
        %3100 = vmax.xlane.f32.xlu0 %v3099
        %v3101 = vpop.xlane.xlu0 %3100
        %v3102 = vsel %vm3059, %v3041, -inf
        %3103 = vmax.xlane.f32.xlu0 %v3102
        %v3104 = vpop.xlane.xlu0 %3103
        %v3105 = vsel %vm3059, %v3042, -inf
        %3106 = vmax.xlane.f32.xlu0 %v3105
        %v3107 = vpop.xlane.xlu0 %3106
        %v3108 = vsel %vm3059, %v3043, -inf
        %3109 = vmax.xlane.f32.xlu0 %v3108
        %v3110 = vpop.xlane.xlu0 %3109
        %v3111 = vsel %vm3059, %v3044, -inf
        %3112 = vmax.xlane.f32.xlu0 %v3111
        %v3113 = vpop.xlane.xlu0 %3112
        %v3114 = vsel %vm3059, %v3045, -inf
        %3115 = vmax.xlane.f32.xlu0 %v3114
        %v3116 = vpop.xlane.xlu0 %3115
        %v3117 = vsel %vm3059, %v3046, -inf
        %3118 = vmax.xlane.f32.xlu0 %v3117
        %v3119 = vpop.xlane.xlu0 %3118
        %v3120 = vsel %vm3059, %v3047, -inf
        %3121 = vmax.xlane.f32.xlu0 %v3120
        %v3122 = vpop.xlane.xlu0 %3121
        %v3123 = vsel %vm3059, %v3048, -inf
        %3124 = vmax.xlane.f32.xlu0 %v3123
        %v3125 = vpop.xlane.xlu0 %3124
        %v3126 = vsel %vm3059, %v3049, -inf
        %3127 = vmax.xlane.f32.xlu0 %v3126
        %v3128 = vpop.xlane.xlu0 %3127
        %v3129 = vsel %vm3059, %v3050, -inf
        %3130 = vmax.xlane.f32.xlu0 %v3129
        %v3131 = vpop.xlane.xlu0 %3130
        %v3132 = vsel %vm3059, %v3051, -inf
        %3133 = vmax.xlane.f32.xlu0 %v3132
        %v3134 = vpop.xlane.xlu0 %3133
        %v3135 = vsel %vm3059, %v3052, -inf
        %3136 = vmax.xlane.f32.xlu0 %v3135
        %v3137 = vpop.xlane.xlu0 %3136
        %v3138 = vsel %vm3059, %v3053, -inf
        %3139 = vmax.xlane.f32.xlu0 %v3138
        %v3140 = vpop.xlane.xlu0 %3139
        %v3141 = vsel %vm3059, %v3054, -inf
        %3142 = vmax.xlane.f32.xlu0 %v3141
        %v3143 = vpop.xlane.xlu0 %3142
        %v3144 = vsel %vm3059, %v3055, -inf
        %3145 = vmax.xlane.f32.xlu0 %v3144
        %v3146 = vpop.xlane.xlu0 %3145
        %v3147 = vsel %vm3059, %v3056, -inf
        %3148 = vmax.xlane.f32.xlu0 %v3147
        %v3149 = vpop.xlane.xlu0 %3148
        %v3150 = vsel %vm3059, %v3057, -inf
        %3151 = vmax.xlane.f32.xlu0 %v3150
        %v3152 = vpop.xlane.xlu0 %3151
        %v3153 = vsel %vm3059, %v3058, -inf
        %3154 = vmax.xlane.f32.xlu0 %v3153
        %v3155 = vpop.xlane.xlu0 %3154
        %v3156 = vsub.f32 %v3027, %v3062
        %v3157 = vsub.f32 %v3028, %v3065
        %v3158 = vsub.f32 %v3029, %v3068
        %v3159 = vsub.f32 %v3030, %v3071
        %v3160 = vsub.f32 %v3031, %v3074
        %v3161 = vsub.f32 %v3032, %v3077
        %v3162 = vsub.f32 %v3033, %v3080
        %v3163 = vsub.f32 %v3034, %v3083
        %v3164 = vsub.f32 %v3035, %v3086
        %v3165 = vsub.f32 %v3036, %v3089
        %v3166 = vsub.f32 %v3037, %v3092
        %v3167 = vsub.f32 %v3038, %v3095
        %v3168 = vsub.f32 %v3039, %v3098
        %v3169 = vsub.f32 %v3040, %v3101
        %v3170 = vsub.f32 %v3041, %v3104
        %v3171 = vsub.f32 %v3042, %v3107
        %v3172 = vsub.f32 %v3043, %v3110
        %v3173 = vsub.f32 %v3044, %v3113
        %v3174 = vsub.f32 %v3045, %v3116
        %v3175 = vsub.f32 %v3046, %v3119
        %v3176 = vsub.f32 %v3047, %v3122
        %v3177 = vsub.f32 %v3048, %v3125
        %v3178 = vsub.f32 %v3049, %v3128
        %v3179 = vsub.f32 %v3050, %v3131
        %v3180 = vsub.f32 %v3051, %v3134
        %v3181 = vsub.f32 %v3052, %v3137
        %v3182 = vsub.f32 %v3053, %v3140
        %v3183 = vsub.f32 %v3054, %v3143
        %v3184 = vsub.f32 %v3055, %v3146
        %v3185 = vsub.f32 %v3056, %v3149
        %v3186 = vsub.f32 %v3057, %v3152
        %v3187 = vsub.f32 %v3058, %v3155
        %v3188 = vmul.f32 %v3156, 1.442695
        %v3189 = vpow.pop %v3188
        %v3190 = vmul.f32 %v3157, 1.442695
        %v3191 = vpow.pop %v3190
        %v3192 = vmul.f32 %v3158, 1.442695
        %v3193 = vpow.pop %v3192
        %v3194 = vmul.f32 %v3159, 1.442695
        %v3195 = vpow.pop %v3194
        %v3196 = vmul.f32 %v3160, 1.442695
        %v3197 = vpow.pop %v3196
        %v3198 = vmul.f32 %v3161, 1.442695
        %v3199 = vpow.pop %v3198
        %v3200 = vmul.f32 %v3162, 1.442695
        %v3201 = vpow.pop %v3200
        %v3202 = vmul.f32 %v3163, 1.442695
        %v3203 = vpow.pop %v3202
        %v3204 = vmul.f32 %v3164, 1.442695
        %v3205 = vpow.pop %v3204
        %v3206 = vmul.f32 %v3165, 1.442695
        %v3207 = vpow.pop %v3206
        %v3208 = vmul.f32 %v3166, 1.442695
        %v3209 = vpow.pop %v3208
        %v3210 = vmul.f32 %v3167, 1.442695
        %v3211 = vpow.pop %v3210
        %v3212 = vmul.f32 %v3168, 1.442695
        %v3213 = vpow.pop %v3212
        %v3214 = vmul.f32 %v3169, 1.442695
        %v3215 = vpow.pop %v3214
        %v3216 = vmul.f32 %v3170, 1.442695
        %v3217 = vpow.pop %v3216
        %v3218 = vmul.f32 %v3171, 1.442695
        %v3219 = vpow.pop %v3218
        %v3220 = vmul.f32 %v3172, 1.442695
        %v3221 = vpow.pop %v3220
        %v3222 = vmul.f32 %v3173, 1.442695
        %v3223 = vpow.pop %v3222
        %v3224 = vmul.f32 %v3174, 1.442695
        %v3225 = vpow.pop %v3224
        %v3226 = vmul.f32 %v3175, 1.442695
        %v3227 = vpow.pop %v3226
        %v3228 = vmul.f32 %v3176, 1.442695
        %v3229 = vpow.pop %v3228
        %v3230 = vmul.f32 %v3177, 1.442695
        %v3231 = vpow.pop %v3230
        %v3232 = vmul.f32 %v3178, 1.442695
        %v3233 = vpow.pop %v3232
        %v3234 = vmul.f32 %v3179, 1.442695
        %v3235 = vpow.pop %v3234
        %v3236 = vmul.f32 %v3180, 1.442695
        %v3237 = vpow.pop %v3236
        %v3238 = vmul.f32 %v3181, 1.442695
        %v3239 = vpow.pop %v3238
        %v3240 = vmul.f32 %v3182, 1.442695
        %v3241 = vpow.pop %v3240
        %v3242 = vmul.f32 %v3183, 1.442695
        %v3243 = vpow.pop %v3242
        %v3244 = vmul.f32 %v3184, 1.442695
        %v3245 = vpow.pop %v3244
        %v3246 = vmul.f32 %v3185, 1.442695
        %v3247 = vpow.pop %v3246
        %v3248 = vmul.f32 %v3186, 1.442695
        %v3249 = vpow.pop %v3248
        %v3250 = vmul.f32 %v3187, 1.442695
        %v3251 = vpow.pop %v3250
        %v3252 = vsel %vm3059, %v3189, 0.0
        %3253 = vadd.xlane.f32.xlu0 %v3252
        %v3254 = vpop.xlane.xlu0 %3253
        %v3255 = vsel %vm3059, %v3191, 0.0
        %3256 = vadd.xlane.f32.xlu0 %v3255
        %v3257 = vpop.xlane.xlu0 %3256
        %v3258 = vsel %vm3059, %v3193, 0.0
        %3259 = vadd.xlane.f32.xlu0 %v3258
        %v3260 = vpop.xlane.xlu0 %3259
        %v3261 = vsel %vm3059, %v3195, 0.0
        %3262 = vadd.xlane.f32.xlu0 %v3261
        %v3263 = vpop.xlane.xlu0 %3262
        %v3264 = vsel %vm3059, %v3197, 0.0
        %3265 = vadd.xlane.f32.xlu0 %v3264
        %v3266 = vpop.xlane.xlu0 %3265
        %v3267 = vsel %vm3059, %v3199, 0.0
        %3268 = vadd.xlane.f32.xlu0 %v3267
        %v3269 = vpop.xlane.xlu0 %3268
        %v3270 = vsel %vm3059, %v3201, 0.0
        %3271 = vadd.xlane.f32.xlu0 %v3270
        %v3272 = vpop.xlane.xlu0 %3271
        %v3273 = vsel %vm3059, %v3203, 0.0
        %3274 = vadd.xlane.f32.xlu0 %v3273
        %v3275 = vpop.xlane.xlu0 %3274
        %v3276 = vsel %vm3059, %v3205, 0.0
        %3277 = vadd.xlane.f32.xlu0 %v3276
        %v3278 = vpop.xlane.xlu0 %3277
        %v3279 = vsel %vm3059, %v3207, 0.0
        %3280 = vadd.xlane.f32.xlu0 %v3279
        %v3281 = vpop.xlane.xlu0 %3280
        %v3282 = vsel %vm3059, %v3209, 0.0
        %3283 = vadd.xlane.f32.xlu0 %v3282
        %v3284 = vpop.xlane.xlu0 %3283
        %v3285 = vsel %vm3059, %v3211, 0.0
        %3286 = vadd.xlane.f32.xlu0 %v3285
        %v3287 = vpop.xlane.xlu0 %3286
        %v3288 = vsel %vm3059, %v3213, 0.0
        %3289 = vadd.xlane.f32.xlu0 %v3288
        %v3290 = vpop.xlane.xlu0 %3289
        %v3291 = vsel %vm3059, %v3215, 0.0
        %3292 = vadd.xlane.f32.xlu0 %v3291
        %v3293 = vpop.xlane.xlu0 %3292
        %v3294 = vsel %vm3059, %v3217, 0.0
        %3295 = vadd.xlane.f32.xlu0 %v3294
        %v3296 = vpop.xlane.xlu0 %3295
        %v3297 = vsel %vm3059, %v3219, 0.0
        %3298 = vadd.xlane.f32.xlu0 %v3297
        %v3299 = vpop.xlane.xlu0 %3298
        %v3300 = vsel %vm3059, %v3221, 0.0
        %3301 = vadd.xlane.f32.xlu0 %v3300
        %v3302 = vpop.xlane.xlu0 %3301
        %v3303 = vsel %vm3059, %v3223, 0.0
        %3304 = vadd.xlane.f32.xlu0 %v3303
        %v3305 = vpop.xlane.xlu0 %3304
        %v3306 = vsel %vm3059, %v3225, 0.0
        %3307 = vadd.xlane.f32.xlu0 %v3306
        %v3308 = vpop.xlane.xlu0 %3307
        %v3309 = vsel %vm3059, %v3227, 0.0
        %3310 = vadd.xlane.f32.xlu0 %v3309
        %v3311 = vpop.xlane.xlu0 %3310
        %v3312 = vsel %vm3059, %v3229, 0.0
        %3313 = vadd.xlane.f32.xlu0 %v3312
        %v3314 = vpop.xlane.xlu0 %3313
        %v3315 = vsel %vm3059, %v3231, 0.0
        %3316 = vadd.xlane.f32.xlu0 %v3315
        %v3317 = vpop.xlane.xlu0 %3316
        %v3318 = vsel %vm3059, %v3233, 0.0
        %3319 = vadd.xlane.f32.xlu0 %v3318
        %v3320 = vpop.xlane.xlu0 %3319
        %v3321 = vsel %vm3059, %v3235, 0.0
        %3322 = vadd.xlane.f32.xlu0 %v3321
        %v3323 = vpop.xlane.xlu0 %3322
        %v3324 = vsel %vm3059, %v3237, 0.0
        %3325 = vadd.xlane.f32.xlu0 %v3324
        %v3326 = vpop.xlane.xlu0 %3325
        %v3327 = vsel %vm3059, %v3239, 0.0
        %3328 = vadd.xlane.f32.xlu0 %v3327
        %v3329 = vpop.xlane.xlu0 %3328
        %v3330 = vsel %vm3059, %v3241, 0.0
        %3331 = vadd.xlane.f32.xlu0 %v3330
        %v3332 = vpop.xlane.xlu0 %3331
        %v3333 = vsel %vm3059, %v3243, 0.0
        %3334 = vadd.xlane.f32.xlu0 %v3333
        %v3335 = vpop.xlane.xlu0 %3334
        %v3336 = vsel %vm3059, %v3245, 0.0
        %3337 = vadd.xlane.f32.xlu0 %v3336
        %v3338 = vpop.xlane.xlu0 %3337
        %v3339 = vsel %vm3059, %v3247, 0.0
        %3340 = vadd.xlane.f32.xlu0 %v3339
        %v3341 = vpop.xlane.xlu0 %3340
        %v3342 = vsel %vm3059, %v3249, 0.0
        %3343 = vadd.xlane.f32.xlu0 %v3342
        %v3344 = vpop.xlane.xlu0 %3343
        %v3345 = vsel %vm3059, %v3251, 0.0
        %3346 = vadd.xlane.f32.xlu0 %v3345
        %v3347 = vpop.xlane.xlu0 %3346
        %v3348 = vrcp.pop %v3254
        %v3349 = vrcp.pop %v3257
        %v3350 = vrcp.pop %v3260
        %v3351 = vrcp.pop %v3263
        %v3352 = vrcp.pop %v3266
        %v3353 = vrcp.pop %v3269
        %v3354 = vrcp.pop %v3272
        %v3355 = vrcp.pop %v3275
        %v3356 = vrcp.pop %v3278
        %v3357 = vrcp.pop %v3281
        %v3358 = vrcp.pop %v3284
        %v3359 = vrcp.pop %v3287
        %v3360 = vrcp.pop %v3290
        %v3361 = vrcp.pop %v3293
        %v3362 = vrcp.pop %v3296
        %v3363 = vrcp.pop %v3299
        %v3364 = vrcp.pop %v3302
        %v3365 = vrcp.pop %v3305
        %v3366 = vrcp.pop %v3308
        %v3367 = vrcp.pop %v3311
        %v3368 = vrcp.pop %v3314
        %v3369 = vrcp.pop %v3317
        %v3370 = vrcp.pop %v3320
        %v3371 = vrcp.pop %v3323
        %v3372 = vrcp.pop %v3326
        %v3373 = vrcp.pop %v3329
        %v3374 = vrcp.pop %v3332
        %v3375 = vrcp.pop %v3335
        %v3376 = vrcp.pop %v3338
        %v3377 = vrcp.pop %v3341
        %v3378 = vrcp.pop %v3344
        %v3379 = vrcp.pop %v3347
        %v3380 = vmul.f32 %v3189, %v3348
        %v3381 = vmul.f32 %v3191, %v3349
        %v3382 = vmul.f32 %v3193, %v3350
        %v3383 = vmul.f32 %v3195, %v3351
        %v3384 = vmul.f32 %v3197, %v3352
        %v3385 = vmul.f32 %v3199, %v3353
        %v3386 = vmul.f32 %v3201, %v3354
        %v3387 = vmul.f32 %v3203, %v3355
        %v3388 = vmul.f32 %v3205, %v3356
        %v3389 = vmul.f32 %v3207, %v3357
        %v3390 = vmul.f32 %v3209, %v3358
        %v3391 = vmul.f32 %v3211, %v3359
        %v3392 = vmul.f32 %v3213, %v3360
        %v3393 = vmul.f32 %v3215, %v3361
        %v3394 = vmul.f32 %v3217, %v3362
        %v3395 = vmul.f32 %v3219, %v3363
        %v3396 = vmul.f32 %v3221, %v3364
        %v3397 = vmul.f32 %v3223, %v3365
        %v3398 = vmul.f32 %v3225, %v3366
        %v3399 = vmul.f32 %v3227, %v3367
        %v3400 = vmul.f32 %v3229, %v3368
        %v3401 = vmul.f32 %v3231, %v3369
        %v3402 = vmul.f32 %v3233, %v3370
        %v3403 = vmul.f32 %v3235, %v3371
        %v3404 = vmul.f32 %v3237, %v3372
        %v3405 = vmul.f32 %v3239, %v3373
        %v3406 = vmul.f32 %v3241, %v3374
        %v3407 = vmul.f32 %v3243, %v3375
        %v3408 = vmul.f32 %v3245, %v3376
        %v3409 = vmul.f32 %v3247, %v3377
        %v3410 = vmul.f32 %v3249, %v3378
        %v3411 = vmul.f32 %v3251, %v3379
        %v3412 = vpack.c.bf16 %v3381, %v3380
        %v3413 = vpack.c.bf16 %v3383, %v3382
        %v3414 = vpack.c.bf16 %v3385, %v3384
        %v3415 = vpack.c.bf16 %v3387, %v3386
        %v3416 = vpack.c.bf16 %v3389, %v3388
        %v3417 = vpack.c.bf16 %v3391, %v3390
        %v3418 = vpack.c.bf16 %v3393, %v3392
        %v3419 = vpack.c.bf16 %v3395, %v3394
        %v3420 = vpack.c.bf16 %v3397, %v3396
        %v3421 = vpack.c.bf16 %v3399, %v3398
        %v3422 = vpack.c.bf16 %v3401, %v3400
        %v3423 = vpack.c.bf16 %v3403, %v3402
        %v3424 = vpack.c.bf16 %v3405, %v3404
        %v3425 = vpack.c.bf16 %v3407, %v3406
        %v3426 = vpack.c.bf16 %v3409, %v3408
        %v3427 = vpack.c.bf16 %v3411, %v3410
        %v3428 = vpack.c.bf16 %v665, %v662
        %v3429 = vpack.c.bf16 %v673, %v670
        %v3430 = vpack.c.bf16 %v681, %v678
        %v3431 = vpack.c.bf16 %v689, %v686
        %v3432 = vpack.c.bf16 %v863, %v861
        %v3433 = vpack.c.bf16 %v867, %v865
        %v3434 = vpack.c.bf16 %v871, %v869
        %v3435 = vpack.c.bf16 %v875, %v873
        %v3436 = vpack.c.bf16 %v887, %v885
        %v3437 = vpack.c.bf16 %v891, %v889
        %v3438 = vpack.c.bf16 %v895, %v893
        %v3439 = vpack.c.bf16 %v899, %v897
        %v3440 = vpack.c.bf16 %v911, %v909
        %v3441 = vpack.c.bf16 %v915, %v913
        %v3442 = vpack.c.bf16 %v919, %v917
        %v3443 = vpack.c.bf16 %v923, %v921
        %v3445 = vsel %vm3059, %v3412, 0
        %3447 = vmatprep.subr.bf16.mxu0 0
        %3448 = vmatpush1.bf16.msra.mxu0 0
        %3449 = vmatprep.subr.bf16.mxu0 0
        %3450 = vmatpush1.bf16.msra.mxu0 0
        %3451 = vmatprep.subr.bf16.mxu0 0
        %3452 = vmatpush1.bf16.msra.mxu0 0
        %3453 = vmatprep.subr.bf16.mxu0 0
        %3454 = vmatpush1.bf16.msra.mxu0 0
        %3455 = vmatprep.subr.bf16.mxu0 0
        %3456 = vmatpush1.bf16.msra.mxu0 0
        %3457 = vmatprep.subr.bf16.mxu0 0
        %3458 = vmatpush1.bf16.msra.mxu0 0
        %3459 = vmatprep.subr.bf16.mxu0 0
        %3460 = vmatpush1.bf16.msra.mxu0 0
        %3461 = vmatprep.subr.bf16.mxu0 0
        %3462 = vmatpush1.bf16.msra.mxu0 %v3428
        %3463 = vmatprep.subr.bf16.mxu0 0
        %3464 = vmatpush2.bf16.msra.mxu0 0
        %3465 = vmatprep.subr.bf16.mxu0 0
        %3466 = vmatpush2.bf16.msra.mxu0 0
        %3467 = vmatprep.subr.bf16.mxu0 0
        %3468 = vmatpush2.bf16.msra.mxu0 0
        %3469 = vmatprep.subr.bf16.mxu0 0
        %3470 = vmatpush2.bf16.msra.mxu0 0
        %3471 = vmatprep.subr.bf16.mxu0 0
        %3472 = vmatpush2.bf16.msra.mxu0 0
        %3473 = vmatprep.subr.bf16.mxu0 0
        %3474 = vmatpush2.bf16.msra.mxu0 0
        %3475 = vmatprep.subr.bf16.mxu0 0
        %3476 = vmatpush2.bf16.msra.mxu0 0
        %3477 = vmatprep.subr.bf16.mxu0 0
        %3478 = vmatpush2.bf16.msra.mxu0 0
        %3479 = vmatprep.mubr.bf16.mxu0 0
        %3480 = vmatmul.mubr.bf16.gmra.mxu0 %v3445
        %v3481 = vpop.f32.mrf.mxu0
        %v3482 = vadd.f32 0.0, %v3481
        %v3483 = vpop.f32.mrf.mxu0
        %v3484 = vpop.f32.mrf.mxu0
        %v3485 = vadd.f32 0.0, %v3484
        %v3486 = vpop.f32.mrf.mxu0
        %3487 = vdwg.mxu0
        %v3489 = vsel %vm3059, %v3413, 0
        %3491 = vmatprep.subr.bf16.mxu0 0
        %3492 = vmatpush1.bf16.msra.mxu0 0
        %3493 = vmatprep.subr.bf16.mxu0 0
        %3494 = vmatpush1.bf16.msra.mxu0 0
        %3495 = vmatprep.subr.bf16.mxu0 0
        %3496 = vmatpush1.bf16.msra.mxu0 0
        %3497 = vmatprep.subr.bf16.mxu0 0
        %3498 = vmatpush1.bf16.msra.mxu0 0
        %3499 = vmatprep.subr.bf16.mxu0 0
        %3500 = vmatpush1.bf16.msra.mxu0 0
        %3501 = vmatprep.subr.bf16.mxu0 0
        %3502 = vmatpush1.bf16.msra.mxu0 0
        %3503 = vmatprep.subr.bf16.mxu0 0
        %3504 = vmatpush1.bf16.msra.mxu0 0
        %3505 = vmatprep.subr.bf16.mxu0 0
        %3506 = vmatpush1.bf16.msra.mxu0 %v3429
        %3507 = vmatprep.subr.bf16.mxu0 0
        %3508 = vmatpush2.bf16.msra.mxu0 0
        %3509 = vmatprep.subr.bf16.mxu0 0
        %3510 = vmatpush2.bf16.msra.mxu0 0
        %3511 = vmatprep.subr.bf16.mxu0 0
        %3512 = vmatpush2.bf16.msra.mxu0 0
        %3513 = vmatprep.subr.bf16.mxu0 0
        %3514 = vmatpush2.bf16.msra.mxu0 0
        %3515 = vmatprep.subr.bf16.mxu0 0
        %3516 = vmatpush2.bf16.msra.mxu0 0
        %3517 = vmatprep.subr.bf16.mxu0 0
        %3518 = vmatpush2.bf16.msra.mxu0 0
        %3519 = vmatprep.subr.bf16.mxu0 0
        %3520 = vmatpush2.bf16.msra.mxu0 0
        %3521 = vmatprep.subr.bf16.mxu0 0
        %3522 = vmatpush2.bf16.msra.mxu0 0
        %3523 = vmatprep.mubr.bf16.mxu0 0
        %3524 = vmatmul.mubr.bf16.gmra.mxu0 %v3489
        %v3525 = vpop.f32.mrf.mxu0
        %v3526 = vadd.f32 0.0, %v3525
        %v3527 = vpop.f32.mrf.mxu0
        %v3528 = vpop.f32.mrf.mxu0
        %v3529 = vadd.f32 0.0, %v3528
        %v3530 = vpop.f32.mrf.mxu0
        %3531 = vdwg.mxu0
        %v3533 = vsel %vm3059, %v3414, 0
        %3535 = vmatprep.subr.bf16.mxu0 0
        %3536 = vmatpush1.bf16.msra.mxu0 0
        %3537 = vmatprep.subr.bf16.mxu0 0
        %3538 = vmatpush1.bf16.msra.mxu0 0
        %3539 = vmatprep.subr.bf16.mxu0 0
        %3540 = vmatpush1.bf16.msra.mxu0 0
        %3541 = vmatprep.subr.bf16.mxu0 0
        %3542 = vmatpush1.bf16.msra.mxu0 0
        %3543 = vmatprep.subr.bf16.mxu0 0
        %3544 = vmatpush1.bf16.msra.mxu0 0
        %3545 = vmatprep.subr.bf16.mxu0 0
        %3546 = vmatpush1.bf16.msra.mxu0 0
        %3547 = vmatprep.subr.bf16.mxu0 0
        %3548 = vmatpush1.bf16.msra.mxu0 0
        %3549 = vmatprep.subr.bf16.mxu0 0
        %3550 = vmatpush1.bf16.msra.mxu0 %v3430
        %3551 = vmatprep.subr.bf16.mxu0 0
        %3552 = vmatpush2.bf16.msra.mxu0 0
        %3553 = vmatprep.subr.bf16.mxu0 0
        %3554 = vmatpush2.bf16.msra.mxu0 0
        %3555 = vmatprep.subr.bf16.mxu0 0
        %3556 = vmatpush2.bf16.msra.mxu0 0
        %3557 = vmatprep.subr.bf16.mxu0 0
        %3558 = vmatpush2.bf16.msra.mxu0 0
        %3559 = vmatprep.subr.bf16.mxu0 0
        %3560 = vmatpush2.bf16.msra.mxu0 0
        %3561 = vmatprep.subr.bf16.mxu0 0
        %3562 = vmatpush2.bf16.msra.mxu0 0
        %3563 = vmatprep.subr.bf16.mxu0 0
        %3564 = vmatpush2.bf16.msra.mxu0 0
        %3565 = vmatprep.subr.bf16.mxu0 0
        %3566 = vmatpush2.bf16.msra.mxu0 0
        %3567 = vmatprep.mubr.bf16.mxu0 0
        %3568 = vmatmul.mubr.bf16.gmra.mxu0 %v3533
        %v3569 = vpop.f32.mrf.mxu0
        %v3570 = vadd.f32 0.0, %v3569
        %v3571 = vpop.f32.mrf.mxu0
        %v3572 = vpop.f32.mrf.mxu0
        %v3573 = vadd.f32 0.0, %v3572
        %v3574 = vpop.f32.mrf.mxu0
        %3575 = vdwg.mxu0
        %v3577 = vsel %vm3059, %v3415, 0
        %3579 = vmatprep.subr.bf16.mxu0 0
        %3580 = vmatpush1.bf16.msra.mxu0 0
        %3581 = vmatprep.subr.bf16.mxu0 0
        %3582 = vmatpush1.bf16.msra.mxu0 0
        %3583 = vmatprep.subr.bf16.mxu0 0
        %3584 = vmatpush1.bf16.msra.mxu0 0
        %3585 = vmatprep.subr.bf16.mxu0 0
        %3586 = vmatpush1.bf16.msra.mxu0 0
        %3587 = vmatprep.subr.bf16.mxu0 0
        %3588 = vmatpush1.bf16.msra.mxu0 0
        %3589 = vmatprep.subr.bf16.mxu0 0
        %3590 = vmatpush1.bf16.msra.mxu0 0
        %3591 = vmatprep.subr.bf16.mxu0 0
        %3592 = vmatpush1.bf16.msra.mxu0 0
        %3593 = vmatprep.subr.bf16.mxu0 0
        %3594 = vmatpush1.bf16.msra.mxu0 %v3431
        %3595 = vmatprep.subr.bf16.mxu0 0
        %3596 = vmatpush2.bf16.msra.mxu0 0
        %3597 = vmatprep.subr.bf16.mxu0 0
        %3598 = vmatpush2.bf16.msra.mxu0 0
        %3599 = vmatprep.subr.bf16.mxu0 0
        %3600 = vmatpush2.bf16.msra.mxu0 0
        %3601 = vmatprep.subr.bf16.mxu0 0
        %3602 = vmatpush2.bf16.msra.mxu0 0
        %3603 = vmatprep.subr.bf16.mxu0 0
        %3604 = vmatpush2.bf16.msra.mxu0 0
        %3605 = vmatprep.subr.bf16.mxu0 0
        %3606 = vmatpush2.bf16.msra.mxu0 0
        %3607 = vmatprep.subr.bf16.mxu0 0
        %3608 = vmatpush2.bf16.msra.mxu0 0
        %3609 = vmatprep.subr.bf16.mxu0 0
        %3610 = vmatpush2.bf16.msra.mxu0 0
        %3611 = vmatprep.mubr.bf16.mxu0 0
        %3612 = vmatmul.mubr.bf16.gmra.mxu0 %v3577
        %v3613 = vpop.f32.mrf.mxu0
        %v3614 = vadd.f32 0.0, %v3613
        %v3615 = vpop.f32.mrf.mxu0
        %v3616 = vpop.f32.mrf.mxu0
        %v3617 = vadd.f32 0.0, %v3616
        %v3618 = vpop.f32.mrf.mxu0
        %3619 = vdwg.mxu0
        %v3621 = vsel %vm3059, %v3416, 0
        %3623 = vmatprep.subr.bf16.mxu0 0
        %3624 = vmatpush1.bf16.msra.mxu0 0
        %3625 = vmatprep.subr.bf16.mxu0 0
        %3626 = vmatpush1.bf16.msra.mxu0 0
        %3627 = vmatprep.subr.bf16.mxu0 0
        %3628 = vmatpush1.bf16.msra.mxu0 0
        %3629 = vmatprep.subr.bf16.mxu0 0
        %3630 = vmatpush1.bf16.msra.mxu0 0
        %3631 = vmatprep.subr.bf16.mxu0 0
        %3632 = vmatpush1.bf16.msra.mxu0 0
        %3633 = vmatprep.subr.bf16.mxu0 0
        %3634 = vmatpush1.bf16.msra.mxu0 0
        %3635 = vmatprep.subr.bf16.mxu0 0
        %3636 = vmatpush1.bf16.msra.mxu0 0
        %3637 = vmatprep.subr.bf16.mxu0 0
        %3638 = vmatpush1.bf16.msra.mxu0 %v3432
        %3639 = vmatprep.subr.bf16.mxu0 0
        %3640 = vmatpush2.bf16.msra.mxu0 0
        %3641 = vmatprep.subr.bf16.mxu0 0
        %3642 = vmatpush2.bf16.msra.mxu0 0
        %3643 = vmatprep.subr.bf16.mxu0 0
        %3644 = vmatpush2.bf16.msra.mxu0 0
        %3645 = vmatprep.subr.bf16.mxu0 0
        %3646 = vmatpush2.bf16.msra.mxu0 0
        %3647 = vmatprep.subr.bf16.mxu0 0
        %3648 = vmatpush2.bf16.msra.mxu0 0
        %3649 = vmatprep.subr.bf16.mxu0 0
        %3650 = vmatpush2.bf16.msra.mxu0 0
        %3651 = vmatprep.subr.bf16.mxu0 0
        %3652 = vmatpush2.bf16.msra.mxu0 0
        %3653 = vmatprep.subr.bf16.mxu0 0
        %3654 = vmatpush2.bf16.msra.mxu0 0
        %3655 = vmatprep.mubr.bf16.mxu0 0
        %3656 = vmatmul.mubr.bf16.gmra.mxu0 %v3621
        %v3657 = vpop.f32.mrf.mxu0
        %v3658 = vadd.f32 0.0, %v3657
        %v3659 = vpop.f32.mrf.mxu0
        %v3660 = vpop.f32.mrf.mxu0
        %v3661 = vadd.f32 0.0, %v3660
        %v3662 = vpop.f32.mrf.mxu0
        %3663 = vdwg.mxu0
        %v3665 = vsel %vm3059, %v3417, 0
        %3667 = vmatprep.subr.bf16.mxu0 0
        %3668 = vmatpush1.bf16.msra.mxu0 0
        %3669 = vmatprep.subr.bf16.mxu0 0
        %3670 = vmatpush1.bf16.msra.mxu0 0
        %3671 = vmatprep.subr.bf16.mxu0 0
        %3672 = vmatpush1.bf16.msra.mxu0 0
        %3673 = vmatprep.subr.bf16.mxu0 0
        %3674 = vmatpush1.bf16.msra.mxu0 0
        %3675 = vmatprep.subr.bf16.mxu0 0
        %3676 = vmatpush1.bf16.msra.mxu0 0
        %3677 = vmatprep.subr.bf16.mxu0 0
        %3678 = vmatpush1.bf16.msra.mxu0 0
        %3679 = vmatprep.subr.bf16.mxu0 0
        %3680 = vmatpush1.bf16.msra.mxu0 0
        %3681 = vmatprep.subr.bf16.mxu0 0
        %3682 = vmatpush1.bf16.msra.mxu0 %v3433
        %3683 = vmatprep.subr.bf16.mxu0 0
        %3684 = vmatpush2.bf16.msra.mxu0 0
        %3685 = vmatprep.subr.bf16.mxu0 0
        %3686 = vmatpush2.bf16.msra.mxu0 0
        %3687 = vmatprep.subr.bf16.mxu0 0
        %3688 = vmatpush2.bf16.msra.mxu0 0
        %3689 = vmatprep.subr.bf16.mxu0 0
        %3690 = vmatpush2.bf16.msra.mxu0 0
        %3691 = vmatprep.subr.bf16.mxu0 0
        %3692 = vmatpush2.bf16.msra.mxu0 0
        %3693 = vmatprep.subr.bf16.mxu0 0
        %3694 = vmatpush2.bf16.msra.mxu0 0
        %3695 = vmatprep.subr.bf16.mxu0 0
        %3696 = vmatpush2.bf16.msra.mxu0 0
        %3697 = vmatprep.subr.bf16.mxu0 0
        %3698 = vmatpush2.bf16.msra.mxu0 0
        %3699 = vmatprep.mubr.bf16.mxu0 0
        %3700 = vmatmul.mubr.bf16.gmra.mxu0 %v3665
        %v3701 = vpop.f32.mrf.mxu0
        %v3702 = vadd.f32 0.0, %v3701
        %v3703 = vpop.f32.mrf.mxu0
        %v3704 = vpop.f32.mrf.mxu0
        %v3705 = vadd.f32 0.0, %v3704
        %v3706 = vpop.f32.mrf.mxu0
        %3707 = vdwg.mxu0
        %v3709 = vsel %vm3059, %v3418, 0
        %3711 = vmatprep.subr.bf16.mxu0 0
        %3712 = vmatpush1.bf16.msra.mxu0 0
        %3713 = vmatprep.subr.bf16.mxu0 0
        %3714 = vmatpush1.bf16.msra.mxu0 0
        %3715 = vmatprep.subr.bf16.mxu0 0
        %3716 = vmatpush1.bf16.msra.mxu0 0
        %3717 = vmatprep.subr.bf16.mxu0 0
        %3718 = vmatpush1.bf16.msra.mxu0 0
        %3719 = vmatprep.subr.bf16.mxu0 0
        %3720 = vmatpush1.bf16.msra.mxu0 0
        %3721 = vmatprep.subr.bf16.mxu0 0
        %3722 = vmatpush1.bf16.msra.mxu0 0
        %3723 = vmatprep.subr.bf16.mxu0 0
        %3724 = vmatpush1.bf16.msra.mxu0 0
        %3725 = vmatprep.subr.bf16.mxu0 0
        %3726 = vmatpush1.bf16.msra.mxu0 %v3434
        %3727 = vmatprep.subr.bf16.mxu0 0
        %3728 = vmatpush2.bf16.msra.mxu0 0
        %3729 = vmatprep.subr.bf16.mxu0 0
        %3730 = vmatpush2.bf16.msra.mxu0 0
        %3731 = vmatprep.subr.bf16.mxu0 0
        %3732 = vmatpush2.bf16.msra.mxu0 0
        %3733 = vmatprep.subr.bf16.mxu0 0
        %3734 = vmatpush2.bf16.msra.mxu0 0
        %3735 = vmatprep.subr.bf16.mxu0 0
        %3736 = vmatpush2.bf16.msra.mxu0 0
        %3737 = vmatprep.subr.bf16.mxu0 0
        %3738 = vmatpush2.bf16.msra.mxu0 0
        %3739 = vmatprep.subr.bf16.mxu0 0
        %3740 = vmatpush2.bf16.msra.mxu0 0
        %3741 = vmatprep.subr.bf16.mxu0 0
        %3742 = vmatpush2.bf16.msra.mxu0 0
        %3743 = vmatprep.mubr.bf16.mxu0 0
        %3744 = vmatmul.mubr.bf16.gmra.mxu0 %v3709
        %v3745 = vpop.f32.mrf.mxu0
        %v3746 = vadd.f32 0.0, %v3745
        %v3747 = vpop.f32.mrf.mxu0
        %v3748 = vpop.f32.mrf.mxu0
        %v3749 = vadd.f32 0.0, %v3748
        %v3750 = vpop.f32.mrf.mxu0
        %3751 = vdwg.mxu0
        %v3753 = vsel %vm3059, %v3419, 0
        %3755 = vmatprep.subr.bf16.mxu0 0
        %3756 = vmatpush1.bf16.msra.mxu0 0
        %3757 = vmatprep.subr.bf16.mxu0 0
        %3758 = vmatpush1.bf16.msra.mxu0 0
        %3759 = vmatprep.subr.bf16.mxu0 0
        %3760 = vmatpush1.bf16.msra.mxu0 0
        %3761 = vmatprep.subr.bf16.mxu0 0
        %3762 = vmatpush1.bf16.msra.mxu0 0
        %3763 = vmatprep.subr.bf16.mxu0 0
        %3764 = vmatpush1.bf16.msra.mxu0 0
        %3765 = vmatprep.subr.bf16.mxu0 0
        %3766 = vmatpush1.bf16.msra.mxu0 0
        %3767 = vmatprep.subr.bf16.mxu0 0
        %3768 = vmatpush1.bf16.msra.mxu0 0
        %3769 = vmatprep.subr.bf16.mxu0 0
        %3770 = vmatpush1.bf16.msra.mxu0 %v3435
        %3771 = vmatprep.subr.bf16.mxu0 0
        %3772 = vmatpush2.bf16.msra.mxu0 0
        %3773 = vmatprep.subr.bf16.mxu0 0
        %3774 = vmatpush2.bf16.msra.mxu0 0
        %3775 = vmatprep.subr.bf16.mxu0 0
        %3776 = vmatpush2.bf16.msra.mxu0 0
        %3777 = vmatprep.subr.bf16.mxu0 0
        %3778 = vmatpush2.bf16.msra.mxu0 0
        %3779 = vmatprep.subr.bf16.mxu0 0
        %3780 = vmatpush2.bf16.msra.mxu0 0
        %3781 = vmatprep.subr.bf16.mxu0 0
        %3782 = vmatpush2.bf16.msra.mxu0 0
        %3783 = vmatprep.subr.bf16.mxu0 0
        %3784 = vmatpush2.bf16.msra.mxu0 0
        %3785 = vmatprep.subr.bf16.mxu0 0
        %3786 = vmatpush2.bf16.msra.mxu0 0
        %3787 = vmatprep.mubr.bf16.mxu0 0
        %3788 = vmatmul.mubr.bf16.gmra.mxu0 %v3753
        %v3789 = vpop.f32.mrf.mxu0
        %v3790 = vadd.f32 0.0, %v3789
        %v3791 = vpop.f32.mrf.mxu0
        %v3792 = vpop.f32.mrf.mxu0
        %v3793 = vadd.f32 0.0, %v3792
        %v3794 = vpop.f32.mrf.mxu0
        %3795 = vdwg.mxu0
        %v3797 = vsel %vm3059, %v3420, 0
        %3799 = vmatprep.subr.bf16.mxu0 0
        %3800 = vmatpush1.bf16.msra.mxu0 0
        %3801 = vmatprep.subr.bf16.mxu0 0
        %3802 = vmatpush1.bf16.msra.mxu0 0
        %3803 = vmatprep.subr.bf16.mxu0 0
        %3804 = vmatpush1.bf16.msra.mxu0 0
        %3805 = vmatprep.subr.bf16.mxu0 0
        %3806 = vmatpush1.bf16.msra.mxu0 0
        %3807 = vmatprep.subr.bf16.mxu0 0
        %3808 = vmatpush1.bf16.msra.mxu0 0
        %3809 = vmatprep.subr.bf16.mxu0 0
        %3810 = vmatpush1.bf16.msra.mxu0 0
        %3811 = vmatprep.subr.bf16.mxu0 0
        %3812 = vmatpush1.bf16.msra.mxu0 0
        %3813 = vmatprep.subr.bf16.mxu0 0
        %3814 = vmatpush1.bf16.msra.mxu0 %v3436
        %3815 = vmatprep.subr.bf16.mxu0 0
        %3816 = vmatpush2.bf16.msra.mxu0 0
        %3817 = vmatprep.subr.bf16.mxu0 0
        %3818 = vmatpush2.bf16.msra.mxu0 0
        %3819 = vmatprep.subr.bf16.mxu0 0
        %3820 = vmatpush2.bf16.msra.mxu0 0
        %3821 = vmatprep.subr.bf16.mxu0 0
        %3822 = vmatpush2.bf16.msra.mxu0 0
        %3823 = vmatprep.subr.bf16.mxu0 0
        %3824 = vmatpush2.bf16.msra.mxu0 0
        %3825 = vmatprep.subr.bf16.mxu0 0
        %3826 = vmatpush2.bf16.msra.mxu0 0
        %3827 = vmatprep.subr.bf16.mxu0 0
        %3828 = vmatpush2.bf16.msra.mxu0 0
        %3829 = vmatprep.subr.bf16.mxu0 0
        %3830 = vmatpush2.bf16.msra.mxu0 0
        %3831 = vmatprep.mubr.bf16.mxu0 0
        %3832 = vmatmul.mubr.bf16.gmra.mxu0 %v3797
        %v3833 = vpop.f32.mrf.mxu0
        %v3834 = vadd.f32 0.0, %v3833
        %v3835 = vpop.f32.mrf.mxu0
        %v3836 = vpop.f32.mrf.mxu0
        %v3837 = vadd.f32 0.0, %v3836
        %v3838 = vpop.f32.mrf.mxu0
        %3839 = vdwg.mxu0
        %v3841 = vsel %vm3059, %v3421, 0
        %3843 = vmatprep.subr.bf16.mxu0 0
        %3844 = vmatpush1.bf16.msra.mxu0 0
        %3845 = vmatprep.subr.bf16.mxu0 0
        %3846 = vmatpush1.bf16.msra.mxu0 0
        %3847 = vmatprep.subr.bf16.mxu0 0
        %3848 = vmatpush1.bf16.msra.mxu0 0
        %3849 = vmatprep.subr.bf16.mxu0 0
        %3850 = vmatpush1.bf16.msra.mxu0 0
        %3851 = vmatprep.subr.bf16.mxu0 0
        %3852 = vmatpush1.bf16.msra.mxu0 0
        %3853 = vmatprep.subr.bf16.mxu0 0
        %3854 = vmatpush1.bf16.msra.mxu0 0
        %3855 = vmatprep.subr.bf16.mxu0 0
        %3856 = vmatpush1.bf16.msra.mxu0 0
        %3857 = vmatprep.subr.bf16.mxu0 0
        %3858 = vmatpush1.bf16.msra.mxu0 %v3437
        %3859 = vmatprep.subr.bf16.mxu0 0
        %3860 = vmatpush2.bf16.msra.mxu0 0
        %3861 = vmatprep.subr.bf16.mxu0 0
        %3862 = vmatpush2.bf16.msra.mxu0 0
        %3863 = vmatprep.subr.bf16.mxu0 0
        %3864 = vmatpush2.bf16.msra.mxu0 0
        %3865 = vmatprep.subr.bf16.mxu0 0
        %3866 = vmatpush2.bf16.msra.mxu0 0
        %3867 = vmatprep.subr.bf16.mxu0 0
        %3868 = vmatpush2.bf16.msra.mxu0 0
        %3869 = vmatprep.subr.bf16.mxu0 0
        %3870 = vmatpush2.bf16.msra.mxu0 0
        %3871 = vmatprep.subr.bf16.mxu0 0
        %3872 = vmatpush2.bf16.msra.mxu0 0
        %3873 = vmatprep.subr.bf16.mxu0 0
        %3874 = vmatpush2.bf16.msra.mxu0 0
        %3875 = vmatprep.mubr.bf16.mxu0 0
        %3876 = vmatmul.mubr.bf16.gmra.mxu0 %v3841
        %v3877 = vpop.f32.mrf.mxu0
        %v3878 = vadd.f32 0.0, %v3877
        %v3879 = vpop.f32.mrf.mxu0
        %v3880 = vpop.f32.mrf.mxu0
        %v3881 = vadd.f32 0.0, %v3880
        %v3882 = vpop.f32.mrf.mxu0
        %3883 = vdwg.mxu0
        %v3885 = vsel %vm3059, %v3422, 0
        %3887 = vmatprep.subr.bf16.mxu0 0
        %3888 = vmatpush1.bf16.msra.mxu0 0
        %3889 = vmatprep.subr.bf16.mxu0 0
        %3890 = vmatpush1.bf16.msra.mxu0 0
        %3891 = vmatprep.subr.bf16.mxu0 0
        %3892 = vmatpush1.bf16.msra.mxu0 0
        %3893 = vmatprep.subr.bf16.mxu0 0
        %3894 = vmatpush1.bf16.msra.mxu0 0
        %3895 = vmatprep.subr.bf16.mxu0 0
        %3896 = vmatpush1.bf16.msra.mxu0 0
        %3897 = vmatprep.subr.bf16.mxu0 0
        %3898 = vmatpush1.bf16.msra.mxu0 0
        %3899 = vmatprep.subr.bf16.mxu0 0
        %3900 = vmatpush1.bf16.msra.mxu0 0
        %3901 = vmatprep.subr.bf16.mxu0 0
        %3902 = vmatpush1.bf16.msra.mxu0 %v3438
        %3903 = vmatprep.subr.bf16.mxu0 0
        %3904 = vmatpush2.bf16.msra.mxu0 0
        %3905 = vmatprep.subr.bf16.mxu0 0
        %3906 = vmatpush2.bf16.msra.mxu0 0
        %3907 = vmatprep.subr.bf16.mxu0 0
        %3908 = vmatpush2.bf16.msra.mxu0 0
        %3909 = vmatprep.subr.bf16.mxu0 0
        %3910 = vmatpush2.bf16.msra.mxu0 0
        %3911 = vmatprep.subr.bf16.mxu0 0
        %3912 = vmatpush2.bf16.msra.mxu0 0
        %3913 = vmatprep.subr.bf16.mxu0 0
        %3914 = vmatpush2.bf16.msra.mxu0 0
        %3915 = vmatprep.subr.bf16.mxu0 0
        %3916 = vmatpush2.bf16.msra.mxu0 0
        %3917 = vmatprep.subr.bf16.mxu0 0
        %3918 = vmatpush2.bf16.msra.mxu0 0
        %3919 = vmatprep.mubr.bf16.mxu0 0
        %3920 = vmatmul.mubr.bf16.gmra.mxu0 %v3885
        %v3921 = vpop.f32.mrf.mxu0
        %v3922 = vadd.f32 0.0, %v3921
        %v3923 = vpop.f32.mrf.mxu0
        %v3924 = vpop.f32.mrf.mxu0
        %v3925 = vadd.f32 0.0, %v3924
        %v3926 = vpop.f32.mrf.mxu0
        %3927 = vdwg.mxu0
        %v3929 = vsel %vm3059, %v3423, 0
        %3931 = vmatprep.subr.bf16.mxu0 0
        %3932 = vmatpush1.bf16.msra.mxu0 0
        %3933 = vmatprep.subr.bf16.mxu0 0
        %3934 = vmatpush1.bf16.msra.mxu0 0
        %3935 = vmatprep.subr.bf16.mxu0 0
        %3936 = vmatpush1.bf16.msra.mxu0 0
        %3937 = vmatprep.subr.bf16.mxu0 0
        %3938 = vmatpush1.bf16.msra.mxu0 0
        %3939 = vmatprep.subr.bf16.mxu0 0
        %3940 = vmatpush1.bf16.msra.mxu0 0
        %3941 = vmatprep.subr.bf16.mxu0 0
        %3942 = vmatpush1.bf16.msra.mxu0 0
        %3943 = vmatprep.subr.bf16.mxu0 0
        %3944 = vmatpush1.bf16.msra.mxu0 0
        %3945 = vmatprep.subr.bf16.mxu0 0
        %3946 = vmatpush1.bf16.msra.mxu0 %v3439
        %3947 = vmatprep.subr.bf16.mxu0 0
        %3948 = vmatpush2.bf16.msra.mxu0 0
        %3949 = vmatprep.subr.bf16.mxu0 0
        %3950 = vmatpush2.bf16.msra.mxu0 0
        %3951 = vmatprep.subr.bf16.mxu0 0
        %3952 = vmatpush2.bf16.msra.mxu0 0
        %3953 = vmatprep.subr.bf16.mxu0 0
        %3954 = vmatpush2.bf16.msra.mxu0 0
        %3955 = vmatprep.subr.bf16.mxu0 0
        %3956 = vmatpush2.bf16.msra.mxu0 0
        %3957 = vmatprep.subr.bf16.mxu0 0
        %3958 = vmatpush2.bf16.msra.mxu0 0
        %3959 = vmatprep.subr.bf16.mxu0 0
        %3960 = vmatpush2.bf16.msra.mxu0 0
        %3961 = vmatprep.subr.bf16.mxu0 0
        %3962 = vmatpush2.bf16.msra.mxu0 0
        %3963 = vmatprep.mubr.bf16.mxu0 0
        %3964 = vmatmul.mubr.bf16.gmra.mxu0 %v3929
        %v3965 = vpop.f32.mrf.mxu0
        %v3966 = vadd.f32 0.0, %v3965
        %v3967 = vpop.f32.mrf.mxu0
        %v3968 = vpop.f32.mrf.mxu0
        %v3969 = vadd.f32 0.0, %v3968
        %v3970 = vpop.f32.mrf.mxu0
        %3971 = vdwg.mxu0
        %v3973 = vsel %vm3059, %v3424, 0
        %3975 = vmatprep.subr.bf16.mxu0 0
        %3976 = vmatpush1.bf16.msra.mxu0 0
        %3977 = vmatprep.subr.bf16.mxu0 0
        %3978 = vmatpush1.bf16.msra.mxu0 0
        %3979 = vmatprep.subr.bf16.mxu0 0
        %3980 = vmatpush1.bf16.msra.mxu0 0
        %3981 = vmatprep.subr.bf16.mxu0 0
        %3982 = vmatpush1.bf16.msra.mxu0 0
        %3983 = vmatprep.subr.bf16.mxu0 0
        %3984 = vmatpush1.bf16.msra.mxu0 0
        %3985 = vmatprep.subr.bf16.mxu0 0
        %3986 = vmatpush1.bf16.msra.mxu0 0
        %3987 = vmatprep.subr.bf16.mxu0 0
        %3988 = vmatpush1.bf16.msra.mxu0 0
        %3989 = vmatprep.subr.bf16.mxu0 0
        %3990 = vmatpush1.bf16.msra.mxu0 %v3440
        %3991 = vmatprep.subr.bf16.mxu0 0
        %3992 = vmatpush2.bf16.msra.mxu0 0
        %3993 = vmatprep.subr.bf16.mxu0 0
        %3994 = vmatpush2.bf16.msra.mxu0 0
        %3995 = vmatprep.subr.bf16.mxu0 0
        %3996 = vmatpush2.bf16.msra.mxu0 0
        %3997 = vmatprep.subr.bf16.mxu0 0
        %3998 = vmatpush2.bf16.msra.mxu0 0
        %3999 = vmatprep.subr.bf16.mxu0 0
        %4000 = vmatpush2.bf16.msra.mxu0 0
        %4001 = vmatprep.subr.bf16.mxu0 0
        %4002 = vmatpush2.bf16.msra.mxu0 0
        %4003 = vmatprep.subr.bf16.mxu0 0
        %4004 = vmatpush2.bf16.msra.mxu0 0
        %4005 = vmatprep.subr.bf16.mxu0 0
        %4006 = vmatpush2.bf16.msra.mxu0 0
        %4007 = vmatprep.mubr.bf16.mxu0 0
        %4008 = vmatmul.mubr.bf16.gmra.mxu0 %v3973
        %v4009 = vpop.f32.mrf.mxu0
        %v4010 = vadd.f32 0.0, %v4009
        %v4011 = vpop.f32.mrf.mxu0
        %v4012 = vpop.f32.mrf.mxu0
        %v4013 = vadd.f32 0.0, %v4012
        %v4014 = vpop.f32.mrf.mxu0
        %4015 = vdwg.mxu0
        %v4017 = vsel %vm3059, %v3425, 0
        %4019 = vmatprep.subr.bf16.mxu0 0
        %4020 = vmatpush1.bf16.msra.mxu0 0
        %4021 = vmatprep.subr.bf16.mxu0 0
        %4022 = vmatpush1.bf16.msra.mxu0 0
        %4023 = vmatprep.subr.bf16.mxu0 0
        %4024 = vmatpush1.bf16.msra.mxu0 0
        %4025 = vmatprep.subr.bf16.mxu0 0
        %4026 = vmatpush1.bf16.msra.mxu0 0
        %4027 = vmatprep.subr.bf16.mxu0 0
        %4028 = vmatpush1.bf16.msra.mxu0 0
        %4029 = vmatprep.subr.bf16.mxu0 0
        %4030 = vmatpush1.bf16.msra.mxu0 0
        %4031 = vmatprep.subr.bf16.mxu0 0
        %4032 = vmatpush1.bf16.msra.mxu0 0
        %4033 = vmatprep.subr.bf16.mxu0 0
        %4034 = vmatpush1.bf16.msra.mxu0 %v3441
        %4035 = vmatprep.subr.bf16.mxu0 0
        %4036 = vmatpush2.bf16.msra.mxu0 0
        %4037 = vmatprep.subr.bf16.mxu0 0
        %4038 = vmatpush2.bf16.msra.mxu0 0
        %4039 = vmatprep.subr.bf16.mxu0 0
        %4040 = vmatpush2.bf16.msra.mxu0 0
        %4041 = vmatprep.subr.bf16.mxu0 0
        %4042 = vmatpush2.bf16.msra.mxu0 0
        %4043 = vmatprep.subr.bf16.mxu0 0
        %4044 = vmatpush2.bf16.msra.mxu0 0
        %4045 = vmatprep.subr.bf16.mxu0 0
        %4046 = vmatpush2.bf16.msra.mxu0 0
        %4047 = vmatprep.subr.bf16.mxu0 0
        %4048 = vmatpush2.bf16.msra.mxu0 0
        %4049 = vmatprep.subr.bf16.mxu0 0
        %4050 = vmatpush2.bf16.msra.mxu0 0
        %4051 = vmatprep.mubr.bf16.mxu0 0
        %4052 = vmatmul.mubr.bf16.gmra.mxu0 %v4017
        %v4053 = vpop.f32.mrf.mxu0
        %v4054 = vadd.f32 0.0, %v4053
        %v4055 = vpop.f32.mrf.mxu0
        %v4056 = vpop.f32.mrf.mxu0
        %v4057 = vadd.f32 0.0, %v4056
        %v4058 = vpop.f32.mrf.mxu0
        %4059 = vdwg.mxu0
        %v4061 = vsel %vm3059, %v3426, 0
        %4063 = vmatprep.subr.bf16.mxu0 0
        %4064 = vmatpush1.bf16.msra.mxu0 0
        %4065 = vmatprep.subr.bf16.mxu0 0
        %4066 = vmatpush1.bf16.msra.mxu0 0
        %4067 = vmatprep.subr.bf16.mxu0 0
        %4068 = vmatpush1.bf16.msra.mxu0 0
        %4069 = vmatprep.subr.bf16.mxu0 0
        %4070 = vmatpush1.bf16.msra.mxu0 0
        %4071 = vmatprep.subr.bf16.mxu0 0
        %4072 = vmatpush1.bf16.msra.mxu0 0
        %4073 = vmatprep.subr.bf16.mxu0 0
        %4074 = vmatpush1.bf16.msra.mxu0 0
        %4075 = vmatprep.subr.bf16.mxu0 0
        %4076 = vmatpush1.bf16.msra.mxu0 0
        %4077 = vmatprep.subr.bf16.mxu0 0
        %4078 = vmatpush1.bf16.msra.mxu0 %v3442
        %4079 = vmatprep.subr.bf16.mxu0 0
        %4080 = vmatpush2.bf16.msra.mxu0 0
        %4081 = vmatprep.subr.bf16.mxu0 0
        %4082 = vmatpush2.bf16.msra.mxu0 0
        %4083 = vmatprep.subr.bf16.mxu0 0
        %4084 = vmatpush2.bf16.msra.mxu0 0
        %4085 = vmatprep.subr.bf16.mxu0 0
        %4086 = vmatpush2.bf16.msra.mxu0 0
        %4087 = vmatprep.subr.bf16.mxu0 0
        %4088 = vmatpush2.bf16.msra.mxu0 0
        %4089 = vmatprep.subr.bf16.mxu0 0
        %4090 = vmatpush2.bf16.msra.mxu0 0
        %4091 = vmatprep.subr.bf16.mxu0 0
        %4092 = vmatpush2.bf16.msra.mxu0 0
        %4093 = vmatprep.subr.bf16.mxu0 0
        %4094 = vmatpush2.bf16.msra.mxu0 0
        %4095 = vmatprep.mubr.bf16.mxu0 0
        %4096 = vmatmul.mubr.bf16.gmra.mxu0 %v4061
        %v4097 = vpop.f32.mrf.mxu0
        %v4098 = vadd.f32 0.0, %v4097
        %v4099 = vpop.f32.mrf.mxu0
        %v4100 = vpop.f32.mrf.mxu0
        %v4101 = vadd.f32 0.0, %v4100
        %v4102 = vpop.f32.mrf.mxu0
        %4103 = vdwg.mxu0
        %v4105 = vsel %vm3059, %v3427, 0
        %4107 = vmatprep.subr.bf16.mxu0 0
        %4108 = vmatpush1.bf16.msra.mxu0 0
        %4109 = vmatprep.subr.bf16.mxu0 0
        %4110 = vmatpush1.bf16.msra.mxu0 0
        %4111 = vmatprep.subr.bf16.mxu0 0
        %4112 = vmatpush1.bf16.msra.mxu0 0
        %4113 = vmatprep.subr.bf16.mxu0 0
        %4114 = vmatpush1.bf16.msra.mxu0 0
        %4115 = vmatprep.subr.bf16.mxu0 0
        %4116 = vmatpush1.bf16.msra.mxu0 0
        %4117 = vmatprep.subr.bf16.mxu0 0
        %4118 = vmatpush1.bf16.msra.mxu0 0
        %4119 = vmatprep.subr.bf16.mxu0 0
        %4120 = vmatpush1.bf16.msra.mxu0 0
        %4121 = vmatprep.subr.bf16.mxu0 0
        %4122 = vmatpush1.bf16.msra.mxu0 %v3443
        %4123 = vmatprep.subr.bf16.mxu0 0
        %4124 = vmatpush2.bf16.msra.mxu0 0
        %4125 = vmatprep.subr.bf16.mxu0 0
        %4126 = vmatpush2.bf16.msra.mxu0 0
        %4127 = vmatprep.subr.bf16.mxu0 0
        %4128 = vmatpush2.bf16.msra.mxu0 0
        %4129 = vmatprep.subr.bf16.mxu0 0
        %4130 = vmatpush2.bf16.msra.mxu0 0
        %4131 = vmatprep.subr.bf16.mxu0 0
        %4132 = vmatpush2.bf16.msra.mxu0 0
        %4133 = vmatprep.subr.bf16.mxu0 0
        %4134 = vmatpush2.bf16.msra.mxu0 0
        %4135 = vmatprep.subr.bf16.mxu0 0
        %4136 = vmatpush2.bf16.msra.mxu0 0
        %4137 = vmatprep.subr.bf16.mxu0 0
        %4138 = vmatpush2.bf16.msra.mxu0 0
        %4139 = vmatprep.mubr.bf16.mxu0 0
        %4140 = vmatmul.mubr.bf16.gmra.mxu0 %v4105
        %v4141 = vpop.f32.mrf.mxu0
        %v4142 = vadd.f32 0.0, %v4141
        %v4143 = vpop.f32.mrf.mxu0
        %v4144 = vpop.f32.mrf.mxu0
        %v4145 = vadd.f32 0.0, %v4144
        %v4146 = vpop.f32.mrf.mxu0
        %4147 = vdwg.mxu0
        %4156 = vrot.lane.b32.xlu0 %v3658, 32
        %v4157 = vpop.permute.xlu0 %4156
        %4158 = vrot.lane.b32.xlu0 %v3661, 32
        %v4159 = vpop.permute.xlu0 %4158
        %4160 = vrot.lane.b32.xlu0 %v3702, 32
        %v4161 = vpop.permute.xlu0 %4160
        %4162 = vrot.lane.b32.xlu0 %v3705, 32
        %v4163 = vpop.permute.xlu0 %4162
        %4164 = vrot.lane.b32.xlu0 %v3746, 32
        %v4165 = vpop.permute.xlu0 %4164
        %4166 = vrot.lane.b32.xlu0 %v3749, 32
        %v4167 = vpop.permute.xlu0 %4166
        %4168 = vrot.lane.b32.xlu0 %v3790, 32
        %v4169 = vpop.permute.xlu0 %4168
        %4170 = vrot.lane.b32.xlu0 %v3793, 32
        %v4171 = vpop.permute.xlu0 %4170
        %4188 = vrot.lane.b32.xlu0 %v3834, 64
        %v4189 = vpop.permute.xlu0 %4188
        %4190 = vrot.lane.b32.xlu0 %v3837, 64
        %v4191 = vpop.permute.xlu0 %4190
        %4192 = vrot.lane.b32.xlu0 %v3878, 64
        %v4193 = vpop.permute.xlu0 %4192
        %4194 = vrot.lane.b32.xlu0 %v3881, 64
        %v4195 = vpop.permute.xlu0 %4194
        %4196 = vrot.lane.b32.xlu0 %v3922, 64
        %v4197 = vpop.permute.xlu0 %4196
        %4198 = vrot.lane.b32.xlu0 %v3925, 64
        %v4199 = vpop.permute.xlu0 %4198
        %4200 = vrot.lane.b32.xlu0 %v3966, 64
        %v4201 = vpop.permute.xlu0 %4200
        %4202 = vrot.lane.b32.xlu0 %v3969, 64
        %v4203 = vpop.permute.xlu0 %4202
        %4220 = vrot.lane.b32.xlu0 %v4010, 96
        %v4221 = vpop.permute.xlu0 %4220
        %4222 = vrot.lane.b32.xlu0 %v4013, 96
        %v4223 = vpop.permute.xlu0 %4222
        %4224 = vrot.lane.b32.xlu0 %v4054, 96
        %v4225 = vpop.permute.xlu0 %4224
        %4226 = vrot.lane.b32.xlu0 %v4057, 96
        %v4227 = vpop.permute.xlu0 %4226
        %4228 = vrot.lane.b32.xlu0 %v4098, 96
        %v4229 = vpop.permute.xlu0 %4228
        %4230 = vrot.lane.b32.xlu0 %v4101, 96
        %v4231 = vpop.permute.xlu0 %4230
        %4232 = vrot.lane.b32.xlu0 %v4142, 96
        %v4233 = vpop.permute.xlu0 %4232
        %4234 = vrot.lane.b32.xlu0 %v4145, 96
        %v4235 = vpop.permute.xlu0 %4234
        %v4244 = vsel %vm990, %v3482, %v4157
        %v4245 = vsel %vm990, %v3485, %v4159
        %v4246 = vsel %vm990, %v3526, %v4161
        %v4247 = vsel %vm990, %v3529, %v4163
        %v4248 = vsel %vm990, %v3570, %v4165
        %v4249 = vsel %vm990, %v3573, %v4167
        %v4250 = vsel %vm990, %v3614, %v4169
        %v4251 = vsel %vm990, %v3617, %v4171
        %vm4252 = vcmask 523264
        %v4253 = vsel %vm4252, %v4244, %v4189
        %v4254 = vsel %vm4252, %v4245, %v4191
        %v4255 = vsel %vm4252, %v4246, %v4193
        %v4256 = vsel %vm4252, %v4247, %v4195
        %v4257 = vsel %vm4252, %v4248, %v4197
        %v4258 = vsel %vm4252, %v4249, %v4199
        %v4259 = vsel %vm4252, %v4250, %v4201
        %v4260 = vsel %vm4252, %v4251, %v4203
        %vm4261 = vcmask 785408
        %v4262 = vsel %vm4261, %v4253, %v4221
        %v4263 = vsel %vm4261, %v4254, %v4223
        %v4264 = vsel %vm4261, %v4255, %v4225
        %v4265 = vsel %vm4261, %v4256, %v4227
        %v4266 = vsel %vm4261, %v4257, %v4229
        %v4267 = vsel %vm4261, %v4258, %v4231
        %v4268 = vsel %vm4261, %v4259, %v4233
        %v4269 = vsel %vm4261, %v4260, %v4235
        %v4270 = vpack.c.bf16 %v4263, %v4262
        %v4271 = vpack.c.bf16 %v4265, %v4264
        %v4272 = vpack.c.bf16 %v4267, %v4266
        %v4273 = vpack.c.bf16 %v4269, %v4268
        %v4274 = vld [vmem:[#allocation8] sm:$0xf]
        %v4275 = vld [vmem:[#allocation8 + $0x4] sm:$0xf]
        %v4276 = vld [vmem:[#allocation8 + $0x8] sm:$0xf]
        %v4277 = vld [vmem:[#allocation8 + $0xc] sm:$0xf]
        %v4278 = vld [vmem:[#allocation8 + $0x10] sm:$0xf]
        %v4279 = vld [vmem:[#allocation8 + $0x14] sm:$0xf]
        %v4280 = vld [vmem:[#allocation8 + $0x18] sm:$0xf]
        %v4281 = vld [vmem:[#allocation8 + $0x1c] sm:$0xf]
        %v4282 = vld [vmem:[#allocation8 + $0x20] sm:$0xf]
        %v4283 = vld [vmem:[#allocation8 + $0x24] sm:$0xf]
        %v4284 = vld [vmem:[#allocation8 + $0x28] sm:$0xf]
        %v4285 = vld [vmem:[#allocation8 + $0x2c] sm:$0xf]
        %v4286 = vld [vmem:[#allocation8 + $0x30] sm:$0xf]
        %v4287 = vld [vmem:[#allocation8 + $0x34] sm:$0xf]
        %v4288 = vld [vmem:[#allocation8 + $0x38] sm:$0xf]
        %v4289 = vld [vmem:[#allocation8 + $0x3c] sm:$0xf]
        %v4290 = vld [vmem:[%s6] sm:$0x1]
        %v4292 = vlaneseq
        %v4293 = vshrl.u32 %v4292, 7
        %v4294 = vsub.s32 0, %v4293
        %v4295 = vrot.slane %v4290, %v4294
        %v4313 = vunpack.c.l.b16 %v4274
        %v4314 = vunpack.c.l.b16 %v4275
        %v4315 = vunpack.c.l.b16 %v4276
        %v4316 = vunpack.c.l.b16 %v4277
        %v4317 = vunpack.c.l.b16 %v4278
        %v4318 = vunpack.c.l.b16 %v4279
        %v4319 = vunpack.c.l.b16 %v4280
        %v4320 = vunpack.c.l.b16 %v4281
        %v4321 = vunpack.c.l.b16 %v4282
        %v4322 = vunpack.c.l.b16 %v4283
        %v4323 = vunpack.c.l.b16 %v4284
        %v4324 = vunpack.c.l.b16 %v4285
        %v4325 = vunpack.c.l.b16 %v4286
        %v4326 = vunpack.c.l.b16 %v4287
        %v4327 = vunpack.c.l.b16 %v4288
        %v4328 = vunpack.c.l.b16 %v4289
        %v4329 = vpack.c.b16 %v4314, %v4313
        %v4330 = vpack.c.b16 %v4316, %v4315
        %v4331 = vpack.c.b16 %v4318, %v4317
        %v4332 = vpack.c.b16 %v4320, %v4319
        %v4333 = vpack.c.b16 %v4322, %v4321
        %v4334 = vpack.c.b16 %v4324, %v4323
        %v4335 = vpack.c.b16 %v4326, %v4325
        %v4336 = vpack.c.b16 %v4328, %v4327
        %4345 = vmatprep.subr.bf16.mxu0 0
        %4346 = vmatpush1.bf16.msra.mxu0 %v4336
        %4347 = vmatprep.subr.bf16.mxu0 0
        %4348 = vmatpush1.bf16.msra.mxu0 %v4335
        %4349 = vmatprep.subr.bf16.mxu0 0
        %4350 = vmatpush1.bf16.msra.mxu0 %v4334
        %4351 = vmatprep.subr.bf16.mxu0 0
        %4352 = vmatpush1.bf16.msra.mxu0 %v4333
        %4353 = vmatprep.subr.bf16.mxu0 0
        %4354 = vmatpush1.bf16.msra.mxu0 %v4332
        %4355 = vmatprep.subr.bf16.mxu0 0
        %4356 = vmatpush1.bf16.msra.mxu0 %v4331
        %4357 = vmatprep.subr.bf16.mxu0 0
        %4358 = vmatpush1.bf16.msra.mxu0 %v4330
        %4359 = vmatprep.subr.bf16.mxu0 0
        %4360 = vmatpush1.bf16.msra.mxu0 %v4329
        %4361 = vmatprep.subr.bf16.mxu0 0
        %4362 = vmatpush2.bf16.msra.mxu0 0
        %4363 = vmatprep.subr.bf16.mxu0 0
        %4364 = vmatpush2.bf16.msra.mxu0 0
        %4365 = vmatprep.subr.bf16.mxu0 0
        %4366 = vmatpush2.bf16.msra.mxu0 0
        %4367 = vmatprep.subr.bf16.mxu0 0
        %4368 = vmatpush2.bf16.msra.mxu0 0
        %4369 = vmatprep.subr.bf16.mxu0 0
        %4370 = vmatpush2.bf16.msra.mxu0 0
        %4371 = vmatprep.subr.bf16.mxu0 0
        %4372 = vmatpush2.bf16.msra.mxu0 0
        %4373 = vmatprep.subr.bf16.mxu0 0
        %4374 = vmatpush2.bf16.msra.mxu0 0
        %4375 = vmatprep.subr.bf16.mxu0 0
        %4376 = vmatpush2.bf16.msra.mxu0 0
        %4377 = vmatprep.mubr.bf16.mxu0 0
        %4378 = vmatmul.mubr.bf16.gmra.mxu0 %v4270
        %v4379 = vpop.f32.mrf.mxu0
        %v4380 = vadd.f32 %v4295, %v4379
        %v4381 = vpop.f32.mrf.mxu0
        %v4382 = vpop.f32.mrf.mxu0
        %v4383 = vadd.f32 %v4295, %v4382
        %v4384 = vpop.f32.mrf.mxu0
        %4385 = vmatprep.mubr.bf16.mxu0 0
        %4386 = vmatmul.mubr.bf16.gmra.mxu0 %v4271
        %v4387 = vpop.f32.mrf.mxu0
        %v4388 = vadd.f32 %v4295, %v4387
        %v4389 = vpop.f32.mrf.mxu0
        %v4390 = vpop.f32.mrf.mxu0
        %v4391 = vadd.f32 %v4295, %v4390
        %v4392 = vpop.f32.mrf.mxu0
        %4393 = vmatprep.mubr.bf16.mxu0 0
        %4394 = vmatmul.mubr.bf16.gmra.mxu0 %v4272
        %v4395 = vpop.f32.mrf.mxu0
        %v4396 = vadd.f32 %v4295, %v4395
        %v4397 = vpop.f32.mrf.mxu0
        %v4398 = vpop.f32.mrf.mxu0
        %v4399 = vadd.f32 %v4295, %v4398
        %v4400 = vpop.f32.mrf.mxu0
        %4401 = vmatprep.mubr.bf16.mxu0 0
        %4402 = vmatmul.mubr.bf16.gmra.mxu0 %v4273
        %v4403 = vpop.f32.mrf.mxu0
        %v4404 = vadd.f32 %v4295, %v4403
        %v4405 = vpop.f32.mrf.mxu0
        %v4406 = vpop.f32.mrf.mxu0
        %v4407 = vadd.f32 %v4295, %v4406
        %v4408 = vpop.f32.mrf.mxu0
        %4409 = vdwg.mxu0
        %v4410 = vpack.c.bf16 %v4383, %v4380
        %v4411 = vpack.c.bf16 %v4391, %v4388
        %v4412 = vpack.c.bf16 %v4399, %v4396
        %v4413 = vpack.c.bf16 %v4407, %v4404
        %v4418 = vunpack.c.l.b16 %v4410
        %v4419 = vunpack.c.h.b16 %v4410
        %v4420 = vunpack.c.l.b16 %v4411
        %v4421 = vunpack.c.h.b16 %v4411
        %v4422 = vunpack.c.l.b16 %v4412
        %v4423 = vunpack.c.h.b16 %v4412
        %v4424 = vunpack.c.l.b16 %v4413
        %v4425 = vunpack.c.h.b16 %v4413
        %v4426 = vpack.c.b16 %v4418, %v4418
        %v4427 = vpack.c.b16 %v4419, %v4419
        %v4428 = vpack.c.b16 %v4420, %v4420
        %v4429 = vpack.c.b16 %v4421, %v4421
        %v4430 = vpack.c.b16 %v4422, %v4422
        %v4431 = vpack.c.b16 %v4423, %v4423
        %v4432 = vpack.c.b16 %v4424, %v4424
        %v4433 = vpack.c.b16 %v4425, %v4425
        %4442 = vst [vmem:[%s341] sm:$0xf] %v4426
        %4443 = vst [vmem:[%s341 + $0x4] sm:$0xf] %v4427
        %4444 = vst [vmem:[%s341 + $0x8] sm:$0xf] %v4428
        %4445 = vst [vmem:[%s341 + $0xc] sm:$0xf] %v4429
        %4446 = vst [vmem:[%s341 + $0x10] sm:$0xf] %v4430
        %4447 = vst [vmem:[%s341 + $0x14] sm:$0xf] %v4431
        %4448 = vst [vmem:[%s341 + $0x18] sm:$0xf] %v4432
        %4449 = vst [vmem:[%s341 + $0x1c] sm:$0xf] %v4433
        %s4450 = sand.u32 %s186, 1
        %s4451 = scalar_lea.sflag [#allocation4], %s4450
        %s4452 = sand.u32 %s186, 1
        %s4453 = smul.addr %s4452, 32
        %s4454 = scalar_lea.vmem [#allocation10], %s4453
        // Predicated region
        $region65: #{tpu_custom_call.1} parent=47 // pred_check
          %p4455 = pneg %p196
        $region66: #{tpu_custom_call.1} parent=47 // pred_check_branch
          %4457 = sbr.rel (%p4455) target = $region68
        $region67: #{tpu_custom_call.1} parent=47 // pred_region
          %s4458 = smul.u32 4, %s26
          %s4460 = ssub.s32 512, 512
          %4461 = vsyncadd %s4451, %s4460
          %s4462 = smul.addr %s4458, 2
          %s4463 = smul.addr %s4462, 64
          %s4464 = scalar_lea.hbm %s7, %s4463
          %s4465 = sshll.u32 %s4454, 4
          %s4466 = int_to_ptr.vmem [resolvable:$true] %s4465
          %4471 = dma.vmem_to_hbm [thread:$0]  %s4466, 512, %s4464, %s4451, 64, 64, 4
        $region68: #{tpu_custom_call.1} parent=47 // pred_fallthru
          _
      $region48: #{tpu_custom_call.1} parent=5 // pred_fallthru
        _
      %p4472 = scmp.le.s32.totalorder 2, %s21
      // Predicated region
      $region69: #{tpu_custom_call.1} parent=5 // pred_check
        %p4473 = pneg %p4472
      $region70: #{tpu_custom_call.1} parent=5 // pred_check_branch
        %4475 = sbr.rel (%p4473) target = $region72
      $region71: #{tpu_custom_call.1} parent=5 // pred_region
        %s4476 = ssub.s32 %s21, 2
        // Predicated region
        $region73: #{tpu_custom_call.1} parent=71 // pred_check
          %p4477 = pneg %p202
        $region74: #{tpu_custom_call.1} parent=71 // pred_check_branch
          %4479 = sbr.rel (%p4477) target = $region76
        $region75: #{tpu_custom_call.1} parent=71 // pred_region
          %s4480 = sand.u32 %s187, 1
          %s4481 = scalar_lea.sflag [#allocation4], %s4480
          %s4482 = sand.u32 %s187, 1
          %s4483 = smul.addr %s4482, 32
          %s4484 = scalar_lea.vmem [#allocation10], %s4483
          %4485 = dma.done %s4481, 512
        $region76: #{tpu_custom_call.1} parent=71 // pred_fallthru
          _
      $region72: #{tpu_custom_call.1} parent=5 // pred_fallthru
        _
    $region6: #{tpu_custom_call.1} parent=1 // loop_footer
      %s25 = sadd.s32 1, %s21
    $region7: #{tpu_custom_call.1} parent=1 // loop_footer_branch
      %20 = sbr.rel target = $region3
    $region8: #{tpu_custom_call.1} parent=1 // loop_exit
      _
    %4486 = vsyncpa [#allocation3], 1
    %s4487 = scalar_lea.sflag [#allocation3], 1
    %4488 = vsyncpa %s4487, 1
    %4489 = vsyncpa [#allocation6], 1
    %4490 = vsyncpa [#allocation9], 1
    %4491 = vsyncpa [#allocation4], 1
    %s4492 = scalar_lea.sflag [#allocation4], 1
    %4493 = vsyncpa %s4492, 1

</llo_original>
